<compile_context>
chip_gen: v5e
topology: v5e:2x2
jax: 0.10.0
libtpu: 0.0.40
codegen_flags: <defaults>
</compile_context>

<pallas_src>
import jax
import jax.numpy as jnp
from jax import lax
from jax.experimental import pallas as pl
from jax.experimental.pallas import tpu as pltpu


# ----------------------------------------------------------------------------
# Pallas kernel: full CSPNet forward for a tile of TB samples (batch on lanes).
# ----------------------------------------------------------------------------
def _cspnet_kernel(x_ref, w_ref, p_ref, wc_ref, bc_ref, out_ref):
    # x_ref : (r_in, TB)            bf16, flattened (electrode*time) + bias row
    # w_ref : (C2*t_out, r_in)      bf16, folded conv1+BN1+conv2+BN2 (+bias col)
    # p_ref : (C2*n_feat, C2*t_out) bf16, block-diagonal average-pool matrix
    # wc_ref: (K, C2*n_feat)        bf16, classifier weight
    # bc_ref: (K, 1)                f32,  classifier bias
    # out   : (K, TB)               f32,  per-class log-probs, batch on lanes

    # temporal conv + BN1 + grouped spatial conv + BN2 (+ bias) as one bf16
    # MXU matmul with f32 accumulation.
    y = jnp.dot(w_ref[...], x_ref[...], preferred_element_type=jnp.float32)

    # square nonlinearity (f32 VPU; v5e has no bf16 VALU)
    y = y * y

    # AvgPool2d over time as a block-diagonal bf16 matmul (f32 accumulation)
    pooled = jnp.dot(p_ref[...], y.astype(jnp.bfloat16),
                     preferred_element_type=jnp.float32)

    # safe_log (f32 EUP)
    feat = jnp.log(jnp.maximum(pooled, 1e-6))

    # TODO(synk): Dropout is identity in eval mode; no stochastic path emitted.

    # classifier conv as matmul + bias, then log_softmax over classes (rows)
    logits = jnp.dot(wc_ref[...], feat.astype(jnp.bfloat16),
                     preferred_element_type=jnp.float32) + bc_ref[...]
    m = jnp.max(logits, axis=0, keepdims=True)
    lse = jnp.log(jnp.sum(jnp.exp(logits - m), axis=0, keepdims=True)) + m
    out_ref[...] = logits - lse


# ----------------------------------------------------------------------------
# One-time weight folding (outside the per-batch forward)
# ----------------------------------------------------------------------------
def fold_cspnet_params(params, *, num_electrodes, chunk_size, filter_size_t,
                       pool_size, pool_stride):
    E, T = num_electrodes, chunk_size
    w1 = params["w1"]                                  # (Ft, fs_t)
    Ft, fs_t = w1.shape
    assert fs_t == filter_size_t
    w2 = params["w2"]                                  # (Ft, Fs, E)
    Fs = w2.shape[1]
    C2 = Ft * Fs
    wc = params["wc"]                                  # (K, C2, n_feat)
    K = wc.shape[0]

    pad = filter_size_t // 2
    t_pad = T + 2 * pad
    t_out = t_pad - filter_size_t + 1
    assert t_pad == t_out + fs_t - 1                   # per-tap slices always valid
    n_feat = (t_out - pool_size) // pool_stride + 1
    r_in = pl.cdiv(E * t_pad + 1, 128) * 128           # lane-dense contraction dim

    # ---- fold conv1 + BN1 + conv2(grouped) + BN2 into one linear map + bias --
    bn1s, bn1b = params["bn1_scale"], params["bn1_shift"]     # (Ft,)
    bn2s, bn2b = params["bn2_scale"], params["bn2_shift"]     # (C2,)
    w_comb = jnp.einsum("fs,f,fse,fk->fsek",
                        bn2s.reshape(Ft, Fs), bn1s, w2, w1)   # (Ft,Fs,E,fs_t)
    w_comb = w_comb.reshape(C2, E, fs_t)
    b_comb = (bn2s.reshape(Ft, Fs) * bn1b[:, None]
              * w2.sum(-1)).reshape(C2) + bn2b                # (C2,)

    # ---- Toeplitz matrix: row (c2*t_out + t), col (e*t_pad + tau) ------------
    t_idx = jnp.arange(t_out)
    tau_idx = jnp.arange(t_pad)
    k_mat = tau_idx[None, :] - t_idx[:, None]                 # (t_out, t_pad)
    valid = (k_mat >= 0) & (k_mat < fs_t)
    w_slab = jnp.where(valid[None, None],
                       w_comb[:, :, jnp.clip(k_mat, 0, fs_t - 1)],
                       0.0)                                   # (C2,E,t_out,t_pad)
    w_toe = jnp.transpose(w_slab, (0, 2, 1, 3)).reshape(C2 * t_out, E * t_pad)
    bias_col = jnp.repeat(b_comb, t_out)[:, None]             # (C2*t_out, 1)
    w_aug = jnp.concatenate(
        [w_toe, bias_col,
         jnp.zeros((C2 * t_out, r_in - E * t_pad - 1), jnp.float32)], axis=1)

    # ---- block-diagonal average-pool matrix (C2*n_feat, C2*t_out) ------------
    starts = jnp.arange(n_feat)[:, None] * pool_stride
    ts = jnp.arange(t_out)[None, :]
    pool_vec = (((ts >= starts) & (ts < starts + pool_size))
                .astype(jnp.float32) / float(pool_size))      # (n_feat, t_out)
    p_bd = jnp.kron(jnp.eye(C2, dtype=jnp.float32), pool_vec)

    return dict(
        w_aug=w_aug.astype(jnp.bfloat16),                     # bf16 MXU operand
        p_bd=p_bd.astype(jnp.bfloat16),                       # 1/pool exact in bf16
        wc_flat=wc.reshape(K, C2 * n_feat).astype(jnp.bfloat16),
        bc=params["bc"].reshape(K, 1).astype(jnp.float32),
        meta=dict(E=E, T=T, pad=pad, r_in=r_in, C2=C2, t_out=t_out,
                  n_feat=n_feat, K=K),
    )


# ----------------------------------------------------------------------------
# Per-batch forward: input glue + pallas_call
# ----------------------------------------------------------------------------
def cspnet_forward(x, folded, *, batch_tile=256):
    # x: (B, 1, E, T) float32, PyTorch NCHW input convention -> (B, K) log-probs
    meta = folded["meta"]
    E, T, pad, r_in = meta["E"], meta["T"], meta["pad"], meta["r_in"]
    C2, t_out, n_feat, K = meta["C2"], meta["t_out"], meta["n_feat"], meta["K"]
    B = x.shape[0]
    t_pad = T + 2 * pad

    # ---- input glue: squeeze channel, pad time, flatten, bias row, lane pad --
    xk = jnp.pad(x[:, 0].astype(jnp.float32), ((0, 0), (0, 0), (pad, pad)))
    xf = xk.reshape(B, E * t_pad)
    xf = jnp.concatenate(
        [xf, jnp.ones((B, 1), jnp.float32),
         jnp.zeros((B, r_in - E * t_pad - 1), jnp.float32)], axis=1)  # (B, r_in)

    # ---- batch tiling: batch on lanes, >= 2 grid steps when batch allows -----
    b_ceil = pl.cdiv(B, 128) * 128
    tb = min(batch_tile, b_ceil)
    if b_ceil // tb < 2 and b_ceil >= 256:
        tb = max(128, ((b_ceil // 2) // 128) * 128)   # keep both v7x TCs busy
    b_pad = pl.cdiv(b_ceil, tb) * tb
    # TODO(synk): for very large B the HBM transpose below could be removed by
    # contracting r_in on both operands with lax.dot_general inside the kernel.
    x_aug = jnp.pad(jnp.transpose(xf),
                    ((0, 0), (0, b_pad - B))).astype(jnp.bfloat16)    # (r_in, b_pad)

    w_aug, p_bd = folded["w_aug"], folded["p_bd"]
    wc_flat, bc = folded["wc_flat"], folded["bc"]

    # ---- explicit VMEM budget (block bytes x buffer counts + intermediates) --
    bytes_in = 2 * (r_in * tb * 2) + 2 * (
        C2 * t_out * r_in * 2 + C2 * n_feat * C2 * t_out * 2
        + K * C2 * n_feat * 2 + K * 4)
    bytes_out = 2 * K * tb * 4
    bytes_tmp = 2 * C2 * t_out * tb * 4 + 2 * C2 * n_feat * tb * 4 + 4 * K * tb * 4
    vmem_limit = min((8 << 20) + 2 * (bytes_in + bytes_out + bytes_tmp), 100 << 20)

    def _run(const_pipeline_mode):
        def _const_spec(shape):
            idx = lambda b, n=len(shape): (0,) * n
            if const_pipeline_mode is None:
                return pl.BlockSpec(shape, idx)
            return pl.BlockSpec(shape, idx, pipeline_mode=const_pipeline_mode)

        grid_spec = pltpu.PrefetchScalarGridSpec(
            num_scalar_prefetch=0,
            grid=(b_pad // tb,),
            in_specs=[
                pl.BlockSpec((r_in, tb), lambda b: (0, b)),
                _const_spec((C2 * t_out, r_in)),
                _const_spec((C2 * n_feat, C2 * t_out)),
                _const_spec((K, C2 * n_feat)),
                _const_spec((K, 1)),
            ],
            out_specs=pl.BlockSpec((K, tb), lambda b: (0, b)),
        )
        return pl.pallas_call(
            _cspnet_kernel,
            out_shape=jax.ShapeDtypeStruct((K, b_pad), jnp.float32),
            grid_spec=grid_spec,
            compiler_params=pltpu.CompilerParams(
                dimension_semantics=("parallel",),
                vmem_limit_bytes=int(vmem_limit)),
        )(x_aug, w_aug, p_bd, wc_flat, bc)

    try:
        single_buffer = pl.Buffered(1) if hasattr(pl, "Buffered") else None
        out = _run(single_buffer)
    except Exception:
        # Older jax without BlockSpec pipeline_mode / Buffered(1) support:
        # fall back to the default double-buffered constants.
        out = _run(None)

    return jnp.transpose(out)[:B]                             # (B, K)


# ----------------------------------------------------------------------------
# Deterministic parameter init (mirrors the torch __init__ / _reset_parameters)
# ----------------------------------------------------------------------------
def init_params(key, *, num_electrodes, chunk_size, num_classes, num_filters_t,
                filter_size_t, num_filters_s, pool_size, pool_stride):
    E, Ft, fs_t, Fs, K = (num_electrodes, num_filters_t, filter_size_t,
                          num_filters_s, num_classes)
    C2 = Ft * Fs
    n_feat = (chunk_size - pool_size) // pool_stride + 1
    k1, k2, k3, k4 = jax.random.split(key, 4)

    # kaiming_normal_(mode='fan_out', nonlinearity='relu'): std = sqrt(2/fan_out)
    def kaiming(k, shape, fan_out):
        return jax.random.normal(k, shape, jnp.float32) * (2.0 / fan_out) ** 0.5

    w1 = kaiming(k1, (Ft, fs_t), Ft * fs_t)           # torch weight (Ft,1,fs_t,1)
    w2 = kaiming(k2, (Ft, Fs, E), C2 * E)             # torch weight (C2,1,1,E), groups=Ft
    wc = kaiming(k3, (K, C2, n_feat), K * n_feat)     # torch weight (K,C2,n_feat,1)

    # Conv2dNormWeight forward renorm: per output filter L2 norm <= 0.5
    norms = jnp.sqrt(jnp.sum(wc.reshape(K, -1) ** 2, axis=-1))
    factor = jnp.where(norms > 0.5, 0.5 / (norms + 1e-7), 1.0)
    wc = wc * factor[:, None, None]

    # classifier bias keeps the default Conv2d init: U(-1/sqrt(fan_in), +)
    fan_in_c = C2 * n_feat
    bound = 1.0 / (fan_in_c ** 0.5)
    bc = jax.random.uniform(k4, (K,), jnp.float32, -bound, bound)

    # BatchNorm2d eval semantics (gamma=1, beta=0, running_mean=0, running_var=1)
    eps = 1e-5
    return dict(
        w1=w1, w2=w2, wc=wc, bc=bc,
        bn1_scale=jnp.ones((Ft,), jnp.float32) / jnp.sqrt(1.0 + eps),
        bn1_shift=jnp.zeros((Ft,), jnp.float32),
        bn2_scale=jnp.ones((C2,), jnp.float32) / jnp.sqrt(1.0 + eps),
        bn2_shift=jnp.zeros((C2,), jnp.float32),
    )


# ----------------------------------------------------------------------------
# Independent plain-JAX reference (lax.conv / reduce_window) for verification
# ----------------------------------------------------------------------------
def cspnet_reference(x, params, *, filter_size_t, pool_size, pool_stride):
    w1 = params["w1"]; Ft, fs_t = w1.shape
    w2 = params["w2"]; Fs, E = w2.shape[1], w2.shape[2]
    C2 = Ft * Fs
    wc = params["wc"]; K = wc.shape[0]
    pad = filter_size_t // 2

    xp = jnp.transpose(x, (0, 1, 3, 2))                    # (B,1,T,E) like torch permute
    h = lax.conv_general_dilated(
        xp, w1[:, None, :, None], window_strides=(1, 1),
        padding=((pad, pad), (0, 0)),
        dimension_numbers=("NCHW", "OIHW", "NCHW"))        # (B,Ft,T,E)
    h = (h * params["bn1_scale"].reshape(1, Ft, 1, 1)
         + params["bn1_shift"].reshape(1, Ft, 1, 1))
    h2 = lax.conv_general_dilated(
        h, w2.reshape(C2, 1, 1, E), window_strides=(1, 1),
        padding=((0, 0), (0, 0)),
        dimension_numbers=("NCHW", "OIHW", "NCHW"),
        feature_group_count=Ft)                            # (B,C2,T,1)
    h2 = (h2 * params["bn2_scale"].reshape(1, C2, 1, 1)
          + params["bn2_shift"].reshape(1, C2, 1, 1))
    h2 = h2 * h2
    pooled = lax.reduce_window(
        h2, 0.0, lax.add,
        window_dimensions=(1, 1, pool_size, 1),
        window_strides=(1, 1, pool_stride, 1),
        padding="VALID") / float(pool_size)                # (B,C2,n_feat,1)
    feat = jnp.log(jnp.maximum(pooled, 1e-6))
    logits = jnp.einsum("bcnw,kcn->bk", feat, wc) + params["bc"][None, :]
    return jax.nn.log_softmax(logits, axis=1)


if __name__ == "__main__":
    # small but consistent config:
    #   chunk_size=64, num_electrodes=8, num_classes=4,
    #   num_filters_t=4, filter_size_t=5, num_filters_s=2,
    #   pool_size_1=16, pool_stride_1=8  -> n_features=7, feature_dim=8
    B, E, T = 2, 8, 64
    K, Ft, fs_t, Fs = 4, 4, 5, 2
    pool_size, pool_stride = 16, 8

    key = jax.random.PRNGKey(0)
    kx, kp = jax.random.split(key)
    x = jax.random.normal(kx, (B, 1, E, T), jnp.float32)   # (batch, 1, electrodes, time)

    params = init_params(kp, num_electrodes=E, chunk_size=T, num_classes=K,
                         num_filters_t=Ft, filter_size_t=fs_t, num_filters_s=Fs,
                         pool_size=pool_size, pool_stride=pool_stride)

    # fold once, off the per-batch hot path (perf feedback)
    folded = fold_cspnet_params(params, num_electrodes=E, chunk_size=T,
                                filter_size_t=fs_t, pool_size=pool_size,
                                pool_stride=pool_stride)
    folded = jax.block_until_ready(folded)

    out = cspnet_forward(x, folded)
    out = jax.block_until_ready(out)

    ref = cspnet_reference(x, params, filter_size_t=fs_t,
                           pool_size=pool_size, pool_stride=pool_stride)
    ref = jax.block_until_ready(ref)

    assert out.shape == (B, K)
    # bf16 MXU operands (with f32 accumulation) agree with the all-f32
    # reference to ~1e-2 through the square/log chain; tolerance set accordingly.
    assert jnp.allclose(out, ref, rtol=2e-2, atol=5e-2), (out, ref)
    print("KERNEL_OK")
</pallas_src>

<mosaic_0001>
module attributes {stable_mosaic.version = 11 : i64} {
  func.func @_cspnet_kernel(%arg0: i32, %arg1: memref<640x128xbf16, #tpu.memory_space<vmem>>, %arg2: memref<512x640xbf16, #tpu.memory_space<vmem>>, %arg3: memref<56x512xbf16, #tpu.memory_space<vmem>>, %arg4: memref<4x56xbf16, #tpu.memory_space<vmem>>, %arg5: memref<4x1xf32, #tpu.memory_space<vmem>>, %arg6: memref<4x128xf32, #tpu.memory_space<vmem>>) attributes {dimension_semantics = [#tpu.dimension_semantics<parallel>], iteration_bounds = array<i64: 1>, scalar_prefetch = 0 : i64, scratch_operands = 0 : i64, tpu.core_type = #tpu.core_type<tc>, window_params = [{transform_indices = @transform_0, window_bounds = array<i64: 640, 128>}, {pipeline_mode = #tpu.pipeline_mode<synchronous>, transform_indices = @transform_1, window_bounds = array<i64: 512, 640>}, {pipeline_mode = #tpu.pipeline_mode<synchronous>, transform_indices = @transform_2, window_bounds = array<i64: 56, 512>}, {pipeline_mode = #tpu.pipeline_mode<synchronous>, transform_indices = @transform_3, window_bounds = array<i64: 4, 56>}, {pipeline_mode = #tpu.pipeline_mode<synchronous>, transform_indices = @transform_4, window_bounds = array<i64: 4, 1>}, {transform_indices = @transform_5, window_bounds = array<i64: 4, 128>}]} {
    %c0 = arith.constant 0 : index
    %c0_0 = arith.constant 0 : index
    %0 = vector.load %arg2[%c0, %c0_0] : memref<512x640xbf16, #tpu.memory_space<vmem>>, vector<512x640xbf16>
    %c0_1 = arith.constant 0 : index
    %c0_2 = arith.constant 0 : index
    %1 = vector.load %arg1[%c0_1, %c0_2] : memref<640x128xbf16, #tpu.memory_space<vmem>>, vector<640x128xbf16>
    %cst = arith.constant dense<0.000000e+00> : vector<512x128xf32>
    %2 = tpu.matmul %0, %1, %cst {dimension_numbers = #tpu.dot_dimension_numbers<[1], [0], [0], [1], [0, 0, 1, 1], [], []>} : vector<512x640xbf16>, vector<640x128xbf16>, vector<512x128xf32> -> vector<512x128xf32>
    %3 = arith.mulf %2, %2 : vector<512x128xf32>
    %c0_3 = arith.constant 0 : index
    %c0_4 = arith.constant 0 : index
    %4 = vector.load %arg3[%c0_3, %c0_4] : memref<56x512xbf16, #tpu.memory_space<vmem>>, vector<56x512xbf16>
    %5 = arith.truncf %3 : vector<512x128xf32> to vector<512x128xbf16>
    %cst_5 = arith.constant dense<0.000000e+00> : vector<56x128xf32>
    %6 = tpu.matmul %4, %5, %cst_5 {dimension_numbers = #tpu.dot_dimension_numbers<[1], [0], [0], [1], [0, 0, 1, 1], [], []>} : vector<56x512xbf16>, vector<512x128xbf16>, vector<56x128xf32> -> vector<56x128xf32>
    %cst_6 = arith.constant 9.99999997E-7 : f32
    %7 = vector.broadcast %cst_6 : f32 to vector<56x128xf32>
    %8 = arith.maximumf %6, %7 : vector<56x128xf32>
    %9 = math.log %8 : vector<56x128xf32>
    %c0_7 = arith.constant 0 : index
    %c0_8 = arith.constant 0 : index
    %10 = vector.load %arg4[%c0_7, %c0_8] : memref<4x56xbf16, #tpu.memory_space<vmem>>, vector<4x56xbf16>
    %11 = arith.truncf %9 : vector<56x128xf32> to vector<56x128xbf16>
    %cst_9 = arith.constant dense<0.000000e+00> : vector<4x128xf32>
    %12 = tpu.matmul %10, %11, %cst_9 {dimension_numbers = #tpu.dot_dimension_numbers<[1], [0], [0], [1], [0, 0, 1, 1], [], []>} : vector<4x56xbf16>, vector<56x128xbf16>, vector<4x128xf32> -> vector<4x128xf32>
    %c0_10 = arith.constant 0 : index
    %c0_11 = arith.constant 0 : index
    %13 = vector.load %arg5[%c0_10, %c0_11] : memref<4x1xf32, #tpu.memory_space<vmem>>, vector<4x1xf32>
    %14 = vector.broadcast %13 : vector<4x1xf32> to vector<4x128xf32>
    %15 = arith.addf %12, %14 : vector<4x128xf32>
    %cst_12 = arith.constant dense<0xFF800000> : vector<128xf32>
    %16 = vector.multi_reduction <maximumf>, %15, %cst_12 [0] : vector<4x128xf32> to vector<128xf32>
    %17 = vector.shape_cast %16 : vector<128xf32> to vector<1x128xf32>
    %18 = vector.broadcast %17 : vector<1x128xf32> to vector<4x128xf32>
    %19 = arith.subf %15, %18 : vector<4x128xf32>
    %20 = math.exp %19 : vector<4x128xf32>
    %cst_13 = arith.constant dense<0.000000e+00> : vector<128xf32>
    %21 = vector.multi_reduction <add>, %20, %cst_13 [0] : vector<4x128xf32> to vector<128xf32>
    %22 = vector.shape_cast %21 : vector<128xf32> to vector<1x128xf32>
    %23 = math.log %22 : vector<1x128xf32>
    %24 = arith.addf %23, %17 : vector<1x128xf32>
    %25 = vector.broadcast %24 : vector<1x128xf32> to vector<4x128xf32>
    %26 = arith.subf %15, %25 : vector<4x128xf32>
    %c0_14 = arith.constant 0 : index
    %c0_15 = arith.constant 0 : index
    %27 = vector.load %arg6[%c0_14, %c0_15] : memref<4x128xf32, #tpu.memory_space<vmem>>, vector<4x128xf32>
    tpu.vector_store %arg6[%c0_14, %c0_15], %26 {strides = array<i32>} : memref<4x128xf32, #tpu.memory_space<vmem>>, vector<4x128xf32>,
    return
  }
  func.func @transform_0(%arg0: i32) -> (i32, i32) {
    %c0_i32 = arith.constant 0 : i32
    %c0_i32_0 = arith.constant 0 : i32
    return %c0_i32, %arg0 : i32, i32
  }
  func.func @transform_1(%arg0: i32) -> (i32, i32) {
    %c0_i32 = arith.constant 0 : i32
    %c0_i32_0 = arith.constant 0 : i32
    %c0_i32_1 = arith.constant 0 : i32
    return %c0_i32, %c0_i32_0 : i32, i32
  }
  func.func @transform_2(%arg0: i32) -> (i32, i32) {
    %c0_i32 = arith.constant 0 : i32
    %c0_i32_0 = arith.constant 0 : i32
    %c0_i32_1 = arith.constant 0 : i32
    return %c0_i32, %c0_i32_0 : i32, i32
  }
  func.func @transform_3(%arg0: i32) -> (i32, i32) {
    %c0_i32 = arith.constant 0 : i32
    %c0_i32_0 = arith.constant 0 : i32
    %c0_i32_1 = arith.constant 0 : i32
    return %c0_i32, %c0_i32_0 : i32, i32
  }
  func.func @transform_4(%arg0: i32) -> (i32, i32) {
    %c0_i32 = arith.constant 0 : i32
    %c0_i32_0 = arith.constant 0 : i32
    %c0_i32_1 = arith.constant 0 : i32
    return %c0_i32, %c0_i32_0 : i32, i32
  }
  func.func @transform_5(%arg0: i32) -> (i32, i32) {
    %c0_i32 = arith.constant 0 : i32
    %c0_i32_0 = arith.constant 0 : i32
    return %c0_i32, %arg0 : i32, i32
  }
}

module attributes {stable_mosaic.version = 11 : i64} {
  func.func @_cspnet_kernel(%arg0: i32, %arg1: memref<640x128xbf16, #tpu.memory_space<vmem>>, %arg2: memref<512x640xbf16, #tpu.memory_space<vmem>>, %arg3: memref<56x512xbf16, #tpu.memory_space<vmem>>, %arg4: memref<4x56xbf16, #tpu.memory_space<vmem>>, %arg5: memref<4x1xf32, #tpu.memory_space<vmem>>, %arg6: memref<4x128xf32, #tpu.memory_space<vmem>>) attributes {dimension_semantics = [#tpu.dimension_semantics<parallel>], iteration_bounds = array<i64: 1>, scalar_prefetch = 0 : i64, scratch_operands = 0 : i64, tpu.core_type = #tpu.core_type<tc>, window_params = [{transform_indices = @transform_0, window_bounds = array<i64: 640, 128>}, {pipeline_mode = #tpu.pipeline_mode<synchronous>, transform_indices = @transform_1, window_bounds = array<i64: 512, 640>}, {pipeline_mode = #tpu.pipeline_mode<synchronous>, transform_indices = @transform_2, window_bounds = array<i64: 56, 512>}, {pipeline_mode = #tpu.pipeline_mode<synchronous>, transform_indices = @transform_3, window_bounds = array<i64: 4, 56>}, {pipeline_mode = #tpu.pipeline_mode<synchronous>, transform_indices = @transform_4, window_bounds = array<i64: 4, 1>}, {transform_indices = @transform_5, window_bounds = array<i64: 4, 128>}]} {
    %c0 = arith.constant 0 : index
    %c0_0 = arith.constant 0 : index
    %0 = vector.load %arg2[%c0, %c0_0] : memref<512x640xbf16, #tpu.memory_space<vmem>>, vector<512x640xbf16>
    %c0_1 = arith.constant 0 : index
    %c0_2 = arith.constant 0 : index
    %1 = vector.load %arg1[%c0_1, %c0_2] : memref<640x128xbf16, #tpu.memory_space<vmem>>, vector<640x128xbf16>
    %cst = arith.constant dense<0.000000e+00> : vector<512x128xf32>
    %2 = tpu.matmul %0, %1, %cst {dimension_numbers = #tpu.dot_dimension_numbers<[1], [0], [0], [1], [0, 0, 1, 1], [], []>} : vector<512x640xbf16>, vector<640x128xbf16>, vector<512x128xf32> -> vector<512x128xf32>
    %3 = arith.mulf %2, %2 : vector<512x128xf32>
    %c0_3 = arith.constant 0 : index
    %c0_4 = arith.constant 0 : index
    %4 = vector.load %arg3[%c0_3, %c0_4] : memref<56x512xbf16, #tpu.memory_space<vmem>>, vector<56x512xbf16>
    %5 = arith.truncf %3 : vector<512x128xf32> to vector<512x128xbf16>
    %cst_5 = arith.constant dense<0.000000e+00> : vector<56x128xf32>
    %6 = tpu.matmul %4, %5, %cst_5 {dimension_numbers = #tpu.dot_dimension_numbers<[1], [0], [0], [1], [0, 0, 1, 1], [], []>} : vector<56x512xbf16>, vector<512x128xbf16>, vector<56x128xf32> -> vector<56x128xf32>
    %cst_6 = arith.constant 9.99999997E-7 : f32
    %7 = vector.broadcast %cst_6 : f32 to vector<56x128xf32>
    %8 = arith.maximumf %6, %7 : vector<56x128xf32>
    %9 = math.log %8 : vector<56x128xf32>
    %c0_7 = arith.constant 0 : index
    %c0_8 = arith.constant 0 : index
    %10 = vector.load %arg4[%c0_7, %c0_8] : memref<4x56xbf16, #tpu.memory_space<vmem>>, vector<4x56xbf16>
    %11 = arith.truncf %9 : vector<56x128xf32> to vector<56x128xbf16>
    %cst_9 = arith.constant dense<0.000000e+00> : vector<4x128xf32>
    %12 = tpu.matmul %10, %11, %cst_9 {dimension_numbers = #tpu.dot_dimension_numbers<[1], [0], [0], [1], [0, 0, 1, 1], [], []>} : vector<4x56xbf16>, vector<56x128xbf16>, vector<4x128xf32> -> vector<4x128xf32>
    %c0_10 = arith.constant 0 : index
    %c0_11 = arith.constant 0 : index
    %13 = vector.load %arg5[%c0_10, %c0_11] : memref<4x1xf32, #tpu.memory_space<vmem>>, vector<4x1xf32>
    %14 = vector.broadcast %13 : vector<4x1xf32> to vector<4x128xf32>
    %15 = arith.addf %12, %14 : vector<4x128xf32>
    %cst_12 = arith.constant dense<0xFF800000> : vector<128xf32>
    %16 = vector.multi_reduction <maximumf>, %15, %cst_12 [0] : vector<4x128xf32> to vector<128xf32>
    %17 = vector.shape_cast %16 : vector<128xf32> to vector<1x128xf32>
    %18 = vector.broadcast %17 : vector<1x128xf32> to vector<4x128xf32>
    %19 = arith.subf %15, %18 : vector<4x128xf32>
    %20 = math.exp %19 : vector<4x128xf32>
    %cst_13 = arith.constant dense<0.000000e+00> : vector<128xf32>
    %21 = vector.multi_reduction <add>, %20, %cst_13 [0] : vector<4x128xf32> to vector<128xf32>
    %22 = vector.shape_cast %21 : vector<128xf32> to vector<1x128xf32>
    %23 = math.log %22 : vector<1x128xf32>
    %24 = arith.addf %23, %17 : vector<1x128xf32>
    %25 = vector.broadcast %24 : vector<1x128xf32> to vector<4x128xf32>
    %26 = arith.subf %15, %25 : vector<4x128xf32>
    %c0_14 = arith.constant 0 : index
    %c0_15 = arith.constant 0 : index
    %27 = vector.load %arg6[%c0_14, %c0_15] : memref<4x128xf32, #tpu.memory_space<vmem>>, vector<4x128xf32>
    tpu.vector_store %arg6[%c0_14, %c0_15], %26 {strides = array<i32>} : memref<4x128xf32, #tpu.memory_space<vmem>>, vector<4x128xf32>,
    return
  }
  func.func @transform_0(%arg0: i32) -> (i32, i32) {
    %c0_i32 = arith.constant 0 : i32
    %c0_i32_0 = arith.constant 0 : i32
    return %c0_i32, %arg0 : i32, i32
  }
  func.func @transform_1(%arg0: i32) -> (i32, i32) {
    %c0_i32 = arith.constant 0 : i32
    %c0_i32_0 = arith.constant 0 : i32
    %c0_i32_1 = arith.constant 0 : i32
    return %c0_i32, %c0_i32_0 : i32, i32
  }
  func.func @transform_2(%arg0: i32) -> (i32, i32) {
    %c0_i32 = arith.constant 0 : i32
    %c0_i32_0 = arith.constant 0 : i32
    %c0_i32_1 = arith.constant 0 : i32
    return %c0_i32, %c0_i32_0 : i32, i32
  }
  func.func @transform_3(%arg0: i32) -> (i32, i32) {
    %c0_i32 = arith.constant 0 : i32
    %c0_i32_0 = arith.constant 0 : i32
    %c0_i32_1 = arith.constant 0 : i32
    return %c0_i32, %c0_i32_0 : i32, i32
  }
  func.func @transform_4(%arg0: i32) -> (i32, i32) {
    %c0_i32 = arith.constant 0 : i32
    %c0_i32_0 = arith.constant 0 : i32
    %c0_i32_1 = arith.constant 0 : i32
    return %c0_i32, %c0_i32_0 : i32, i32
  }
  func.func @transform_5(%arg0: i32) -> (i32, i32) {
    %c0_i32 = arith.constant 0 : i32
    %c0_i32_0 = arith.constant 0 : i32
    return %c0_i32, %arg0 : i32, i32
  }
}

</mosaic_0001>

<llo_original>
// kernel: tpu_custom_call.1
$region0: #{tpu_custom_call.1}
  #allocation0 [shape = 'u32[]', space=smem, size = 0x4, offset = 0x4, fixed_abs, tag = 'smem constant byte address 0x4 - core index']
  #allocation1 [shape = 'u32[72,128]{1,0:T(1,128)}', space=vmem, size = 0x9000, scoped, tag = 'internal scratch']
  %s0 = inlined_call_operand.hbm [shape: bf16[640,128], index: 0, kind: input, shape index: {}]
  %s1 = inlined_call_operand.hbm [shape: bf16[512,640], index: 1, kind: input, shape index: {}]
  %s2 = inlined_call_operand.hbm [shape: bf16[56,512], index: 2, kind: input, shape index: {}]
  %s3 = inlined_call_operand.vmem [shape: bf16[4,56], index: 3, kind: input, shape index: {}]
  %s4 = inlined_call_operand.vmem [shape: f32[4,1], index: 4, kind: input, shape index: {}]
  %s5 = inlined_call_operand.hbm [shape: f32[4,128], index: 5, kind: output, shape index: {}]
  %s6 = sld [smem:[#allocation0]]
  $region42: #{tpu_custom_call.1} parent=0
    _
  %s8 = ssub.s32 1, %s6
  %s9 = scalar_select 0, %s8, %s6
  $region1: #{tpu_custom_call.1} parent=0
    #allocation2 [shape = 'u8[163840]{0}', space=vmem, size = 0x28000, scoped, tag = 'input window, operand 0, single buffered']
    #allocation3 [shape = 's32[1]{0}', space=sflag, size = 0x4, scoped, tag = 'scoped memory for tpu_custom_call.1']
    #allocation4 [shape = 's32[1]{0}', space=sflag, size = 0x4, scoped, tag = 'scoped memory for tpu_custom_call.1']
    #allocation5 [shape = 'u8[655360]{0}', space=vmem, size = 0xa0000, scoped, tag = 'input window, operand 1, single buffered']
    #allocation6 [shape = 's32[1]{0}', space=sflag, size = 0x4, scoped, tag = 'scoped memory for tpu_custom_call.1']
    #allocation7 [shape = 'u8[57344]{0}', space=vmem, size = 0xe000, scoped, tag = 'input window, operand 2, single buffered']
    #allocation8 [shape = 'u8[2048]{0}', space=vmem, size = 0x800, scoped, tag = 'output window, operand 0, single buffered']
    %10 = vsyncpa [#allocation3], 0
    %11 = vsyncpa [#allocation6], 0
    %12 = vsyncpa [#allocation4], 0
    // Predicated region
    $region2: #{tpu_custom_call.1} parent=1 // pred_check
      _
    $region3: #{tpu_custom_call.1} parent=1 // pred_check_branch
      %14 = sbr.rel (0) target = $region5
    $region4: #{tpu_custom_call.1} parent=1 // pred_region
      %16 = vsyncadd [#allocation3], 0
      %s17 = sshll.u32 %s0, 4
      %s18 = int_to_ptr.hbm [resolvable:$true] %s17
      %s19 = sshll.u32 [#allocation2], 4
      %s20 = int_to_ptr.vmem [resolvable:$true] %s19
      %25 = dma.hbm_to_vmem [thread:$0]  %s18, 5120, %s20, [#allocation3], 64, 64, 4
    $region5: #{tpu_custom_call.1} parent=1 // pred_fallthru
      _
    // Predicated region
    $region6: #{tpu_custom_call.1} parent=1 // pred_check
      _
    $region7: #{tpu_custom_call.1} parent=1 // pred_check_branch
      %27 = sbr.rel (0) target = $region9
    $region8: #{tpu_custom_call.1} parent=1 // pred_region
      %29 = vsyncadd [#allocation6], 0
      %s30 = sshll.u32 %s1, 4
      %s31 = int_to_ptr.hbm [resolvable:$true] %s30
      %s32 = sshll.u32 [#allocation5], 4
      %s33 = int_to_ptr.vmem [resolvable:$true] %s32
      %38 = dma.hbm_to_vmem [thread:$0]  %s31, 20480, %s33, [#allocation6], 320, 320, 20
    $region9: #{tpu_custom_call.1} parent=1 // pred_fallthru
      _
    // Predicated region
    $region10: #{tpu_custom_call.1} parent=1 // pred_check
      _
    $region11: #{tpu_custom_call.1} parent=1 // pred_check_branch
      %40 = sbr.rel (0) target = $region13
    $region12: #{tpu_custom_call.1} parent=1 // pred_region
      %42 = vsyncadd [#allocation6], 0
      %s43 = sshll.u32 %s2, 4
      %s44 = int_to_ptr.hbm [resolvable:$true] %s43
      %s45 = sshll.u32 [#allocation7], 4
      %s46 = int_to_ptr.vmem [resolvable:$true] %s45
      %51 = dma.hbm_to_vmem [thread:$0]  %s44, 1792, %s46, [#allocation6], 256, 256, 16
    $region13: #{tpu_custom_call.1} parent=1 // pred_fallthru
      _
    // Predicated region
    $region14: #{tpu_custom_call.1} parent=1 // pred_check
      _
    $region15: #{tpu_custom_call.1} parent=1 // pred_check_branch
      %53 = sbr.rel (0) target = $region17
    $region16: #{tpu_custom_call.1} parent=1 // pred_region
      _
    $region17: #{tpu_custom_call.1} parent=1 // pred_fallthru
      _
    // Predicated region
    $region18: #{tpu_custom_call.1} parent=1 // pred_check
      _
    $region19: #{tpu_custom_call.1} parent=1 // pred_check_branch
      %55 = sbr.rel (0) target = $region21
    $region20: #{tpu_custom_call.1} parent=1 // pred_region
      _
    $region21: #{tpu_custom_call.1} parent=1 // pred_fallthru
      _
    // Predicated region
    $region22: #{tpu_custom_call.1} parent=1 // pred_check
      _
    $region23: #{tpu_custom_call.1} parent=1 // pred_check_branch
      %57 = sbr.rel (0) target = $region25
    $region24: #{tpu_custom_call.1} parent=1 // pred_region
      %59 = dma.done [#allocation3], 5120
    $region25: #{tpu_custom_call.1} parent=1 // pred_fallthru
      _
    // Predicated region
    $region26: #{tpu_custom_call.1} parent=1 // pred_check
      _
    $region27: #{tpu_custom_call.1} parent=1 // pred_check_branch
      %61 = sbr.rel (0) target = $region29
    $region28: #{tpu_custom_call.1} parent=1 // pred_region
      %63 = dma.done [#allocation6], 20480
    $region29: #{tpu_custom_call.1} parent=1 // pred_fallthru
      _
    // Predicated region
    $region30: #{tpu_custom_call.1} parent=1 // pred_check
      _
    $region31: #{tpu_custom_call.1} parent=1 // pred_check_branch
      %65 = sbr.rel (0) target = $region33
    $region32: #{tpu_custom_call.1} parent=1 // pred_region
      %67 = dma.done [#allocation6], 1792
    $region33: #{tpu_custom_call.1} parent=1 // pred_fallthru
      _
    %v69 = vld [vmem:[#allocation5] sm:$0xff]
    %v70 = vld [vmem:[#allocation5 + $0x8] sm:$0xff]
    %v71 = vld [vmem:[#allocation5 + $0x10] sm:$0xf]
    %v72 = vld [vmem:[#allocation5 + $0x14] sm:$0xff]
    %v73 = vld [vmem:[#allocation5 + $0x1c] sm:$0xff]
    %v74 = vld [vmem:[#allocation5 + $0x24] sm:$0xf]
    %v75 = vld [vmem:[#allocation5 + $0x28] sm:$0xff]
    %v76 = vld [vmem:[#allocation5 + $0x30] sm:$0xff]
    %v77 = vld [vmem:[#allocation5 + $0x38] sm:$0xf]
    %v78 = vld [vmem:[#allocation5 + $0x3c] sm:$0xff]
    %v79 = vld [vmem:[#allocation5 + $0x44] sm:$0xff]
    %v80 = vld [vmem:[#allocation5 + $0x4c] sm:$0xf]
    %v81 = vld [vmem:[#allocation5 + $0x50] sm:$0xff]
    %v82 = vld [vmem:[#allocation5 + $0x58] sm:$0xff]
    %v83 = vld [vmem:[#allocation5 + $0x60] sm:$0xf]
    %v84 = vld [vmem:[#allocation5 + $0x64] sm:$0xff]
    %v85 = vld [vmem:[#allocation5 + $0x6c] sm:$0xff]
    %v86 = vld [vmem:[#allocation5 + $0x74] sm:$0xf]
    %v87 = vld [vmem:[#allocation5 + $0x78] sm:$0xff]
    %v88 = vld [vmem:[#allocation5 + $0x80] sm:$0xff]
    %v89 = vld [vmem:[#allocation5 + $0x88] sm:$0xf]
    %v90 = vld [vmem:[#allocation5 + $0x8c] sm:$0xff]
    %v91 = vld [vmem:[#allocation5 + $0x94] sm:$0xff]
    %v92 = vld [vmem:[#allocation5 + $0x9c] sm:$0xf]
    %v93 = vld [vmem:[#allocation5 + $0xa0] sm:$0xff]
    %v94 = vld [vmem:[#allocation5 + $0xa8] sm:$0xff]
    %v95 = vld [vmem:[#allocation5 + $0xb0] sm:$0xf]
    %v96 = vld [vmem:[#allocation5 + $0xb4] sm:$0xff]
    %v97 = vld [vmem:[#allocation5 + $0xbc] sm:$0xff]
    %v98 = vld [vmem:[#allocation5 + $0xc4] sm:$0xf]
    %v99 = vld [vmem:[#allocation5 + $0xc8] sm:$0xff]
    %v100 = vld [vmem:[#allocation5 + $0xd0] sm:$0xff]
    %v101 = vld [vmem:[#allocation5 + $0xd8] sm:$0xf]
    %v102 = vld [vmem:[#allocation5 + $0xdc] sm:$0xff]
    %v103 = vld [vmem:[#allocation5 + $0xe4] sm:$0xff]
    %v104 = vld [vmem:[#allocation5 + $0xec] sm:$0xf]
    %v105 = vld [vmem:[#allocation5 + $0xf0] sm:$0xff]
    %v106 = vld [vmem:[#allocation5 + $0xf8] sm:$0xff]
    %v107 = vld [vmem:[#allocation5 + $0x100] sm:$0xf]
    %v108 = vld [vmem:[#allocation5 + $0x104] sm:$0xff]
    %v109 = vld [vmem:[#allocation5 + $0x10c] sm:$0xff]
    %v110 = vld [vmem:[#allocation5 + $0x114] sm:$0xf]
    %v111 = vld [vmem:[#allocation5 + $0x118] sm:$0xff]
    %v112 = vld [vmem:[#allocation5 + $0x120] sm:$0xff]
    %v113 = vld [vmem:[#allocation5 + $0x128] sm:$0xf]
    %v114 = vld [vmem:[#allocation5 + $0x12c] sm:$0xff]
    %v115 = vld [vmem:[#allocation5 + $0x134] sm:$0xff]
    %v116 = vld [vmem:[#allocation5 + $0x13c] sm:$0xf]
    %v117 = vld [vmem:[#allocation5 + $0x140] sm:$0xff]
    %v118 = vld [vmem:[#allocation5 + $0x148] sm:$0xff]
    %v119 = vld [vmem:[#allocation5 + $0x150] sm:$0xf]
    %v120 = vld [vmem:[#allocation5 + $0x154] sm:$0xff]
    %v121 = vld [vmem:[#allocation5 + $0x15c] sm:$0xff]
    %v122 = vld [vmem:[#allocation5 + $0x164] sm:$0xf]
    %v123 = vld [vmem:[#allocation5 + $0x168] sm:$0xff]
    %v124 = vld [vmem:[#allocation5 + $0x170] sm:$0xff]
    %v125 = vld [vmem:[#allocation5 + $0x178] sm:$0xf]
    %v126 = vld [vmem:[#allocation5 + $0x17c] sm:$0xff]
    %v127 = vld [vmem:[#allocation5 + $0x184] sm:$0xff]
    %v128 = vld [vmem:[#allocation5 + $0x18c] sm:$0xf]
    %v129 = vld [vmem:[#allocation5 + $0x190] sm:$0xff]
    %v130 = vld [vmem:[#allocation5 + $0x198] sm:$0xff]
    %v131 = vld [vmem:[#allocation5 + $0x1a0] sm:$0xf]
    %v132 = vld [vmem:[#allocation5 + $0x1a4] sm:$0xff]
    %v133 = vld [vmem:[#allocation5 + $0x1ac] sm:$0xff]
    %v134 = vld [vmem:[#allocation5 + $0x1b4] sm:$0xf]
    %v135 = vld [vmem:[#allocation5 + $0x1b8] sm:$0xff]
    %v136 = vld [vmem:[#allocation5 + $0x1c0] sm:$0xff]
    %v137 = vld [vmem:[#allocation5 + $0x1c8] sm:$0xf]
    %v138 = vld [vmem:[#allocation5 + $0x1cc] sm:$0xff]
    %v139 = vld [vmem:[#allocation5 + $0x1d4] sm:$0xff]
    %v140 = vld [vmem:[#allocation5 + $0x1dc] sm:$0xf]
    %v141 = vld [vmem:[#allocation5 + $0x1e0] sm:$0xff]
    %v142 = vld [vmem:[#allocation5 + $0x1e8] sm:$0xff]
    %v143 = vld [vmem:[#allocation5 + $0x1f0] sm:$0xf]
    %v144 = vld [vmem:[#allocation5 + $0x1f4] sm:$0xff]
    %v145 = vld [vmem:[#allocation5 + $0x1fc] sm:$0xff]
    %v146 = vld [vmem:[#allocation5 + $0x204] sm:$0xf]
    %v147 = vld [vmem:[#allocation5 + $0x208] sm:$0xff]
    %v148 = vld [vmem:[#allocation5 + $0x210] sm:$0xff]
    %v149 = vld [vmem:[#allocation5 + $0x218] sm:$0xf]
    %v150 = vld [vmem:[#allocation5 + $0x21c] sm:$0xff]
    %v151 = vld [vmem:[#allocation5 + $0x224] sm:$0xff]
    %v152 = vld [vmem:[#allocation5 + $0x22c] sm:$0xf]
    %v153 = vld [vmem:[#allocation5 + $0x230] sm:$0xff]
    %v154 = vld [vmem:[#allocation5 + $0x238] sm:$0xff]
    %v155 = vld [vmem:[#allocation5 + $0x240] sm:$0xf]
    %v156 = vld [vmem:[#allocation5 + $0x244] sm:$0xff]
    %v157 = vld [vmem:[#allocation5 + $0x24c] sm:$0xff]
    %v158 = vld [vmem:[#allocation5 + $0x254] sm:$0xf]
    %v159 = vld [vmem:[#allocation5 + $0x258] sm:$0xff]
    %v160 = vld [vmem:[#allocation5 + $0x260] sm:$0xff]
    %v161 = vld [vmem:[#allocation5 + $0x268] sm:$0xf]
    %v162 = vld [vmem:[#allocation5 + $0x26c] sm:$0xff]
    %v163 = vld [vmem:[#allocation5 + $0x274] sm:$0xff]
    %v164 = vld [vmem:[#allocation5 + $0x27c] sm:$0xf]
    %v165 = vld [vmem:[#allocation5 + $0x280] sm:$0xff]
    %v166 = vld [vmem:[#allocation5 + $0x288] sm:$0xff]
    %v167 = vld [vmem:[#allocation5 + $0x290] sm:$0xf]
    %v168 = vld [vmem:[#allocation5 + $0x294] sm:$0xff]
    %v169 = vld [vmem:[#allocation5 + $0x29c] sm:$0xff]
    %v170 = vld [vmem:[#allocation5 + $0x2a4] sm:$0xf]
    %v171 = vld [vmem:[#allocation5 + $0x2a8] sm:$0xff]
    %v172 = vld [vmem:[#allocation5 + $0x2b0] sm:$0xff]
    %v173 = vld [vmem:[#allocation5 + $0x2b8] sm:$0xf]
    %v174 = vld [vmem:[#allocation5 + $0x2bc] sm:$0xff]
    %v175 = vld [vmem:[#allocation5 + $0x2c4] sm:$0xff]
    %v176 = vld [vmem:[#allocation5 + $0x2cc] sm:$0xf]
    %v177 = vld [vmem:[#allocation5 + $0x2d0] sm:$0xff]
    %v178 = vld [vmem:[#allocation5 + $0x2d8] sm:$0xff]
    %v179 = vld [vmem:[#allocation5 + $0x2e0] sm:$0xf]
    %v180 = vld [vmem:[#allocation5 + $0x2e4] sm:$0xff]
    %v181 = vld [vmem:[#allocation5 + $0x2ec] sm:$0xff]
    %v182 = vld [vmem:[#allocation5 + $0x2f4] sm:$0xf]
    %v183 = vld [vmem:[#allocation5 + $0x2f8] sm:$0xff]
    %v184 = vld [vmem:[#allocation5 + $0x300] sm:$0xff]
    %v185 = vld [vmem:[#allocation5 + $0x308] sm:$0xf]
    %v186 = vld [vmem:[#allocation5 + $0x30c] sm:$0xff]
    %v187 = vld [vmem:[#allocation5 + $0x314] sm:$0xff]
    %v188 = vld [vmem:[#allocation5 + $0x31c] sm:$0xf]
    %v189 = vld [vmem:[#allocation5 + $0x320] sm:$0xff]
    %v190 = vld [vmem:[#allocation5 + $0x328] sm:$0xff]
    %v191 = vld [vmem:[#allocation5 + $0x330] sm:$0xf]
    %v192 = vld [vmem:[#allocation5 + $0x334] sm:$0xff]
    %v193 = vld [vmem:[#allocation5 + $0x33c] sm:$0xff]
    %v194 = vld [vmem:[#allocation5 + $0x344] sm:$0xf]
    %v195 = vld [vmem:[#allocation5 + $0x348] sm:$0xff]
    %v196 = vld [vmem:[#allocation5 + $0x350] sm:$0xff]
    %v197 = vld [vmem:[#allocation5 + $0x358] sm:$0xf]
    %v198 = vld [vmem:[#allocation5 + $0x35c] sm:$0xff]
    %v199 = vld [vmem:[#allocation5 + $0x364] sm:$0xff]
    %v200 = vld [vmem:[#allocation5 + $0x36c] sm:$0xf]
    %v201 = vld [vmem:[#allocation5 + $0x370] sm:$0xff]
    %v202 = vld [vmem:[#allocation5 + $0x378] sm:$0xff]
    %v203 = vld [vmem:[#allocation5 + $0x380] sm:$0xf]
    %v204 = vld [vmem:[#allocation5 + $0x384] sm:$0xff]
    %v205 = vld [vmem:[#allocation5 + $0x38c] sm:$0xff]
    %v206 = vld [vmem:[#allocation5 + $0x394] sm:$0xf]
    %v207 = vld [vmem:[#allocation5 + $0x398] sm:$0xff]
    %v208 = vld [vmem:[#allocation5 + $0x3a0] sm:$0xff]
    %v209 = vld [vmem:[#allocation5 + $0x3a8] sm:$0xf]
    %v210 = vld [vmem:[#allocation5 + $0x3ac] sm:$0xff]
    %v211 = vld [vmem:[#allocation5 + $0x3b4] sm:$0xff]
    %v212 = vld [vmem:[#allocation5 + $0x3bc] sm:$0xf]
    %v213 = vld [vmem:[#allocation5 + $0x3c0] sm:$0xff]
    %v214 = vld [vmem:[#allocation5 + $0x3c8] sm:$0xff]
    %v215 = vld [vmem:[#allocation5 + $0x3d0] sm:$0xf]
    %v216 = vld [vmem:[#allocation5 + $0x3d4] sm:$0xff]
    %v217 = vld [vmem:[#allocation5 + $0x3dc] sm:$0xff]
    %v218 = vld [vmem:[#allocation5 + $0x3e4] sm:$0xf]
    %v219 = vld [vmem:[#allocation5 + $0x3e8] sm:$0xff]
    %v220 = vld [vmem:[#allocation5 + $0x3f0] sm:$0xff]
    %v221 = vld [vmem:[#allocation5 + $0x3f8] sm:$0xf]
    %v222 = vld [vmem:[#allocation5 + $0x3fc] sm:$0xff]
    %v223 = vld [vmem:[#allocation5 + $0x404] sm:$0xff]
    %v224 = vld [vmem:[#allocation5 + $0x40c] sm:$0xf]
    %v225 = vld [vmem:[#allocation5 + $0x410] sm:$0xff]
    %v226 = vld [vmem:[#allocation5 + $0x418] sm:$0xff]
    %v227 = vld [vmem:[#allocation5 + $0x420] sm:$0xf]
    %v228 = vld [vmem:[#allocation5 + $0x424] sm:$0xff]
    %v229 = vld [vmem:[#allocation5 + $0x42c] sm:$0xff]
    %v230 = vld [vmem:[#allocation5 + $0x434] sm:$0xf]
    %v231 = vld [vmem:[#allocation5 + $0x438] sm:$0xff]
    %v232 = vld [vmem:[#allocation5 + $0x440] sm:$0xff]
    %v233 = vld [vmem:[#allocation5 + $0x448] sm:$0xf]
    %v234 = vld [vmem:[#allocation5 + $0x44c] sm:$0xff]
    %v235 = vld [vmem:[#allocation5 + $0x454] sm:$0xff]
    %v236 = vld [vmem:[#allocation5 + $0x45c] sm:$0xf]
    %v237 = vld [vmem:[#allocation5 + $0x460] sm:$0xff]
    %v238 = vld [vmem:[#allocation5 + $0x468] sm:$0xff]
    %v239 = vld [vmem:[#allocation5 + $0x470] sm:$0xf]
    %v240 = vld [vmem:[#allocation5 + $0x474] sm:$0xff]
    %v241 = vld [vmem:[#allocation5 + $0x47c] sm:$0xff]
    %v242 = vld [vmem:[#allocation5 + $0x484] sm:$0xf]
    %v243 = vld [vmem:[#allocation5 + $0x488] sm:$0xff]
    %v244 = vld [vmem:[#allocation5 + $0x490] sm:$0xff]
    %v245 = vld [vmem:[#allocation5 + $0x498] sm:$0xf]
    %v246 = vld [vmem:[#allocation5 + $0x49c] sm:$0xff]
    %v247 = vld [vmem:[#allocation5 + $0x4a4] sm:$0xff]
    %v248 = vld [vmem:[#allocation5 + $0x4ac] sm:$0xf]
    %v249 = vld [vmem:[#allocation5 + $0x4b0] sm:$0xff]
    %v250 = vld [vmem:[#allocation5 + $0x4b8] sm:$0xff]
    %v251 = vld [vmem:[#allocation5 + $0x4c0] sm:$0xf]
    %v252 = vld [vmem:[#allocation5 + $0x4c4] sm:$0xff]
    %v253 = vld [vmem:[#allocation5 + $0x4cc] sm:$0xff]
    %v254 = vld [vmem:[#allocation5 + $0x4d4] sm:$0xf]
    %v255 = vld [vmem:[#allocation5 + $0x4d8] sm:$0xff]
    %v256 = vld [vmem:[#allocation5 + $0x4e0] sm:$0xff]
    %v257 = vld [vmem:[#allocation5 + $0x4e8] sm:$0xf]
    %v258 = vld [vmem:[#allocation5 + $0x4ec] sm:$0xff]
    %v259 = vld [vmem:[#allocation5 + $0x4f4] sm:$0xff]
    %v260 = vld [vmem:[#allocation5 + $0x4fc] sm:$0xf]
    %v261 = vld [vmem:[#allocation2] sm:$0xf]
    %v262 = vld [vmem:[#allocation2 + $0x4] sm:$0xf]
    %v263 = vld [vmem:[#allocation2 + $0x8] sm:$0xf]
    %v264 = vld [vmem:[#allocation2 + $0xc] sm:$0xf]
    %v265 = vld [vmem:[#allocation2 + $0x10] sm:$0xf]
    %v266 = vld [vmem:[#allocation2 + $0x14] sm:$0xf]
    %v267 = vld [vmem:[#allocation2 + $0x18] sm:$0xf]
    %v268 = vld [vmem:[#allocation2 + $0x1c] sm:$0xf]
    %v269 = vld [vmem:[#allocation2 + $0x20] sm:$0xf]
    %v270 = vld [vmem:[#allocation2 + $0x24] sm:$0xf]
    %v271 = vld [vmem:[#allocation2 + $0x28] sm:$0xf]
    %v272 = vld [vmem:[#allocation2 + $0x2c] sm:$0xf]
    %v273 = vld [vmem:[#allocation2 + $0x30] sm:$0xf]
    %v274 = vld [vmem:[#allocation2 + $0x34] sm:$0xf]
    %v275 = vld [vmem:[#allocation2 + $0x38] sm:$0xf]
    %v276 = vld [vmem:[#allocation2 + $0x3c] sm:$0xf]
    %v277 = vld [vmem:[#allocation2 + $0x40] sm:$0xf]
    %v278 = vld [vmem:[#allocation2 + $0x44] sm:$0xf]
    %v279 = vld [vmem:[#allocation2 + $0x48] sm:$0xf]
    %v280 = vld [vmem:[#allocation2 + $0x4c] sm:$0xf]
    %v281 = vld [vmem:[#allocation2 + $0x50] sm:$0xf]
    %v282 = vld [vmem:[#allocation2 + $0x54] sm:$0xf]
    %v283 = vld [vmem:[#allocation2 + $0x58] sm:$0xf]
    %v284 = vld [vmem:[#allocation2 + $0x5c] sm:$0xf]
    %v285 = vld [vmem:[#allocation2 + $0x60] sm:$0xf]
    %v286 = vld [vmem:[#allocation2 + $0x64] sm:$0xf]
    %v287 = vld [vmem:[#allocation2 + $0x68] sm:$0xf]
    %v288 = vld [vmem:[#allocation2 + $0x6c] sm:$0xf]
    %v289 = vld [vmem:[#allocation2 + $0x70] sm:$0xf]
    %v290 = vld [vmem:[#allocation2 + $0x74] sm:$0xf]
    %v291 = vld [vmem:[#allocation2 + $0x78] sm:$0xf]
    %v292 = vld [vmem:[#allocation2 + $0x7c] sm:$0xf]
    %v293 = vld [vmem:[#allocation2 + $0x80] sm:$0xf]
    %v294 = vld [vmem:[#allocation2 + $0x84] sm:$0xf]
    %v295 = vld [vmem:[#allocation2 + $0x88] sm:$0xf]
    %v296 = vld [vmem:[#allocation2 + $0x8c] sm:$0xf]
    %v297 = vld [vmem:[#allocation2 + $0x90] sm:$0xf]
    %v298 = vld [vmem:[#allocation2 + $0x94] sm:$0xf]
    %v299 = vld [vmem:[#allocation2 + $0x98] sm:$0xf]
    %v300 = vld [vmem:[#allocation2 + $0x9c] sm:$0xf]
    %v301 = vld [vmem:[#allocation2 + $0xa0] sm:$0xf]
    %v302 = vld [vmem:[#allocation2 + $0xa4] sm:$0xf]
    %v303 = vld [vmem:[#allocation2 + $0xa8] sm:$0xf]
    %v304 = vld [vmem:[#allocation2 + $0xac] sm:$0xf]
    %v305 = vld [vmem:[#allocation2 + $0xb0] sm:$0xf]
    %v306 = vld [vmem:[#allocation2 + $0xb4] sm:$0xf]
    %v307 = vld [vmem:[#allocation2 + $0xb8] sm:$0xf]
    %v308 = vld [vmem:[#allocation2 + $0xbc] sm:$0xf]
    %v309 = vld [vmem:[#allocation2 + $0xc0] sm:$0xf]
    %v310 = vld [vmem:[#allocation2 + $0xc4] sm:$0xf]
    %v311 = vld [vmem:[#allocation2 + $0xc8] sm:$0xf]
    %v312 = vld [vmem:[#allocation2 + $0xcc] sm:$0xf]
    %v313 = vld [vmem:[#allocation2 + $0xd0] sm:$0xf]
    %v314 = vld [vmem:[#allocation2 + $0xd4] sm:$0xf]
    %v315 = vld [vmem:[#allocation2 + $0xd8] sm:$0xf]
    %v316 = vld [vmem:[#allocation2 + $0xdc] sm:$0xf]
    %v317 = vld [vmem:[#allocation2 + $0xe0] sm:$0xf]
    %v318 = vld [vmem:[#allocation2 + $0xe4] sm:$0xf]
    %v319 = vld [vmem:[#allocation2 + $0xe8] sm:$0xf]
    %v320 = vld [vmem:[#allocation2 + $0xec] sm:$0xf]
    %v321 = vld [vmem:[#allocation2 + $0xf0] sm:$0xf]
    %v322 = vld [vmem:[#allocation2 + $0xf4] sm:$0xf]
    %v323 = vld [vmem:[#allocation2 + $0xf8] sm:$0xf]
    %v324 = vld [vmem:[#allocation2 + $0xfc] sm:$0xf]
    %v325 = vld [vmem:[#allocation2 + $0x100] sm:$0xf]
    %v326 = vld [vmem:[#allocation2 + $0x104] sm:$0xf]
    %v327 = vld [vmem:[#allocation2 + $0x108] sm:$0xf]
    %v328 = vld [vmem:[#allocation2 + $0x10c] sm:$0xf]
    %v329 = vld [vmem:[#allocation2 + $0x110] sm:$0xf]
    %v330 = vld [vmem:[#allocation2 + $0x114] sm:$0xf]
    %v331 = vld [vmem:[#allocation2 + $0x118] sm:$0xf]
    %v332 = vld [vmem:[#allocation2 + $0x11c] sm:$0xf]
    %v333 = vld [vmem:[#allocation2 + $0x120] sm:$0xf]
    %v334 = vld [vmem:[#allocation2 + $0x124] sm:$0xf]
    %v335 = vld [vmem:[#allocation2 + $0x128] sm:$0xf]
    %v336 = vld [vmem:[#allocation2 + $0x12c] sm:$0xf]
    %v337 = vld [vmem:[#allocation2 + $0x130] sm:$0xf]
    %v338 = vld [vmem:[#allocation2 + $0x134] sm:$0xf]
    %v339 = vld [vmem:[#allocation2 + $0x138] sm:$0xf]
    %v340 = vld [vmem:[#allocation2 + $0x13c] sm:$0xf]
    %v533 = vunpack.c.l.b16 %v69
    %v534 = vunpack.c.h.b16 %v69
    %v535 = vunpack.c.l.b16 %v70
    %v536 = vunpack.c.h.b16 %v70
    %v537 = vunpack.c.l.b16 %v71
    %v538 = vunpack.c.l.b16 %v72
    %v539 = vunpack.c.h.b16 %v72
    %v540 = vunpack.c.l.b16 %v73
    %v541 = vunpack.c.h.b16 %v73
    %v542 = vunpack.c.l.b16 %v74
    %v543 = vunpack.c.l.b16 %v75
    %v544 = vunpack.c.h.b16 %v75
    %v545 = vunpack.c.l.b16 %v76
    %v546 = vunpack.c.h.b16 %v76
    %v547 = vunpack.c.l.b16 %v77
    %v548 = vunpack.c.l.b16 %v78
    %v549 = vunpack.c.h.b16 %v78
    %v550 = vunpack.c.l.b16 %v79
    %v551 = vunpack.c.h.b16 %v79
    %v552 = vunpack.c.l.b16 %v80
    %v553 = vunpack.c.l.b16 %v81
    %v554 = vunpack.c.h.b16 %v81
    %v555 = vunpack.c.l.b16 %v82
    %v556 = vunpack.c.h.b16 %v82
    %v557 = vunpack.c.l.b16 %v83
    %v558 = vunpack.c.l.b16 %v84
    %v559 = vunpack.c.h.b16 %v84
    %v560 = vunpack.c.l.b16 %v85
    %v561 = vunpack.c.h.b16 %v85
    %v562 = vunpack.c.l.b16 %v86
    %v563 = vunpack.c.l.b16 %v87
    %v564 = vunpack.c.h.b16 %v87
    %v565 = vunpack.c.l.b16 %v88
    %v566 = vunpack.c.h.b16 %v88
    %v567 = vunpack.c.l.b16 %v89
    %v568 = vunpack.c.l.b16 %v90
    %v569 = vunpack.c.h.b16 %v90
    %v570 = vunpack.c.l.b16 %v91
    %v571 = vunpack.c.h.b16 %v91
    %v572 = vunpack.c.l.b16 %v92
    %v573 = vunpack.c.l.b16 %v93
    %v574 = vunpack.c.h.b16 %v93
    %v575 = vunpack.c.l.b16 %v94
    %v576 = vunpack.c.h.b16 %v94
    %v577 = vunpack.c.l.b16 %v95
    %v578 = vunpack.c.l.b16 %v96
    %v579 = vunpack.c.h.b16 %v96
    %v580 = vunpack.c.l.b16 %v97
    %v581 = vunpack.c.h.b16 %v97
    %v582 = vunpack.c.l.b16 %v98
    %v583 = vunpack.c.l.b16 %v99
    %v584 = vunpack.c.h.b16 %v99
    %v585 = vunpack.c.l.b16 %v100
    %v586 = vunpack.c.h.b16 %v100
    %v587 = vunpack.c.l.b16 %v101
    %v588 = vunpack.c.l.b16 %v102
    %v589 = vunpack.c.h.b16 %v102
    %v590 = vunpack.c.l.b16 %v103
    %v591 = vunpack.c.h.b16 %v103
    %v592 = vunpack.c.l.b16 %v104
    %v593 = vunpack.c.l.b16 %v105
    %v594 = vunpack.c.h.b16 %v105
    %v595 = vunpack.c.l.b16 %v106
    %v596 = vunpack.c.h.b16 %v106
    %v597 = vunpack.c.l.b16 %v107
    %v598 = vunpack.c.l.b16 %v108
    %v599 = vunpack.c.h.b16 %v108
    %v600 = vunpack.c.l.b16 %v109
    %v601 = vunpack.c.h.b16 %v109
    %v602 = vunpack.c.l.b16 %v110
    %v603 = vunpack.c.l.b16 %v111
    %v604 = vunpack.c.h.b16 %v111
    %v605 = vunpack.c.l.b16 %v112
    %v606 = vunpack.c.h.b16 %v112
    %v607 = vunpack.c.l.b16 %v113
    %v608 = vunpack.c.l.b16 %v114
    %v609 = vunpack.c.h.b16 %v114
    %v610 = vunpack.c.l.b16 %v115
    %v611 = vunpack.c.h.b16 %v115
    %v612 = vunpack.c.l.b16 %v116
    %v613 = vunpack.c.l.b16 %v117
    %v614 = vunpack.c.h.b16 %v117
    %v615 = vunpack.c.l.b16 %v118
    %v616 = vunpack.c.h.b16 %v118
    %v617 = vunpack.c.l.b16 %v119
    %v618 = vunpack.c.l.b16 %v120
    %v619 = vunpack.c.h.b16 %v120
    %v620 = vunpack.c.l.b16 %v121
    %v621 = vunpack.c.h.b16 %v121
    %v622 = vunpack.c.l.b16 %v122
    %v623 = vunpack.c.l.b16 %v123
    %v624 = vunpack.c.h.b16 %v123
    %v625 = vunpack.c.l.b16 %v124
    %v626 = vunpack.c.h.b16 %v124
    %v627 = vunpack.c.l.b16 %v125
    %v628 = vunpack.c.l.b16 %v126
    %v629 = vunpack.c.h.b16 %v126
    %v630 = vunpack.c.l.b16 %v127
    %v631 = vunpack.c.h.b16 %v127
    %v632 = vunpack.c.l.b16 %v128
    %v633 = vunpack.c.l.b16 %v129
    %v634 = vunpack.c.h.b16 %v129
    %v635 = vunpack.c.l.b16 %v130
    %v636 = vunpack.c.h.b16 %v130
    %v637 = vunpack.c.l.b16 %v131
    %v638 = vunpack.c.l.b16 %v132
    %v639 = vunpack.c.h.b16 %v132
    %v640 = vunpack.c.l.b16 %v133
    %v641 = vunpack.c.h.b16 %v133
    %v642 = vunpack.c.l.b16 %v134
    %v643 = vunpack.c.l.b16 %v135
    %v644 = vunpack.c.h.b16 %v135
    %v645 = vunpack.c.l.b16 %v136
    %v646 = vunpack.c.h.b16 %v136
    %v647 = vunpack.c.l.b16 %v137
    %v648 = vunpack.c.l.b16 %v138
    %v649 = vunpack.c.h.b16 %v138
    %v650 = vunpack.c.l.b16 %v139
    %v651 = vunpack.c.h.b16 %v139
    %v652 = vunpack.c.l.b16 %v140
    %v653 = vunpack.c.l.b16 %v141
    %v654 = vunpack.c.h.b16 %v141
    %v655 = vunpack.c.l.b16 %v142
    %v656 = vunpack.c.h.b16 %v142
    %v657 = vunpack.c.l.b16 %v143
    %v658 = vunpack.c.l.b16 %v144
    %v659 = vunpack.c.h.b16 %v144
    %v660 = vunpack.c.l.b16 %v145
    %v661 = vunpack.c.h.b16 %v145
    %v662 = vunpack.c.l.b16 %v146
    %v663 = vunpack.c.l.b16 %v147
    %v664 = vunpack.c.h.b16 %v147
    %v665 = vunpack.c.l.b16 %v148
    %v666 = vunpack.c.h.b16 %v148
    %v667 = vunpack.c.l.b16 %v149
    %v668 = vunpack.c.l.b16 %v150
    %v669 = vunpack.c.h.b16 %v150
    %v670 = vunpack.c.l.b16 %v151
    %v671 = vunpack.c.h.b16 %v151
    %v672 = vunpack.c.l.b16 %v152
    %v673 = vunpack.c.l.b16 %v153
    %v674 = vunpack.c.h.b16 %v153
    %v675 = vunpack.c.l.b16 %v154
    %v676 = vunpack.c.h.b16 %v154
    %v677 = vunpack.c.l.b16 %v155
    %v678 = vunpack.c.l.b16 %v156
    %v679 = vunpack.c.h.b16 %v156
    %v680 = vunpack.c.l.b16 %v157
    %v681 = vunpack.c.h.b16 %v157
    %v682 = vunpack.c.l.b16 %v158
    %v683 = vunpack.c.l.b16 %v159
    %v684 = vunpack.c.h.b16 %v159
    %v685 = vunpack.c.l.b16 %v160
    %v686 = vunpack.c.h.b16 %v160
    %v687 = vunpack.c.l.b16 %v161
    %v688 = vunpack.c.l.b16 %v162
    %v689 = vunpack.c.h.b16 %v162
    %v690 = vunpack.c.l.b16 %v163
    %v691 = vunpack.c.h.b16 %v163
    %v692 = vunpack.c.l.b16 %v164
    %v693 = vunpack.c.l.b16 %v165
    %v694 = vunpack.c.h.b16 %v165
    %v695 = vunpack.c.l.b16 %v166
    %v696 = vunpack.c.h.b16 %v166
    %v697 = vunpack.c.l.b16 %v167
    %v698 = vunpack.c.l.b16 %v168
    %v699 = vunpack.c.h.b16 %v168
    %v700 = vunpack.c.l.b16 %v169
    %v701 = vunpack.c.h.b16 %v169
    %v702 = vunpack.c.l.b16 %v170
    %v703 = vunpack.c.l.b16 %v171
    %v704 = vunpack.c.h.b16 %v171
    %v705 = vunpack.c.l.b16 %v172
    %v706 = vunpack.c.h.b16 %v172
    %v707 = vunpack.c.l.b16 %v173
    %v708 = vunpack.c.l.b16 %v174
    %v709 = vunpack.c.h.b16 %v174
    %v710 = vunpack.c.l.b16 %v175
    %v711 = vunpack.c.h.b16 %v175
    %v712 = vunpack.c.l.b16 %v176
    %v713 = vunpack.c.l.b16 %v177
    %v714 = vunpack.c.h.b16 %v177
    %v715 = vunpack.c.l.b16 %v178
    %v716 = vunpack.c.h.b16 %v178
    %v717 = vunpack.c.l.b16 %v179
    %v718 = vunpack.c.l.b16 %v180
    %v719 = vunpack.c.h.b16 %v180
    %v720 = vunpack.c.l.b16 %v181
    %v721 = vunpack.c.h.b16 %v181
    %v722 = vunpack.c.l.b16 %v182
    %v723 = vunpack.c.l.b16 %v183
    %v724 = vunpack.c.h.b16 %v183
    %v725 = vunpack.c.l.b16 %v184
    %v726 = vunpack.c.h.b16 %v184
    %v727 = vunpack.c.l.b16 %v185
    %v728 = vunpack.c.l.b16 %v186
    %v729 = vunpack.c.h.b16 %v186
    %v730 = vunpack.c.l.b16 %v187
    %v731 = vunpack.c.h.b16 %v187
    %v732 = vunpack.c.l.b16 %v188
    %v733 = vunpack.c.l.b16 %v189
    %v734 = vunpack.c.h.b16 %v189
    %v735 = vunpack.c.l.b16 %v190
    %v736 = vunpack.c.h.b16 %v190
    %v737 = vunpack.c.l.b16 %v191
    %v738 = vunpack.c.l.b16 %v192
    %v739 = vunpack.c.h.b16 %v192
    %v740 = vunpack.c.l.b16 %v193
    %v741 = vunpack.c.h.b16 %v193
    %v742 = vunpack.c.l.b16 %v194
    %v743 = vunpack.c.l.b16 %v195
    %v744 = vunpack.c.h.b16 %v195
    %v745 = vunpack.c.l.b16 %v196
    %v746 = vunpack.c.h.b16 %v196
    %v747 = vunpack.c.l.b16 %v197
    %v748 = vunpack.c.l.b16 %v198
    %v749 = vunpack.c.h.b16 %v198
    %v750 = vunpack.c.l.b16 %v199
    %v751 = vunpack.c.h.b16 %v199
    %v752 = vunpack.c.l.b16 %v200
    %v753 = vunpack.c.l.b16 %v201
    %v754 = vunpack.c.h.b16 %v201
    %v755 = vunpack.c.l.b16 %v202
    %v756 = vunpack.c.h.b16 %v202
    %v757 = vunpack.c.l.b16 %v203
    %v758 = vunpack.c.l.b16 %v204
    %v759 = vunpack.c.h.b16 %v204
    %v760 = vunpack.c.l.b16 %v205
    %v761 = vunpack.c.h.b16 %v205
    %v762 = vunpack.c.l.b16 %v206
    %v763 = vunpack.c.l.b16 %v207
    %v764 = vunpack.c.h.b16 %v207
    %v765 = vunpack.c.l.b16 %v208
    %v766 = vunpack.c.h.b16 %v208
    %v767 = vunpack.c.l.b16 %v209
    %v768 = vunpack.c.l.b16 %v210
    %v769 = vunpack.c.h.b16 %v210
    %v770 = vunpack.c.l.b16 %v211
    %v771 = vunpack.c.h.b16 %v211
    %v772 = vunpack.c.l.b16 %v212
    %v773 = vunpack.c.l.b16 %v213
    %v774 = vunpack.c.h.b16 %v213
    %v775 = vunpack.c.l.b16 %v214
    %v776 = vunpack.c.h.b16 %v214
    %v777 = vunpack.c.l.b16 %v215
    %v778 = vunpack.c.l.b16 %v216
    %v779 = vunpack.c.h.b16 %v216
    %v780 = vunpack.c.l.b16 %v217
    %v781 = vunpack.c.h.b16 %v217
    %v782 = vunpack.c.l.b16 %v218
    %v783 = vunpack.c.l.b16 %v219
    %v784 = vunpack.c.h.b16 %v219
    %v785 = vunpack.c.l.b16 %v220
    %v786 = vunpack.c.h.b16 %v220
    %v787 = vunpack.c.l.b16 %v221
    %v788 = vunpack.c.l.b16 %v222
    %v789 = vunpack.c.h.b16 %v222
    %v790 = vunpack.c.l.b16 %v223
    %v791 = vunpack.c.h.b16 %v223
    %v792 = vunpack.c.l.b16 %v224
    %v793 = vunpack.c.l.b16 %v225
    %v794 = vunpack.c.h.b16 %v225
    %v795 = vunpack.c.l.b16 %v226
    %v796 = vunpack.c.h.b16 %v226
    %v797 = vunpack.c.l.b16 %v227
    %v798 = vunpack.c.l.b16 %v228
    %v799 = vunpack.c.h.b16 %v228
    %v800 = vunpack.c.l.b16 %v229
    %v801 = vunpack.c.h.b16 %v229
    %v802 = vunpack.c.l.b16 %v230
    %v803 = vunpack.c.l.b16 %v231
    %v804 = vunpack.c.h.b16 %v231
    %v805 = vunpack.c.l.b16 %v232
    %v806 = vunpack.c.h.b16 %v232
    %v807 = vunpack.c.l.b16 %v233
    %v808 = vunpack.c.l.b16 %v234
    %v809 = vunpack.c.h.b16 %v234
    %v810 = vunpack.c.l.b16 %v235
    %v811 = vunpack.c.h.b16 %v235
    %v812 = vunpack.c.l.b16 %v236
    %v813 = vunpack.c.l.b16 %v237
    %v814 = vunpack.c.h.b16 %v237
    %v815 = vunpack.c.l.b16 %v238
    %v816 = vunpack.c.h.b16 %v238
    %v817 = vunpack.c.l.b16 %v239
    %v818 = vunpack.c.l.b16 %v240
    %v819 = vunpack.c.h.b16 %v240
    %v820 = vunpack.c.l.b16 %v241
    %v821 = vunpack.c.h.b16 %v241
    %v822 = vunpack.c.l.b16 %v242
    %v823 = vunpack.c.l.b16 %v243
    %v824 = vunpack.c.h.b16 %v243
    %v825 = vunpack.c.l.b16 %v244
    %v826 = vunpack.c.h.b16 %v244
    %v827 = vunpack.c.l.b16 %v245
    %v828 = vunpack.c.l.b16 %v246
    %v829 = vunpack.c.h.b16 %v246
    %v830 = vunpack.c.l.b16 %v247
    %v831 = vunpack.c.h.b16 %v247
    %v832 = vunpack.c.l.b16 %v248
    %v833 = vunpack.c.l.b16 %v249
    %v834 = vunpack.c.h.b16 %v249
    %v835 = vunpack.c.l.b16 %v250
    %v836 = vunpack.c.h.b16 %v250
    %v837 = vunpack.c.l.b16 %v251
    %v838 = vunpack.c.l.b16 %v252
    %v839 = vunpack.c.h.b16 %v252
    %v840 = vunpack.c.l.b16 %v253
    %v841 = vunpack.c.h.b16 %v253
    %v842 = vunpack.c.l.b16 %v254
    %v843 = vunpack.c.l.b16 %v255
    %v844 = vunpack.c.h.b16 %v255
    %v845 = vunpack.c.l.b16 %v256
    %v846 = vunpack.c.h.b16 %v256
    %v847 = vunpack.c.l.b16 %v257
    %v848 = vunpack.c.l.b16 %v258
    %v849 = vunpack.c.h.b16 %v258
    %v850 = vunpack.c.l.b16 %v259
    %v851 = vunpack.c.h.b16 %v259
    %v852 = vunpack.c.l.b16 %v260
    %v853 = vpack.c.b16 %v538, %v533
    %v854 = vpack.c.b16 %v539, %v534
    %v855 = vpack.c.b16 %v540, %v535
    %v856 = vpack.c.b16 %v541, %v536
    %v857 = vpack.c.b16 %v542, %v537
    %v858 = vpack.c.b16 %v548, %v543
    %v859 = vpack.c.b16 %v549, %v544
    %v860 = vpack.c.b16 %v550, %v545
    %v861 = vpack.c.b16 %v551, %v546
    %v862 = vpack.c.b16 %v552, %v547
    %v863 = vpack.c.b16 %v558, %v553
    %v864 = vpack.c.b16 %v559, %v554
    %v865 = vpack.c.b16 %v560, %v555
    %v866 = vpack.c.b16 %v561, %v556
    %v867 = vpack.c.b16 %v562, %v557
    %v868 = vpack.c.b16 %v568, %v563
    %v869 = vpack.c.b16 %v569, %v564
    %v870 = vpack.c.b16 %v570, %v565
    %v871 = vpack.c.b16 %v571, %v566
    %v872 = vpack.c.b16 %v572, %v567
    %v873 = vpack.c.b16 %v578, %v573
    %v874 = vpack.c.b16 %v579, %v574
    %v875 = vpack.c.b16 %v580, %v575
    %v876 = vpack.c.b16 %v581, %v576
    %v877 = vpack.c.b16 %v582, %v577
    %v878 = vpack.c.b16 %v588, %v583
    %v879 = vpack.c.b16 %v589, %v584
    %v880 = vpack.c.b16 %v590, %v585
    %v881 = vpack.c.b16 %v591, %v586
    %v882 = vpack.c.b16 %v592, %v587
    %v883 = vpack.c.b16 %v598, %v593
    %v884 = vpack.c.b16 %v599, %v594
    %v885 = vpack.c.b16 %v600, %v595
    %v886 = vpack.c.b16 %v601, %v596
    %v887 = vpack.c.b16 %v602, %v597
    %v888 = vpack.c.b16 %v608, %v603
    %v889 = vpack.c.b16 %v609, %v604
    %v890 = vpack.c.b16 %v610, %v605
    %v891 = vpack.c.b16 %v611, %v606
    %v892 = vpack.c.b16 %v612, %v607
    %v893 = vpack.c.b16 %v618, %v613
    %v894 = vpack.c.b16 %v619, %v614
    %v895 = vpack.c.b16 %v620, %v615
    %v896 = vpack.c.b16 %v621, %v616
    %v897 = vpack.c.b16 %v622, %v617
    %v898 = vpack.c.b16 %v628, %v623
    %v899 = vpack.c.b16 %v629, %v624
    %v900 = vpack.c.b16 %v630, %v625
    %v901 = vpack.c.b16 %v631, %v626
    %v902 = vpack.c.b16 %v632, %v627
    %v903 = vpack.c.b16 %v638, %v633
    %v904 = vpack.c.b16 %v639, %v634
    %v905 = vpack.c.b16 %v640, %v635
    %v906 = vpack.c.b16 %v641, %v636
    %v907 = vpack.c.b16 %v642, %v637
    %v908 = vpack.c.b16 %v648, %v643
    %v909 = vpack.c.b16 %v649, %v644
    %v910 = vpack.c.b16 %v650, %v645
    %v911 = vpack.c.b16 %v651, %v646
    %v912 = vpack.c.b16 %v652, %v647
    %v913 = vpack.c.b16 %v658, %v653
    %v914 = vpack.c.b16 %v659, %v654
    %v915 = vpack.c.b16 %v660, %v655
    %v916 = vpack.c.b16 %v661, %v656
    %v917 = vpack.c.b16 %v662, %v657
    %v918 = vpack.c.b16 %v668, %v663
    %v919 = vpack.c.b16 %v669, %v664
    %v920 = vpack.c.b16 %v670, %v665
    %v921 = vpack.c.b16 %v671, %v666
    %v922 = vpack.c.b16 %v672, %v667
    %v923 = vpack.c.b16 %v678, %v673
    %v924 = vpack.c.b16 %v679, %v674
    %v925 = vpack.c.b16 %v680, %v675
    %v926 = vpack.c.b16 %v681, %v676
    %v927 = vpack.c.b16 %v682, %v677
    %v928 = vpack.c.b16 %v688, %v683
    %v929 = vpack.c.b16 %v689, %v684
    %v930 = vpack.c.b16 %v690, %v685
    %v931 = vpack.c.b16 %v691, %v686
    %v932 = vpack.c.b16 %v692, %v687
    %v933 = vpack.c.b16 %v698, %v693
    %v934 = vpack.c.b16 %v699, %v694
    %v935 = vpack.c.b16 %v700, %v695
    %v936 = vpack.c.b16 %v701, %v696
    %v937 = vpack.c.b16 %v702, %v697
    %v938 = vpack.c.b16 %v708, %v703
    %v939 = vpack.c.b16 %v709, %v704
    %v940 = vpack.c.b16 %v710, %v705
    %v941 = vpack.c.b16 %v711, %v706
    %v942 = vpack.c.b16 %v712, %v707
    %v943 = vpack.c.b16 %v718, %v713
    %v944 = vpack.c.b16 %v719, %v714
    %v945 = vpack.c.b16 %v720, %v715
    %v946 = vpack.c.b16 %v721, %v716
    %v947 = vpack.c.b16 %v722, %v717
    %v948 = vpack.c.b16 %v728, %v723
    %v949 = vpack.c.b16 %v729, %v724
    %v950 = vpack.c.b16 %v730, %v725
    %v951 = vpack.c.b16 %v731, %v726
    %v952 = vpack.c.b16 %v732, %v727
    %v953 = vpack.c.b16 %v738, %v733
    %v954 = vpack.c.b16 %v739, %v734
    %v955 = vpack.c.b16 %v740, %v735
    %v956 = vpack.c.b16 %v741, %v736
    %v957 = vpack.c.b16 %v742, %v737
    %v958 = vpack.c.b16 %v748, %v743
    %v959 = vpack.c.b16 %v749, %v744
    %v960 = vpack.c.b16 %v750, %v745
    %v961 = vpack.c.b16 %v751, %v746
    %v962 = vpack.c.b16 %v752, %v747
    %v963 = vpack.c.b16 %v758, %v753
    %v964 = vpack.c.b16 %v759, %v754
    %v965 = vpack.c.b16 %v760, %v755
    %v966 = vpack.c.b16 %v761, %v756
    %v967 = vpack.c.b16 %v762, %v757
    %v968 = vpack.c.b16 %v768, %v763
    %v969 = vpack.c.b16 %v769, %v764
    %v970 = vpack.c.b16 %v770, %v765
    %v971 = vpack.c.b16 %v771, %v766
    %v972 = vpack.c.b16 %v772, %v767
    %v973 = vpack.c.b16 %v778, %v773
    %v974 = vpack.c.b16 %v779, %v774
    %v975 = vpack.c.b16 %v780, %v775
    %v976 = vpack.c.b16 %v781, %v776
    %v977 = vpack.c.b16 %v782, %v777
    %v978 = vpack.c.b16 %v788, %v783
    %v979 = vpack.c.b16 %v789, %v784
    %v980 = vpack.c.b16 %v790, %v785
    %v981 = vpack.c.b16 %v791, %v786
    %v982 = vpack.c.b16 %v792, %v787
    %v983 = vpack.c.b16 %v798, %v793
    %v984 = vpack.c.b16 %v799, %v794
    %v985 = vpack.c.b16 %v800, %v795
    %v986 = vpack.c.b16 %v801, %v796
    %v987 = vpack.c.b16 %v802, %v797
    %v988 = vpack.c.b16 %v808, %v803
    %v989 = vpack.c.b16 %v809, %v804
    %v990 = vpack.c.b16 %v810, %v805
    %v991 = vpack.c.b16 %v811, %v806
    %v992 = vpack.c.b16 %v812, %v807
    %v993 = vpack.c.b16 %v818, %v813
    %v994 = vpack.c.b16 %v819, %v814
    %v995 = vpack.c.b16 %v820, %v815
    %v996 = vpack.c.b16 %v821, %v816
    %v997 = vpack.c.b16 %v822, %v817
    %v998 = vpack.c.b16 %v828, %v823
    %v999 = vpack.c.b16 %v829, %v824
    %v1000 = vpack.c.b16 %v830, %v825
    %v1001 = vpack.c.b16 %v831, %v826
    %v1002 = vpack.c.b16 %v832, %v827
    %v1003 = vpack.c.b16 %v838, %v833
    %v1004 = vpack.c.b16 %v839, %v834
    %v1005 = vpack.c.b16 %v840, %v835
    %v1006 = vpack.c.b16 %v841, %v836
    %v1007 = vpack.c.b16 %v842, %v837
    %v1008 = vpack.c.b16 %v848, %v843
    %v1009 = vpack.c.b16 %v849, %v844
    %v1010 = vpack.c.b16 %v850, %v845
    %v1011 = vpack.c.b16 %v851, %v846
    %v1012 = vpack.c.b16 %v852, %v847
    %v1253 = vunpack.c.l.b16 %v261
    %v1254 = vunpack.c.l.b16 %v262
    %v1255 = vunpack.c.l.b16 %v263
    %v1256 = vunpack.c.l.b16 %v264
    %v1257 = vunpack.c.l.b16 %v265
    %v1258 = vunpack.c.l.b16 %v266
    %v1259 = vunpack.c.l.b16 %v267
    %v1260 = vunpack.c.l.b16 %v268
    %v1261 = vunpack.c.l.b16 %v269
    %v1262 = vunpack.c.l.b16 %v270
    %v1263 = vunpack.c.l.b16 %v271
    %v1264 = vunpack.c.l.b16 %v272
    %v1265 = vunpack.c.l.b16 %v273
    %v1266 = vunpack.c.l.b16 %v274
    %v1267 = vunpack.c.l.b16 %v275
    %v1268 = vunpack.c.l.b16 %v276
    %v1269 = vunpack.c.l.b16 %v277
    %v1270 = vunpack.c.l.b16 %v278
    %v1271 = vunpack.c.l.b16 %v279
    %v1272 = vunpack.c.l.b16 %v280
    %v1273 = vunpack.c.l.b16 %v281
    %v1274 = vunpack.c.l.b16 %v282
    %v1275 = vunpack.c.l.b16 %v283
    %v1276 = vunpack.c.l.b16 %v284
    %v1277 = vunpack.c.l.b16 %v285
    %v1278 = vunpack.c.l.b16 %v286
    %v1279 = vunpack.c.l.b16 %v287
    %v1280 = vunpack.c.l.b16 %v288
    %v1281 = vunpack.c.l.b16 %v289
    %v1282 = vunpack.c.l.b16 %v290
    %v1283 = vunpack.c.l.b16 %v291
    %v1284 = vunpack.c.l.b16 %v292
    %v1285 = vunpack.c.l.b16 %v293
    %v1286 = vunpack.c.l.b16 %v294
    %v1287 = vunpack.c.l.b16 %v295
    %v1288 = vunpack.c.l.b16 %v296
    %v1289 = vunpack.c.l.b16 %v297
    %v1290 = vunpack.c.l.b16 %v298
    %v1291 = vunpack.c.l.b16 %v299
    %v1292 = vunpack.c.l.b16 %v300
    %v1293 = vunpack.c.l.b16 %v301
    %v1294 = vunpack.c.l.b16 %v302
    %v1295 = vunpack.c.l.b16 %v303
    %v1296 = vunpack.c.l.b16 %v304
    %v1297 = vunpack.c.l.b16 %v305
    %v1298 = vunpack.c.l.b16 %v306
    %v1299 = vunpack.c.l.b16 %v307
    %v1300 = vunpack.c.l.b16 %v308
    %v1301 = vunpack.c.l.b16 %v309
    %v1302 = vunpack.c.l.b16 %v310
    %v1303 = vunpack.c.l.b16 %v311
    %v1304 = vunpack.c.l.b16 %v312
    %v1305 = vunpack.c.l.b16 %v313
    %v1306 = vunpack.c.l.b16 %v314
    %v1307 = vunpack.c.l.b16 %v315
    %v1308 = vunpack.c.l.b16 %v316
    %v1309 = vunpack.c.l.b16 %v317
    %v1310 = vunpack.c.l.b16 %v318
    %v1311 = vunpack.c.l.b16 %v319
    %v1312 = vunpack.c.l.b16 %v320
    %v1313 = vunpack.c.l.b16 %v321
    %v1314 = vunpack.c.l.b16 %v322
    %v1315 = vunpack.c.l.b16 %v323
    %v1316 = vunpack.c.l.b16 %v324
    %v1317 = vunpack.c.l.b16 %v325
    %v1318 = vunpack.c.l.b16 %v326
    %v1319 = vunpack.c.l.b16 %v327
    %v1320 = vunpack.c.l.b16 %v328
    %v1321 = vunpack.c.l.b16 %v329
    %v1322 = vunpack.c.l.b16 %v330
    %v1323 = vunpack.c.l.b16 %v331
    %v1324 = vunpack.c.l.b16 %v332
    %v1325 = vunpack.c.l.b16 %v333
    %v1326 = vunpack.c.l.b16 %v334
    %v1327 = vunpack.c.l.b16 %v335
    %v1328 = vunpack.c.l.b16 %v336
    %v1329 = vunpack.c.l.b16 %v337
    %v1330 = vunpack.c.l.b16 %v338
    %v1331 = vunpack.c.l.b16 %v339
    %v1332 = vunpack.c.l.b16 %v340
    %v1333 = vpack.c.b16 %v1254, %v1253
    %v1334 = vpack.c.b16 %v1256, %v1255
    %v1335 = vpack.c.b16 %v1258, %v1257
    %v1336 = vpack.c.b16 %v1260, %v1259
    %v1337 = vpack.c.b16 %v1262, %v1261
    %v1338 = vpack.c.b16 %v1264, %v1263
    %v1339 = vpack.c.b16 %v1266, %v1265
    %v1340 = vpack.c.b16 %v1268, %v1267
    %v1341 = vpack.c.b16 %v1270, %v1269
    %v1342 = vpack.c.b16 %v1272, %v1271
    %v1343 = vpack.c.b16 %v1274, %v1273
    %v1344 = vpack.c.b16 %v1276, %v1275
    %v1345 = vpack.c.b16 %v1278, %v1277
    %v1346 = vpack.c.b16 %v1280, %v1279
    %v1347 = vpack.c.b16 %v1282, %v1281
    %v1348 = vpack.c.b16 %v1284, %v1283
    %v1349 = vpack.c.b16 %v1286, %v1285
    %v1350 = vpack.c.b16 %v1288, %v1287
    %v1351 = vpack.c.b16 %v1290, %v1289
    %v1352 = vpack.c.b16 %v1292, %v1291
    %v1353 = vpack.c.b16 %v1294, %v1293
    %v1354 = vpack.c.b16 %v1296, %v1295
    %v1355 = vpack.c.b16 %v1298, %v1297
    %v1356 = vpack.c.b16 %v1300, %v1299
    %v1357 = vpack.c.b16 %v1302, %v1301
    %v1358 = vpack.c.b16 %v1304, %v1303
    %v1359 = vpack.c.b16 %v1306, %v1305
    %v1360 = vpack.c.b16 %v1308, %v1307
    %v1361 = vpack.c.b16 %v1310, %v1309
    %v1362 = vpack.c.b16 %v1312, %v1311
    %v1363 = vpack.c.b16 %v1314, %v1313
    %v1364 = vpack.c.b16 %v1316, %v1315
    %v1365 = vpack.c.b16 %v1318, %v1317
    %v1366 = vpack.c.b16 %v1320, %v1319
    %v1367 = vpack.c.b16 %v1322, %v1321
    %v1368 = vpack.c.b16 %v1324, %v1323
    %v1369 = vpack.c.b16 %v1326, %v1325
    %v1370 = vpack.c.b16 %v1328, %v1327
    %v1371 = vpack.c.b16 %v1330, %v1329
    %v1372 = vpack.c.b16 %v1332, %v1331
    %1413 = vmatpush.bf16.msra.mxu0 %v1340
    %1414 = vmatpush.bf16.msra.mxu0 %v1339
    %1415 = vmatpush.bf16.msra.mxu0 %v1338
    %1416 = vmatpush.bf16.msra.mxu0 %v1337
    %1417 = vmatpush.bf16.msra.mxu0 %v1336
    %1418 = vmatpush.bf16.msra.mxu0 %v1335
    %1419 = vmatpush.bf16.msra.mxu0 %v1334
    %1420 = vmatpush.bf16.msra.mxu0 %v1333
    %1421 = vmatmul.bf16.gmra.mxu0 %v853
    %v1422 = vpop.f32.mrf.mxu0
    %v1423 = vadd.f32 0.0, %v1422
    %v1424 = vpop.f32.mrf.mxu0
    %v1425 = vadd.f32 0.0, %v1424
    %1426 = vmatmul.bf16.gmra.mxu0 %v858
    %v1427 = vpop.f32.mrf.mxu0
    %v1428 = vadd.f32 0.0, %v1427
    %v1429 = vpop.f32.mrf.mxu0
    %v1430 = vadd.f32 0.0, %v1429
    %1431 = vmatmul.bf16.gmra.mxu0 %v863
    %v1432 = vpop.f32.mrf.mxu0
    %v1433 = vadd.f32 0.0, %v1432
    %v1434 = vpop.f32.mrf.mxu0
    %v1435 = vadd.f32 0.0, %v1434
    %1436 = vmatmul.bf16.gmra.mxu0 %v868
    %v1437 = vpop.f32.mrf.mxu0
    %v1438 = vadd.f32 0.0, %v1437
    %v1439 = vpop.f32.mrf.mxu0
    %v1440 = vadd.f32 0.0, %v1439
    %1441 = vmatmul.bf16.gmra.mxu0 %v873
    %v1442 = vpop.f32.mrf.mxu0
    %v1443 = vadd.f32 0.0, %v1442
    %v1444 = vpop.f32.mrf.mxu0
    %v1445 = vadd.f32 0.0, %v1444
    %1446 = vmatmul.bf16.gmra.mxu0 %v878
    %v1447 = vpop.f32.mrf.mxu0
    %v1448 = vadd.f32 0.0, %v1447
    %v1449 = vpop.f32.mrf.mxu0
    %v1450 = vadd.f32 0.0, %v1449
    %1451 = vmatmul.bf16.gmra.mxu0 %v883
    %v1452 = vpop.f32.mrf.mxu0
    %v1453 = vadd.f32 0.0, %v1452
    %v1454 = vpop.f32.mrf.mxu0
    %v1455 = vadd.f32 0.0, %v1454
    %1456 = vmatmul.bf16.gmra.mxu0 %v888
    %v1457 = vpop.f32.mrf.mxu0
    %v1458 = vadd.f32 0.0, %v1457
    %v1459 = vpop.f32.mrf.mxu0
    %v1460 = vadd.f32 0.0, %v1459
    %1461 = vmatmul.bf16.gmra.mxu0 %v893
    %v1462 = vpop.f32.mrf.mxu0
    %v1463 = vadd.f32 0.0, %v1462
    %v1464 = vpop.f32.mrf.mxu0
    %v1465 = vadd.f32 0.0, %v1464
    %1466 = vmatmul.bf16.gmra.mxu0 %v898
    %v1467 = vpop.f32.mrf.mxu0
    %v1468 = vadd.f32 0.0, %v1467
    %v1469 = vpop.f32.mrf.mxu0
    %v1470 = vadd.f32 0.0, %v1469
    %1471 = vmatmul.bf16.gmra.mxu0 %v903
    %v1472 = vpop.f32.mrf.mxu0
    %v1473 = vadd.f32 0.0, %v1472
    %v1474 = vpop.f32.mrf.mxu0
    %v1475 = vadd.f32 0.0, %v1474
    %1476 = vmatmul.bf16.gmra.mxu0 %v908
    %v1477 = vpop.f32.mrf.mxu0
    %v1478 = vadd.f32 0.0, %v1477
    %v1479 = vpop.f32.mrf.mxu0
    %v1480 = vadd.f32 0.0, %v1479
    %1481 = vmatmul.bf16.gmra.mxu0 %v913
    %v1482 = vpop.f32.mrf.mxu0
    %v1483 = vadd.f32 0.0, %v1482
    %v1484 = vpop.f32.mrf.mxu0
    %v1485 = vadd.f32 0.0, %v1484
    %1486 = vmatmul.bf16.gmra.mxu0 %v918
    %v1487 = vpop.f32.mrf.mxu0
    %v1488 = vadd.f32 0.0, %v1487
    %v1489 = vpop.f32.mrf.mxu0
    %v1490 = vadd.f32 0.0, %v1489
    %1491 = vmatmul.bf16.gmra.mxu0 %v923
    %v1492 = vpop.f32.mrf.mxu0
    %v1493 = vadd.f32 0.0, %v1492
    %v1494 = vpop.f32.mrf.mxu0
    %v1495 = vadd.f32 0.0, %v1494
    %1496 = vmatmul.bf16.gmra.mxu0 %v928
    %v1497 = vpop.f32.mrf.mxu0
    %v1498 = vadd.f32 0.0, %v1497
    %v1499 = vpop.f32.mrf.mxu0
    %v1500 = vadd.f32 0.0, %v1499
    %1501 = vmatmul.bf16.gmra.mxu0 %v933
    %v1502 = vpop.f32.mrf.mxu0
    %v1503 = vadd.f32 0.0, %v1502
    %v1504 = vpop.f32.mrf.mxu0
    %v1505 = vadd.f32 0.0, %v1504
    %1506 = vmatmul.bf16.gmra.mxu0 %v938
    %v1507 = vpop.f32.mrf.mxu0
    %v1508 = vadd.f32 0.0, %v1507
    %v1509 = vpop.f32.mrf.mxu0
    %v1510 = vadd.f32 0.0, %v1509
    %1511 = vmatmul.bf16.gmra.mxu0 %v943
    %v1512 = vpop.f32.mrf.mxu0
    %v1513 = vadd.f32 0.0, %v1512
    %v1514 = vpop.f32.mrf.mxu0
    %v1515 = vadd.f32 0.0, %v1514
    %1516 = vmatmul.bf16.gmra.mxu0 %v948
    %v1517 = vpop.f32.mrf.mxu0
    %v1518 = vadd.f32 0.0, %v1517
    %v1519 = vpop.f32.mrf.mxu0
    %v1520 = vadd.f32 0.0, %v1519
    %1521 = vmatmul.bf16.gmra.mxu0 %v953
    %v1522 = vpop.f32.mrf.mxu0
    %v1523 = vadd.f32 0.0, %v1522
    %v1524 = vpop.f32.mrf.mxu0
    %v1525 = vadd.f32 0.0, %v1524
    %1526 = vmatmul.bf16.gmra.mxu0 %v958
    %v1527 = vpop.f32.mrf.mxu0
    %v1528 = vadd.f32 0.0, %v1527
    %v1529 = vpop.f32.mrf.mxu0
    %v1530 = vadd.f32 0.0, %v1529
    %1531 = vmatmul.bf16.gmra.mxu0 %v963
    %v1532 = vpop.f32.mrf.mxu0
    %v1533 = vadd.f32 0.0, %v1532
    %v1534 = vpop.f32.mrf.mxu0
    %v1535 = vadd.f32 0.0, %v1534
    %1536 = vmatmul.bf16.gmra.mxu0 %v968
    %v1537 = vpop.f32.mrf.mxu0
    %v1538 = vadd.f32 0.0, %v1537
    %v1539 = vpop.f32.mrf.mxu0
    %v1540 = vadd.f32 0.0, %v1539
    %1541 = vmatmul.bf16.gmra.mxu0 %v973
    %v1542 = vpop.f32.mrf.mxu0
    %v1543 = vadd.f32 0.0, %v1542
    %v1544 = vpop.f32.mrf.mxu0
    %v1545 = vadd.f32 0.0, %v1544
    %1546 = vmatmul.bf16.gmra.mxu0 %v978
    %v1547 = vpop.f32.mrf.mxu0
    %v1548 = vadd.f32 0.0, %v1547
    %v1549 = vpop.f32.mrf.mxu0
    %v1550 = vadd.f32 0.0, %v1549
    %1551 = vmatmul.bf16.gmra.mxu0 %v983
    %v1552 = vpop.f32.mrf.mxu0
    %v1553 = vadd.f32 0.0, %v1552
    %v1554 = vpop.f32.mrf.mxu0
    %v1555 = vadd.f32 0.0, %v1554
    %1556 = vmatmul.bf16.gmra.mxu0 %v988
    %v1557 = vpop.f32.mrf.mxu0
    %v1558 = vadd.f32 0.0, %v1557
    %v1559 = vpop.f32.mrf.mxu0
    %v1560 = vadd.f32 0.0, %v1559
    %1561 = vmatmul.bf16.gmra.mxu0 %v993
    %v1562 = vpop.f32.mrf.mxu0
    %v1563 = vadd.f32 0.0, %v1562
    %v1564 = vpop.f32.mrf.mxu0
    %v1565 = vadd.f32 0.0, %v1564
    %1566 = vmatmul.bf16.gmra.mxu0 %v998
    %v1567 = vpop.f32.mrf.mxu0
    %v1568 = vadd.f32 0.0, %v1567
    %v1569 = vpop.f32.mrf.mxu0
    %v1570 = vadd.f32 0.0, %v1569
    %1571 = vmatmul.bf16.gmra.mxu0 %v1003
    %v1572 = vpop.f32.mrf.mxu0
    %v1573 = vadd.f32 0.0, %v1572
    %v1574 = vpop.f32.mrf.mxu0
    %v1575 = vadd.f32 0.0, %v1574
    %1576 = vmatmul.bf16.gmra.mxu0 %v1008
    %v1577 = vpop.f32.mrf.mxu0
    %v1578 = vadd.f32 0.0, %v1577
    %v1579 = vpop.f32.mrf.mxu0
    %v1580 = vadd.f32 0.0, %v1579
    %1581 = vdwg.mxu0
    %1582 = vmatpush.bf16.msra.mxu0 %v1348
    %1583 = vmatpush.bf16.msra.mxu0 %v1347
    %1584 = vmatpush.bf16.msra.mxu0 %v1346
    %1585 = vmatpush.bf16.msra.mxu0 %v1345
    %1586 = vmatpush.bf16.msra.mxu0 %v1344
    %1587 = vmatpush.bf16.msra.mxu0 %v1343
    %1588 = vmatpush.bf16.msra.mxu0 %v1342
    %1589 = vmatpush.bf16.msra.mxu0 %v1341
    %1590 = vmatmul.bf16.gmra.mxu0 %v854
    %v1591 = vpop.f32.mrf.mxu0
    %v1592 = vadd.f32 %v1423, %v1591
    %v1593 = vpop.f32.mrf.mxu0
    %v1594 = vadd.f32 %v1425, %v1593
    %1595 = vmatmul.bf16.gmra.mxu0 %v859
    %v1596 = vpop.f32.mrf.mxu0
    %v1597 = vadd.f32 %v1428, %v1596
    %v1598 = vpop.f32.mrf.mxu0
    %v1599 = vadd.f32 %v1430, %v1598
    %1600 = vmatmul.bf16.gmra.mxu0 %v864
    %v1601 = vpop.f32.mrf.mxu0
    %v1602 = vadd.f32 %v1433, %v1601
    %v1603 = vpop.f32.mrf.mxu0
    %v1604 = vadd.f32 %v1435, %v1603
    %1605 = vmatmul.bf16.gmra.mxu0 %v869
    %v1606 = vpop.f32.mrf.mxu0
    %v1607 = vadd.f32 %v1438, %v1606
    %v1608 = vpop.f32.mrf.mxu0
    %v1609 = vadd.f32 %v1440, %v1608
    %1610 = vmatmul.bf16.gmra.mxu0 %v874
    %v1611 = vpop.f32.mrf.mxu0
    %v1612 = vadd.f32 %v1443, %v1611
    %v1613 = vpop.f32.mrf.mxu0
    %v1614 = vadd.f32 %v1445, %v1613
    %1615 = vmatmul.bf16.gmra.mxu0 %v879
    %v1616 = vpop.f32.mrf.mxu0
    %v1617 = vadd.f32 %v1448, %v1616
    %v1618 = vpop.f32.mrf.mxu0
    %v1619 = vadd.f32 %v1450, %v1618
    %1620 = vmatmul.bf16.gmra.mxu0 %v884
    %v1621 = vpop.f32.mrf.mxu0
    %v1622 = vadd.f32 %v1453, %v1621
    %v1623 = vpop.f32.mrf.mxu0
    %v1624 = vadd.f32 %v1455, %v1623
    %1625 = vmatmul.bf16.gmra.mxu0 %v889
    %v1626 = vpop.f32.mrf.mxu0
    %v1627 = vadd.f32 %v1458, %v1626
    %v1628 = vpop.f32.mrf.mxu0
    %v1629 = vadd.f32 %v1460, %v1628
    %1630 = vmatmul.bf16.gmra.mxu0 %v894
    %v1631 = vpop.f32.mrf.mxu0
    %v1632 = vadd.f32 %v1463, %v1631
    %v1633 = vpop.f32.mrf.mxu0
    %v1634 = vadd.f32 %v1465, %v1633
    %1635 = vmatmul.bf16.gmra.mxu0 %v899
    %v1636 = vpop.f32.mrf.mxu0
    %v1637 = vadd.f32 %v1468, %v1636
    %v1638 = vpop.f32.mrf.mxu0
    %v1639 = vadd.f32 %v1470, %v1638
    %1640 = vmatmul.bf16.gmra.mxu0 %v904
    %v1641 = vpop.f32.mrf.mxu0
    %v1642 = vadd.f32 %v1473, %v1641
    %v1643 = vpop.f32.mrf.mxu0
    %v1644 = vadd.f32 %v1475, %v1643
    %1645 = vmatmul.bf16.gmra.mxu0 %v909
    %v1646 = vpop.f32.mrf.mxu0
    %v1647 = vadd.f32 %v1478, %v1646
    %v1648 = vpop.f32.mrf.mxu0
    %v1649 = vadd.f32 %v1480, %v1648
    %1650 = vmatmul.bf16.gmra.mxu0 %v914
    %v1651 = vpop.f32.mrf.mxu0
    %v1652 = vadd.f32 %v1483, %v1651
    %v1653 = vpop.f32.mrf.mxu0
    %v1654 = vadd.f32 %v1485, %v1653
    %1655 = vmatmul.bf16.gmra.mxu0 %v919
    %v1656 = vpop.f32.mrf.mxu0
    %v1657 = vadd.f32 %v1488, %v1656
    %v1658 = vpop.f32.mrf.mxu0
    %v1659 = vadd.f32 %v1490, %v1658
    %1660 = vmatmul.bf16.gmra.mxu0 %v924
    %v1661 = vpop.f32.mrf.mxu0
    %v1662 = vadd.f32 %v1493, %v1661
    %v1663 = vpop.f32.mrf.mxu0
    %v1664 = vadd.f32 %v1495, %v1663
    %1665 = vmatmul.bf16.gmra.mxu0 %v929
    %v1666 = vpop.f32.mrf.mxu0
    %v1667 = vadd.f32 %v1498, %v1666
    %v1668 = vpop.f32.mrf.mxu0
    %v1669 = vadd.f32 %v1500, %v1668
    %1670 = vmatmul.bf16.gmra.mxu0 %v934
    %v1671 = vpop.f32.mrf.mxu0
    %v1672 = vadd.f32 %v1503, %v1671
    %v1673 = vpop.f32.mrf.mxu0
    %v1674 = vadd.f32 %v1505, %v1673
    %1675 = vmatmul.bf16.gmra.mxu0 %v939
    %v1676 = vpop.f32.mrf.mxu0
    %v1677 = vadd.f32 %v1508, %v1676
    %v1678 = vpop.f32.mrf.mxu0
    %v1679 = vadd.f32 %v1510, %v1678
    %1680 = vmatmul.bf16.gmra.mxu0 %v944
    %v1681 = vpop.f32.mrf.mxu0
    %v1682 = vadd.f32 %v1513, %v1681
    %v1683 = vpop.f32.mrf.mxu0
    %v1684 = vadd.f32 %v1515, %v1683
    %1685 = vmatmul.bf16.gmra.mxu0 %v949
    %v1686 = vpop.f32.mrf.mxu0
    %v1687 = vadd.f32 %v1518, %v1686
    %v1688 = vpop.f32.mrf.mxu0
    %v1689 = vadd.f32 %v1520, %v1688
    %1690 = vmatmul.bf16.gmra.mxu0 %v954
    %v1691 = vpop.f32.mrf.mxu0
    %v1692 = vadd.f32 %v1523, %v1691
    %v1693 = vpop.f32.mrf.mxu0
    %v1694 = vadd.f32 %v1525, %v1693
    %1695 = vmatmul.bf16.gmra.mxu0 %v959
    %v1696 = vpop.f32.mrf.mxu0
    %v1697 = vadd.f32 %v1528, %v1696
    %v1698 = vpop.f32.mrf.mxu0
    %v1699 = vadd.f32 %v1530, %v1698
    %1700 = vmatmul.bf16.gmra.mxu0 %v964
    %v1701 = vpop.f32.mrf.mxu0
    %v1702 = vadd.f32 %v1533, %v1701
    %v1703 = vpop.f32.mrf.mxu0
    %v1704 = vadd.f32 %v1535, %v1703
    %1705 = vmatmul.bf16.gmra.mxu0 %v969
    %v1706 = vpop.f32.mrf.mxu0
    %v1707 = vadd.f32 %v1538, %v1706
    %v1708 = vpop.f32.mrf.mxu0
    %v1709 = vadd.f32 %v1540, %v1708
    %1710 = vmatmul.bf16.gmra.mxu0 %v974
    %v1711 = vpop.f32.mrf.mxu0
    %v1712 = vadd.f32 %v1543, %v1711
    %v1713 = vpop.f32.mrf.mxu0
    %v1714 = vadd.f32 %v1545, %v1713
    %1715 = vmatmul.bf16.gmra.mxu0 %v979
    %v1716 = vpop.f32.mrf.mxu0
    %v1717 = vadd.f32 %v1548, %v1716
    %v1718 = vpop.f32.mrf.mxu0
    %v1719 = vadd.f32 %v1550, %v1718
    %1720 = vmatmul.bf16.gmra.mxu0 %v984
    %v1721 = vpop.f32.mrf.mxu0
    %v1722 = vadd.f32 %v1553, %v1721
    %v1723 = vpop.f32.mrf.mxu0
    %v1724 = vadd.f32 %v1555, %v1723
    %1725 = vmatmul.bf16.gmra.mxu0 %v989
    %v1726 = vpop.f32.mrf.mxu0
    %v1727 = vadd.f32 %v1558, %v1726
    %v1728 = vpop.f32.mrf.mxu0
    %v1729 = vadd.f32 %v1560, %v1728
    %1730 = vmatmul.bf16.gmra.mxu0 %v994
    %v1731 = vpop.f32.mrf.mxu0
    %v1732 = vadd.f32 %v1563, %v1731
    %v1733 = vpop.f32.mrf.mxu0
    %v1734 = vadd.f32 %v1565, %v1733
    %1735 = vmatmul.bf16.gmra.mxu0 %v999
    %v1736 = vpop.f32.mrf.mxu0
    %v1737 = vadd.f32 %v1568, %v1736
    %v1738 = vpop.f32.mrf.mxu0
    %v1739 = vadd.f32 %v1570, %v1738
    %1740 = vmatmul.bf16.gmra.mxu0 %v1004
    %v1741 = vpop.f32.mrf.mxu0
    %v1742 = vadd.f32 %v1573, %v1741
    %v1743 = vpop.f32.mrf.mxu0
    %v1744 = vadd.f32 %v1575, %v1743
    %1745 = vmatmul.bf16.gmra.mxu0 %v1009
    %v1746 = vpop.f32.mrf.mxu0
    %v1747 = vadd.f32 %v1578, %v1746
    %v1748 = vpop.f32.mrf.mxu0
    %v1749 = vadd.f32 %v1580, %v1748
    %1750 = vdwg.mxu0
    %1751 = vmatpush.bf16.msra.mxu0 %v1356
    %1752 = vmatpush.bf16.msra.mxu0 %v1355
    %1753 = vmatpush.bf16.msra.mxu0 %v1354
    %1754 = vmatpush.bf16.msra.mxu0 %v1353
    %1755 = vmatpush.bf16.msra.mxu0 %v1352
    %1756 = vmatpush.bf16.msra.mxu0 %v1351
    %1757 = vmatpush.bf16.msra.mxu0 %v1350
    %1758 = vmatpush.bf16.msra.mxu0 %v1349
    %1759 = vmatmul.bf16.gmra.mxu0 %v855
    %v1760 = vpop.f32.mrf.mxu0
    %v1761 = vadd.f32 %v1592, %v1760
    %v1762 = vpop.f32.mrf.mxu0
    %v1763 = vadd.f32 %v1594, %v1762
    %1764 = vmatmul.bf16.gmra.mxu0 %v860
    %v1765 = vpop.f32.mrf.mxu0
    %v1766 = vadd.f32 %v1597, %v1765
    %v1767 = vpop.f32.mrf.mxu0
    %v1768 = vadd.f32 %v1599, %v1767
    %1769 = vmatmul.bf16.gmra.mxu0 %v865
    %v1770 = vpop.f32.mrf.mxu0
    %v1771 = vadd.f32 %v1602, %v1770
    %v1772 = vpop.f32.mrf.mxu0
    %v1773 = vadd.f32 %v1604, %v1772
    %1774 = vmatmul.bf16.gmra.mxu0 %v870
    %v1775 = vpop.f32.mrf.mxu0
    %v1776 = vadd.f32 %v1607, %v1775
    %v1777 = vpop.f32.mrf.mxu0
    %v1778 = vadd.f32 %v1609, %v1777
    %1779 = vmatmul.bf16.gmra.mxu0 %v875
    %v1780 = vpop.f32.mrf.mxu0
    %v1781 = vadd.f32 %v1612, %v1780
    %v1782 = vpop.f32.mrf.mxu0
    %v1783 = vadd.f32 %v1614, %v1782
    %1784 = vmatmul.bf16.gmra.mxu0 %v880
    %v1785 = vpop.f32.mrf.mxu0
    %v1786 = vadd.f32 %v1617, %v1785
    %v1787 = vpop.f32.mrf.mxu0
    %v1788 = vadd.f32 %v1619, %v1787
    %1789 = vmatmul.bf16.gmra.mxu0 %v885
    %v1790 = vpop.f32.mrf.mxu0
    %v1791 = vadd.f32 %v1622, %v1790
    %v1792 = vpop.f32.mrf.mxu0
    %v1793 = vadd.f32 %v1624, %v1792
    %1794 = vmatmul.bf16.gmra.mxu0 %v890
    %v1795 = vpop.f32.mrf.mxu0
    %v1796 = vadd.f32 %v1627, %v1795
    %v1797 = vpop.f32.mrf.mxu0
    %v1798 = vadd.f32 %v1629, %v1797
    %1799 = vmatmul.bf16.gmra.mxu0 %v895
    %v1800 = vpop.f32.mrf.mxu0
    %v1801 = vadd.f32 %v1632, %v1800
    %v1802 = vpop.f32.mrf.mxu0
    %v1803 = vadd.f32 %v1634, %v1802
    %1804 = vmatmul.bf16.gmra.mxu0 %v900
    %v1805 = vpop.f32.mrf.mxu0
    %v1806 = vadd.f32 %v1637, %v1805
    %v1807 = vpop.f32.mrf.mxu0
    %v1808 = vadd.f32 %v1639, %v1807
    %1809 = vmatmul.bf16.gmra.mxu0 %v905
    %v1810 = vpop.f32.mrf.mxu0
    %v1811 = vadd.f32 %v1642, %v1810
    %v1812 = vpop.f32.mrf.mxu0
    %v1813 = vadd.f32 %v1644, %v1812
    %1814 = vmatmul.bf16.gmra.mxu0 %v910
    %v1815 = vpop.f32.mrf.mxu0
    %v1816 = vadd.f32 %v1647, %v1815
    %v1817 = vpop.f32.mrf.mxu0
    %v1818 = vadd.f32 %v1649, %v1817
    %1819 = vmatmul.bf16.gmra.mxu0 %v915
    %v1820 = vpop.f32.mrf.mxu0
    %v1821 = vadd.f32 %v1652, %v1820
    %v1822 = vpop.f32.mrf.mxu0
    %v1823 = vadd.f32 %v1654, %v1822
    %1824 = vmatmul.bf16.gmra.mxu0 %v920
    %v1825 = vpop.f32.mrf.mxu0
    %v1826 = vadd.f32 %v1657, %v1825
    %v1827 = vpop.f32.mrf.mxu0
    %v1828 = vadd.f32 %v1659, %v1827
    %1829 = vmatmul.bf16.gmra.mxu0 %v925
    %v1830 = vpop.f32.mrf.mxu0
    %v1831 = vadd.f32 %v1662, %v1830
    %v1832 = vpop.f32.mrf.mxu0
    %v1833 = vadd.f32 %v1664, %v1832
    %1834 = vmatmul.bf16.gmra.mxu0 %v930
    %v1835 = vpop.f32.mrf.mxu0
    %v1836 = vadd.f32 %v1667, %v1835
    %v1837 = vpop.f32.mrf.mxu0
    %v1838 = vadd.f32 %v1669, %v1837
    %1839 = vmatmul.bf16.gmra.mxu0 %v935
    %v1840 = vpop.f32.mrf.mxu0
    %v1841 = vadd.f32 %v1672, %v1840
    %v1842 = vpop.f32.mrf.mxu0
    %v1843 = vadd.f32 %v1674, %v1842
    %1844 = vmatmul.bf16.gmra.mxu0 %v940
    %v1845 = vpop.f32.mrf.mxu0
    %v1846 = vadd.f32 %v1677, %v1845
    %v1847 = vpop.f32.mrf.mxu0
    %v1848 = vadd.f32 %v1679, %v1847
    %1849 = vmatmul.bf16.gmra.mxu0 %v945
    %v1850 = vpop.f32.mrf.mxu0
    %v1851 = vadd.f32 %v1682, %v1850
    %v1852 = vpop.f32.mrf.mxu0
    %v1853 = vadd.f32 %v1684, %v1852
    %1854 = vmatmul.bf16.gmra.mxu0 %v950
    %v1855 = vpop.f32.mrf.mxu0
    %v1856 = vadd.f32 %v1687, %v1855
    %v1857 = vpop.f32.mrf.mxu0
    %v1858 = vadd.f32 %v1689, %v1857
    %1859 = vmatmul.bf16.gmra.mxu0 %v955
    %v1860 = vpop.f32.mrf.mxu0
    %v1861 = vadd.f32 %v1692, %v1860
    %v1862 = vpop.f32.mrf.mxu0
    %v1863 = vadd.f32 %v1694, %v1862
    %1864 = vmatmul.bf16.gmra.mxu0 %v960
    %v1865 = vpop.f32.mrf.mxu0
    %v1866 = vadd.f32 %v1697, %v1865
    %v1867 = vpop.f32.mrf.mxu0
    %v1868 = vadd.f32 %v1699, %v1867
    %1869 = vmatmul.bf16.gmra.mxu0 %v965
    %v1870 = vpop.f32.mrf.mxu0
    %v1871 = vadd.f32 %v1702, %v1870
    %v1872 = vpop.f32.mrf.mxu0
    %v1873 = vadd.f32 %v1704, %v1872
    %1874 = vmatmul.bf16.gmra.mxu0 %v970
    %v1875 = vpop.f32.mrf.mxu0
    %v1876 = vadd.f32 %v1707, %v1875
    %v1877 = vpop.f32.mrf.mxu0
    %v1878 = vadd.f32 %v1709, %v1877
    %1879 = vmatmul.bf16.gmra.mxu0 %v975
    %v1880 = vpop.f32.mrf.mxu0
    %v1881 = vadd.f32 %v1712, %v1880
    %v1882 = vpop.f32.mrf.mxu0
    %v1883 = vadd.f32 %v1714, %v1882
    %1884 = vmatmul.bf16.gmra.mxu0 %v980
    %v1885 = vpop.f32.mrf.mxu0
    %v1886 = vadd.f32 %v1717, %v1885
    %v1887 = vpop.f32.mrf.mxu0
    %v1888 = vadd.f32 %v1719, %v1887
    %1889 = vmatmul.bf16.gmra.mxu0 %v985
    %v1890 = vpop.f32.mrf.mxu0
    %v1891 = vadd.f32 %v1722, %v1890
    %v1892 = vpop.f32.mrf.mxu0
    %v1893 = vadd.f32 %v1724, %v1892
    %1894 = vmatmul.bf16.gmra.mxu0 %v990
    %v1895 = vpop.f32.mrf.mxu0
    %v1896 = vadd.f32 %v1727, %v1895
    %v1897 = vpop.f32.mrf.mxu0
    %v1898 = vadd.f32 %v1729, %v1897
    %1899 = vmatmul.bf16.gmra.mxu0 %v995
    %v1900 = vpop.f32.mrf.mxu0
    %v1901 = vadd.f32 %v1732, %v1900
    %v1902 = vpop.f32.mrf.mxu0
    %v1903 = vadd.f32 %v1734, %v1902
    %1904 = vmatmul.bf16.gmra.mxu0 %v1000
    %v1905 = vpop.f32.mrf.mxu0
    %v1906 = vadd.f32 %v1737, %v1905
    %v1907 = vpop.f32.mrf.mxu0
    %v1908 = vadd.f32 %v1739, %v1907
    %1909 = vmatmul.bf16.gmra.mxu0 %v1005
    %v1910 = vpop.f32.mrf.mxu0
    %v1911 = vadd.f32 %v1742, %v1910
    %v1912 = vpop.f32.mrf.mxu0
    %v1913 = vadd.f32 %v1744, %v1912
    %1914 = vmatmul.bf16.gmra.mxu0 %v1010
    %v1915 = vpop.f32.mrf.mxu0
    %v1916 = vadd.f32 %v1747, %v1915
    %v1917 = vpop.f32.mrf.mxu0
    %v1918 = vadd.f32 %v1749, %v1917
    %1919 = vdwg.mxu0
    %1920 = vmatpush.bf16.msra.mxu0 %v1364
    %1921 = vmatpush.bf16.msra.mxu0 %v1363
    %1922 = vmatpush.bf16.msra.mxu0 %v1362
    %1923 = vmatpush.bf16.msra.mxu0 %v1361
    %1924 = vmatpush.bf16.msra.mxu0 %v1360
    %1925 = vmatpush.bf16.msra.mxu0 %v1359
    %1926 = vmatpush.bf16.msra.mxu0 %v1358
    %1927 = vmatpush.bf16.msra.mxu0 %v1357
    %1928 = vmatmul.bf16.gmra.mxu0 %v856
    %v1929 = vpop.f32.mrf.mxu0
    %v1930 = vadd.f32 %v1761, %v1929
    %v1931 = vpop.f32.mrf.mxu0
    %v1932 = vadd.f32 %v1763, %v1931
    %1933 = vmatmul.bf16.gmra.mxu0 %v861
    %v1934 = vpop.f32.mrf.mxu0
    %v1935 = vadd.f32 %v1766, %v1934
    %v1936 = vpop.f32.mrf.mxu0
    %v1937 = vadd.f32 %v1768, %v1936
    %1938 = vmatmul.bf16.gmra.mxu0 %v866
    %v1939 = vpop.f32.mrf.mxu0
    %v1940 = vadd.f32 %v1771, %v1939
    %v1941 = vpop.f32.mrf.mxu0
    %v1942 = vadd.f32 %v1773, %v1941
    %1943 = vmatmul.bf16.gmra.mxu0 %v871
    %v1944 = vpop.f32.mrf.mxu0
    %v1945 = vadd.f32 %v1776, %v1944
    %v1946 = vpop.f32.mrf.mxu0
    %v1947 = vadd.f32 %v1778, %v1946
    %1948 = vmatmul.bf16.gmra.mxu0 %v876
    %v1949 = vpop.f32.mrf.mxu0
    %v1950 = vadd.f32 %v1781, %v1949
    %v1951 = vpop.f32.mrf.mxu0
    %v1952 = vadd.f32 %v1783, %v1951
    %1953 = vmatmul.bf16.gmra.mxu0 %v881
    %v1954 = vpop.f32.mrf.mxu0
    %v1955 = vadd.f32 %v1786, %v1954
    %v1956 = vpop.f32.mrf.mxu0
    %v1957 = vadd.f32 %v1788, %v1956
    %1958 = vmatmul.bf16.gmra.mxu0 %v886
    %v1959 = vpop.f32.mrf.mxu0
    %v1960 = vadd.f32 %v1791, %v1959
    %v1961 = vpop.f32.mrf.mxu0
    %v1962 = vadd.f32 %v1793, %v1961
    %1963 = vmatmul.bf16.gmra.mxu0 %v891
    %v1964 = vpop.f32.mrf.mxu0
    %v1965 = vadd.f32 %v1796, %v1964
    %v1966 = vpop.f32.mrf.mxu0
    %v1967 = vadd.f32 %v1798, %v1966
    %1968 = vmatmul.bf16.gmra.mxu0 %v896
    %v1969 = vpop.f32.mrf.mxu0
    %v1970 = vadd.f32 %v1801, %v1969
    %v1971 = vpop.f32.mrf.mxu0
    %v1972 = vadd.f32 %v1803, %v1971
    %1973 = vmatmul.bf16.gmra.mxu0 %v901
    %v1974 = vpop.f32.mrf.mxu0
    %v1975 = vadd.f32 %v1806, %v1974
    %v1976 = vpop.f32.mrf.mxu0
    %v1977 = vadd.f32 %v1808, %v1976
    %1978 = vmatmul.bf16.gmra.mxu0 %v906
    %v1979 = vpop.f32.mrf.mxu0
    %v1980 = vadd.f32 %v1811, %v1979
    %v1981 = vpop.f32.mrf.mxu0
    %v1982 = vadd.f32 %v1813, %v1981
    %1983 = vmatmul.bf16.gmra.mxu0 %v911
    %v1984 = vpop.f32.mrf.mxu0
    %v1985 = vadd.f32 %v1816, %v1984
    %v1986 = vpop.f32.mrf.mxu0
    %v1987 = vadd.f32 %v1818, %v1986
    %1988 = vmatmul.bf16.gmra.mxu0 %v916
    %v1989 = vpop.f32.mrf.mxu0
    %v1990 = vadd.f32 %v1821, %v1989
    %v1991 = vpop.f32.mrf.mxu0
    %v1992 = vadd.f32 %v1823, %v1991
    %1993 = vmatmul.bf16.gmra.mxu0 %v921
    %v1994 = vpop.f32.mrf.mxu0
    %v1995 = vadd.f32 %v1826, %v1994
    %v1996 = vpop.f32.mrf.mxu0
    %v1997 = vadd.f32 %v1828, %v1996
    %1998 = vmatmul.bf16.gmra.mxu0 %v926
    %v1999 = vpop.f32.mrf.mxu0
    %v2000 = vadd.f32 %v1831, %v1999
    %v2001 = vpop.f32.mrf.mxu0
    %v2002 = vadd.f32 %v1833, %v2001
    %2003 = vmatmul.bf16.gmra.mxu0 %v931
    %v2004 = vpop.f32.mrf.mxu0
    %v2005 = vadd.f32 %v1836, %v2004
    %v2006 = vpop.f32.mrf.mxu0
    %v2007 = vadd.f32 %v1838, %v2006
    %2008 = vmatmul.bf16.gmra.mxu0 %v936
    %v2009 = vpop.f32.mrf.mxu0
    %v2010 = vadd.f32 %v1841, %v2009
    %v2011 = vpop.f32.mrf.mxu0
    %v2012 = vadd.f32 %v1843, %v2011
    %2013 = vmatmul.bf16.gmra.mxu0 %v941
    %v2014 = vpop.f32.mrf.mxu0
    %v2015 = vadd.f32 %v1846, %v2014
    %v2016 = vpop.f32.mrf.mxu0
    %v2017 = vadd.f32 %v1848, %v2016
    %2018 = vmatmul.bf16.gmra.mxu0 %v946
    %v2019 = vpop.f32.mrf.mxu0
    %v2020 = vadd.f32 %v1851, %v2019
    %v2021 = vpop.f32.mrf.mxu0
    %v2022 = vadd.f32 %v1853, %v2021
    %2023 = vmatmul.bf16.gmra.mxu0 %v951
    %v2024 = vpop.f32.mrf.mxu0
    %v2025 = vadd.f32 %v1856, %v2024
    %v2026 = vpop.f32.mrf.mxu0
    %v2027 = vadd.f32 %v1858, %v2026
    %2028 = vmatmul.bf16.gmra.mxu0 %v956
    %v2029 = vpop.f32.mrf.mxu0
    %v2030 = vadd.f32 %v1861, %v2029
    %v2031 = vpop.f32.mrf.mxu0
    %v2032 = vadd.f32 %v1863, %v2031
    %2033 = vmatmul.bf16.gmra.mxu0 %v961
    %v2034 = vpop.f32.mrf.mxu0
    %v2035 = vadd.f32 %v1866, %v2034
    %v2036 = vpop.f32.mrf.mxu0
    %v2037 = vadd.f32 %v1868, %v2036
    %2038 = vmatmul.bf16.gmra.mxu0 %v966
    %v2039 = vpop.f32.mrf.mxu0
    %v2040 = vadd.f32 %v1871, %v2039
    %v2041 = vpop.f32.mrf.mxu0
    %v2042 = vadd.f32 %v1873, %v2041
    %2043 = vmatmul.bf16.gmra.mxu0 %v971
    %v2044 = vpop.f32.mrf.mxu0
    %v2045 = vadd.f32 %v1876, %v2044
    %v2046 = vpop.f32.mrf.mxu0
    %v2047 = vadd.f32 %v1878, %v2046
    %2048 = vmatmul.bf16.gmra.mxu0 %v976
    %v2049 = vpop.f32.mrf.mxu0
    %v2050 = vadd.f32 %v1881, %v2049
    %v2051 = vpop.f32.mrf.mxu0
    %v2052 = vadd.f32 %v1883, %v2051
    %2053 = vmatmul.bf16.gmra.mxu0 %v981
    %v2054 = vpop.f32.mrf.mxu0
    %v2055 = vadd.f32 %v1886, %v2054
    %v2056 = vpop.f32.mrf.mxu0
    %v2057 = vadd.f32 %v1888, %v2056
    %2058 = vmatmul.bf16.gmra.mxu0 %v986
    %v2059 = vpop.f32.mrf.mxu0
    %v2060 = vadd.f32 %v1891, %v2059
    %v2061 = vpop.f32.mrf.mxu0
    %v2062 = vadd.f32 %v1893, %v2061
    %2063 = vmatmul.bf16.gmra.mxu0 %v991
    %v2064 = vpop.f32.mrf.mxu0
    %v2065 = vadd.f32 %v1896, %v2064
    %v2066 = vpop.f32.mrf.mxu0
    %v2067 = vadd.f32 %v1898, %v2066
    %2068 = vmatmul.bf16.gmra.mxu0 %v996
    %v2069 = vpop.f32.mrf.mxu0
    %v2070 = vadd.f32 %v1901, %v2069
    %v2071 = vpop.f32.mrf.mxu0
    %v2072 = vadd.f32 %v1903, %v2071
    %2073 = vmatmul.bf16.gmra.mxu0 %v1001
    %v2074 = vpop.f32.mrf.mxu0
    %v2075 = vadd.f32 %v1906, %v2074
    %v2076 = vpop.f32.mrf.mxu0
    %v2077 = vadd.f32 %v1908, %v2076
    %2078 = vmatmul.bf16.gmra.mxu0 %v1006
    %v2079 = vpop.f32.mrf.mxu0
    %v2080 = vadd.f32 %v1911, %v2079
    %v2081 = vpop.f32.mrf.mxu0
    %v2082 = vadd.f32 %v1913, %v2081
    %2083 = vmatmul.bf16.gmra.mxu0 %v1011
    %v2084 = vpop.f32.mrf.mxu0
    %v2085 = vadd.f32 %v1916, %v2084
    %v2086 = vpop.f32.mrf.mxu0
    %v2087 = vadd.f32 %v1918, %v2086
    %2088 = vdwg.mxu0
    %2089 = vmatpush.bf16.msra.mxu0 %v1372
    %2090 = vmatpush.bf16.msra.mxu0 %v1371
    %2091 = vmatpush.bf16.msra.mxu0 %v1370
    %2092 = vmatpush.bf16.msra.mxu0 %v1369
    %2093 = vmatpush.bf16.msra.mxu0 %v1368
    %2094 = vmatpush.bf16.msra.mxu0 %v1367
    %2095 = vmatpush.bf16.msra.mxu0 %v1366
    %2096 = vmatpush.bf16.msra.mxu0 %v1365
    %2097 = vmatmul.bf16.gmra.mxu0 %v857
    %v2098 = vpop.f32.mrf.mxu0
    %v2099 = vadd.f32 %v1930, %v2098
    %v2100 = vpop.f32.mrf.mxu0
    %v2101 = vadd.f32 %v1932, %v2100
    %2102 = vmatmul.bf16.gmra.mxu0 %v862
    %v2103 = vpop.f32.mrf.mxu0
    %v2104 = vadd.f32 %v1935, %v2103
    %v2105 = vpop.f32.mrf.mxu0
    %v2106 = vadd.f32 %v1937, %v2105
    %2107 = vmatmul.bf16.gmra.mxu0 %v867
    %v2108 = vpop.f32.mrf.mxu0
    %v2109 = vadd.f32 %v1940, %v2108
    %v2110 = vpop.f32.mrf.mxu0
    %v2111 = vadd.f32 %v1942, %v2110
    %2112 = vmatmul.bf16.gmra.mxu0 %v872
    %v2113 = vpop.f32.mrf.mxu0
    %v2114 = vadd.f32 %v1945, %v2113
    %v2115 = vpop.f32.mrf.mxu0
    %v2116 = vadd.f32 %v1947, %v2115
    %2117 = vmatmul.bf16.gmra.mxu0 %v877
    %v2118 = vpop.f32.mrf.mxu0
    %v2119 = vadd.f32 %v1950, %v2118
    %v2120 = vpop.f32.mrf.mxu0
    %v2121 = vadd.f32 %v1952, %v2120
    %2122 = vmatmul.bf16.gmra.mxu0 %v882
    %v2123 = vpop.f32.mrf.mxu0
    %v2124 = vadd.f32 %v1955, %v2123
    %v2125 = vpop.f32.mrf.mxu0
    %v2126 = vadd.f32 %v1957, %v2125
    %2127 = vmatmul.bf16.gmra.mxu0 %v887
    %v2128 = vpop.f32.mrf.mxu0
    %v2129 = vadd.f32 %v1960, %v2128
    %v2130 = vpop.f32.mrf.mxu0
    %v2131 = vadd.f32 %v1962, %v2130
    %2132 = vmatmul.bf16.gmra.mxu0 %v892
    %v2133 = vpop.f32.mrf.mxu0
    %v2134 = vadd.f32 %v1965, %v2133
    %v2135 = vpop.f32.mrf.mxu0
    %v2136 = vadd.f32 %v1967, %v2135
    %2137 = vmatmul.bf16.gmra.mxu0 %v897
    %v2138 = vpop.f32.mrf.mxu0
    %v2139 = vadd.f32 %v1970, %v2138
    %v2140 = vpop.f32.mrf.mxu0
    %v2141 = vadd.f32 %v1972, %v2140
    %2142 = vmatmul.bf16.gmra.mxu0 %v902
    %v2143 = vpop.f32.mrf.mxu0
    %v2144 = vadd.f32 %v1975, %v2143
    %v2145 = vpop.f32.mrf.mxu0
    %v2146 = vadd.f32 %v1977, %v2145
    %2147 = vmatmul.bf16.gmra.mxu0 %v907
    %v2148 = vpop.f32.mrf.mxu0
    %v2149 = vadd.f32 %v1980, %v2148
    %v2150 = vpop.f32.mrf.mxu0
    %v2151 = vadd.f32 %v1982, %v2150
    %2152 = vmatmul.bf16.gmra.mxu0 %v912
    %v2153 = vpop.f32.mrf.mxu0
    %v2154 = vadd.f32 %v1985, %v2153
    %v2155 = vpop.f32.mrf.mxu0
    %v2156 = vadd.f32 %v1987, %v2155
    %2157 = vmatmul.bf16.gmra.mxu0 %v917
    %v2158 = vpop.f32.mrf.mxu0
    %v2159 = vadd.f32 %v1990, %v2158
    %v2160 = vpop.f32.mrf.mxu0
    %v2161 = vadd.f32 %v1992, %v2160
    %2162 = vmatmul.bf16.gmra.mxu0 %v922
    %v2163 = vpop.f32.mrf.mxu0
    %v2164 = vadd.f32 %v1995, %v2163
    %v2165 = vpop.f32.mrf.mxu0
    %v2166 = vadd.f32 %v1997, %v2165
    %2167 = vmatmul.bf16.gmra.mxu0 %v927
    %v2168 = vpop.f32.mrf.mxu0
    %v2169 = vadd.f32 %v2000, %v2168
    %v2170 = vpop.f32.mrf.mxu0
    %v2171 = vadd.f32 %v2002, %v2170
    %2172 = vmatmul.bf16.gmra.mxu0 %v932
    %v2173 = vpop.f32.mrf.mxu0
    %v2174 = vadd.f32 %v2005, %v2173
    %v2175 = vpop.f32.mrf.mxu0
    %v2176 = vadd.f32 %v2007, %v2175
    %2177 = vmatmul.bf16.gmra.mxu0 %v937
    %v2178 = vpop.f32.mrf.mxu0
    %v2179 = vadd.f32 %v2010, %v2178
    %v2180 = vpop.f32.mrf.mxu0
    %v2181 = vadd.f32 %v2012, %v2180
    %2182 = vmatmul.bf16.gmra.mxu0 %v942
    %v2183 = vpop.f32.mrf.mxu0
    %v2184 = vadd.f32 %v2015, %v2183
    %v2185 = vpop.f32.mrf.mxu0
    %v2186 = vadd.f32 %v2017, %v2185
    %2187 = vmatmul.bf16.gmra.mxu0 %v947
    %v2188 = vpop.f32.mrf.mxu0
    %v2189 = vadd.f32 %v2020, %v2188
    %v2190 = vpop.f32.mrf.mxu0
    %v2191 = vadd.f32 %v2022, %v2190
    %2192 = vmatmul.bf16.gmra.mxu0 %v952
    %v2193 = vpop.f32.mrf.mxu0
    %v2194 = vadd.f32 %v2025, %v2193
    %v2195 = vpop.f32.mrf.mxu0
    %v2196 = vadd.f32 %v2027, %v2195
    %2197 = vmatmul.bf16.gmra.mxu0 %v957
    %v2198 = vpop.f32.mrf.mxu0
    %v2199 = vadd.f32 %v2030, %v2198
    %v2200 = vpop.f32.mrf.mxu0
    %v2201 = vadd.f32 %v2032, %v2200
    %2202 = vmatmul.bf16.gmra.mxu0 %v962
    %v2203 = vpop.f32.mrf.mxu0
    %v2204 = vadd.f32 %v2035, %v2203
    %v2205 = vpop.f32.mrf.mxu0
    %v2206 = vadd.f32 %v2037, %v2205
    %2207 = vmatmul.bf16.gmra.mxu0 %v967
    %v2208 = vpop.f32.mrf.mxu0
    %v2209 = vadd.f32 %v2040, %v2208
    %v2210 = vpop.f32.mrf.mxu0
    %v2211 = vadd.f32 %v2042, %v2210
    %2212 = vmatmul.bf16.gmra.mxu0 %v972
    %v2213 = vpop.f32.mrf.mxu0
    %v2214 = vadd.f32 %v2045, %v2213
    %v2215 = vpop.f32.mrf.mxu0
    %v2216 = vadd.f32 %v2047, %v2215
    %2217 = vmatmul.bf16.gmra.mxu0 %v977
    %v2218 = vpop.f32.mrf.mxu0
    %v2219 = vadd.f32 %v2050, %v2218
    %v2220 = vpop.f32.mrf.mxu0
    %v2221 = vadd.f32 %v2052, %v2220
    %2222 = vmatmul.bf16.gmra.mxu0 %v982
    %v2223 = vpop.f32.mrf.mxu0
    %v2224 = vadd.f32 %v2055, %v2223
    %v2225 = vpop.f32.mrf.mxu0
    %v2226 = vadd.f32 %v2057, %v2225
    %2227 = vmatmul.bf16.gmra.mxu0 %v987
    %v2228 = vpop.f32.mrf.mxu0
    %v2229 = vadd.f32 %v2060, %v2228
    %v2230 = vpop.f32.mrf.mxu0
    %v2231 = vadd.f32 %v2062, %v2230
    %2232 = vmatmul.bf16.gmra.mxu0 %v992
    %v2233 = vpop.f32.mrf.mxu0
    %v2234 = vadd.f32 %v2065, %v2233
    %v2235 = vpop.f32.mrf.mxu0
    %v2236 = vadd.f32 %v2067, %v2235
    %2237 = vmatmul.bf16.gmra.mxu0 %v997
    %v2238 = vpop.f32.mrf.mxu0
    %v2239 = vadd.f32 %v2070, %v2238
    %v2240 = vpop.f32.mrf.mxu0
    %v2241 = vadd.f32 %v2072, %v2240
    %2242 = vmatmul.bf16.gmra.mxu0 %v1002
    %v2243 = vpop.f32.mrf.mxu0
    %v2244 = vadd.f32 %v2075, %v2243
    %v2245 = vpop.f32.mrf.mxu0
    %v2246 = vadd.f32 %v2077, %v2245
    %2247 = vmatmul.bf16.gmra.mxu0 %v1007
    %v2248 = vpop.f32.mrf.mxu0
    %v2249 = vadd.f32 %v2080, %v2248
    %v2250 = vpop.f32.mrf.mxu0
    %v2251 = vadd.f32 %v2082, %v2250
    %2252 = vmatmul.bf16.gmra.mxu0 %v1012
    %v2253 = vpop.f32.mrf.mxu0
    %v2254 = vadd.f32 %v2085, %v2253
    %v2255 = vpop.f32.mrf.mxu0
    %v2256 = vadd.f32 %v2087, %v2255
    %2257 = vdwg.mxu0
    %v2258 = vmul.f32 %v2099, %v2099
    %v2259 = vmul.f32 %v2101, %v2101
    %v2260 = vmul.f32 %v2104, %v2104
    %v2261 = vmul.f32 %v2106, %v2106
    %v2262 = vmul.f32 %v2109, %v2109
    %v2263 = vmul.f32 %v2111, %v2111
    %v2264 = vmul.f32 %v2114, %v2114
    %v2265 = vmul.f32 %v2116, %v2116
    %v2266 = vmul.f32 %v2119, %v2119
    %v2267 = vmul.f32 %v2121, %v2121
    %v2268 = vmul.f32 %v2124, %v2124
    %v2269 = vmul.f32 %v2126, %v2126
    %v2270 = vmul.f32 %v2129, %v2129
    %v2271 = vmul.f32 %v2131, %v2131
    %v2272 = vmul.f32 %v2134, %v2134
    %v2273 = vmul.f32 %v2136, %v2136
    %v2274 = vmul.f32 %v2139, %v2139
    %v2275 = vmul.f32 %v2141, %v2141
    %v2276 = vmul.f32 %v2144, %v2144
    %v2277 = vmul.f32 %v2146, %v2146
    %v2278 = vmul.f32 %v2149, %v2149
    %v2279 = vmul.f32 %v2151, %v2151
    %v2280 = vmul.f32 %v2154, %v2154
    %v2281 = vmul.f32 %v2156, %v2156
    %v2282 = vmul.f32 %v2159, %v2159
    %v2283 = vmul.f32 %v2161, %v2161
    %v2284 = vmul.f32 %v2164, %v2164
    %v2285 = vmul.f32 %v2166, %v2166
    %v2286 = vmul.f32 %v2169, %v2169
    %v2287 = vmul.f32 %v2171, %v2171
    %v2288 = vmul.f32 %v2174, %v2174
    %v2289 = vmul.f32 %v2176, %v2176
    %v2290 = vmul.f32 %v2179, %v2179
    %v2291 = vmul.f32 %v2181, %v2181
    %v2292 = vmul.f32 %v2184, %v2184
    %v2293 = vmul.f32 %v2186, %v2186
    %v2294 = vmul.f32 %v2189, %v2189
    %v2295 = vmul.f32 %v2191, %v2191
    %v2296 = vmul.f32 %v2194, %v2194
    %v2297 = vmul.f32 %v2196, %v2196
    %v2298 = vmul.f32 %v2199, %v2199
    %v2299 = vmul.f32 %v2201, %v2201
    %v2300 = vmul.f32 %v2204, %v2204
    %v2301 = vmul.f32 %v2206, %v2206
    %v2302 = vmul.f32 %v2209, %v2209
    %v2303 = vmul.f32 %v2211, %v2211
    %v2304 = vmul.f32 %v2214, %v2214
    %v2305 = vmul.f32 %v2216, %v2216
    %v2306 = vmul.f32 %v2219, %v2219
    %v2307 = vmul.f32 %v2221, %v2221
    %v2308 = vmul.f32 %v2224, %v2224
    %v2309 = vmul.f32 %v2226, %v2226
    %v2310 = vmul.f32 %v2229, %v2229
    %v2311 = vmul.f32 %v2231, %v2231
    %v2312 = vmul.f32 %v2234, %v2234
    %v2313 = vmul.f32 %v2236, %v2236
    %v2314 = vmul.f32 %v2239, %v2239
    %v2315 = vmul.f32 %v2241, %v2241
    %v2316 = vmul.f32 %v2244, %v2244
    %v2317 = vmul.f32 %v2246, %v2246
    %v2318 = vmul.f32 %v2249, %v2249
    %v2319 = vmul.f32 %v2251, %v2251
    %v2320 = vmul.f32 %v2254, %v2254
    %v2321 = vmul.f32 %v2256, %v2256
    %v2322 = vld [vmem:[#allocation7] sm:$0xff]
    %v2323 = vld [vmem:[#allocation7 + $0x8] sm:$0xff]
    %v2324 = vld [vmem:[#allocation7 + $0x10] sm:$0xff]
    %v2325 = vld [vmem:[#allocation7 + $0x18] sm:$0xff]
    %v2326 = vld [vmem:[#allocation7 + $0x20] sm:$0xff]
    %v2327 = vld [vmem:[#allocation7 + $0x28] sm:$0xff]
    %v2328 = vld [vmem:[#allocation7 + $0x30] sm:$0xff]
    %v2329 = vld [vmem:[#allocation7 + $0x38] sm:$0xff]
    %v2330 = vld [vmem:[#allocation7 + $0x40] sm:$0xff]
    %v2331 = vld [vmem:[#allocation7 + $0x48] sm:$0xff]
    %v2332 = vld [vmem:[#allocation7 + $0x50] sm:$0xff]
    %v2333 = vld [vmem:[#allocation7 + $0x58] sm:$0xff]
    %v2334 = vld [vmem:[#allocation7 + $0x60] sm:$0xff]
    %v2335 = vld [vmem:[#allocation7 + $0x68] sm:$0xff]
    %v2336 = vpack.c.bf16 %v2259, %v2258
    %v2337 = vpack.c.bf16 %v2261, %v2260
    %v2338 = vpack.c.bf16 %v2263, %v2262
    %v2339 = vpack.c.bf16 %v2265, %v2264
    %v2340 = vpack.c.bf16 %v2267, %v2266
    %v2341 = vpack.c.bf16 %v2269, %v2268
    %v2342 = vpack.c.bf16 %v2271, %v2270
    %v2343 = vpack.c.bf16 %v2273, %v2272
    %v2344 = vpack.c.bf16 %v2275, %v2274
    %v2345 = vpack.c.bf16 %v2277, %v2276
    %v2346 = vpack.c.bf16 %v2279, %v2278
    %v2347 = vpack.c.bf16 %v2281, %v2280
    %v2348 = vpack.c.bf16 %v2283, %v2282
    %v2349 = vpack.c.bf16 %v2285, %v2284
    %v2350 = vpack.c.bf16 %v2287, %v2286
    %v2351 = vpack.c.bf16 %v2289, %v2288
    %v2352 = vpack.c.bf16 %v2291, %v2290
    %v2353 = vpack.c.bf16 %v2293, %v2292
    %v2354 = vpack.c.bf16 %v2295, %v2294
    %v2355 = vpack.c.bf16 %v2297, %v2296
    %v2356 = vpack.c.bf16 %v2299, %v2298
    %v2357 = vpack.c.bf16 %v2301, %v2300
    %v2358 = vpack.c.bf16 %v2303, %v2302
    %v2359 = vpack.c.bf16 %v2305, %v2304
    %v2360 = vpack.c.bf16 %v2307, %v2306
    %v2361 = vpack.c.bf16 %v2309, %v2308
    %v2362 = vpack.c.bf16 %v2311, %v2310
    %v2363 = vpack.c.bf16 %v2313, %v2312
    %v2364 = vpack.c.bf16 %v2315, %v2314
    %v2365 = vpack.c.bf16 %v2317, %v2316
    %v2366 = vpack.c.bf16 %v2319, %v2318
    %v2367 = vpack.c.bf16 %v2321, %v2320
    %v2382 = vunpack.c.l.b16 %v2322
    %v2383 = vunpack.c.h.b16 %v2322
    %v2384 = vunpack.c.l.b16 %v2323
    %v2385 = vunpack.c.h.b16 %v2323
    %v2386 = vunpack.c.l.b16 %v2324
    %v2387 = vunpack.c.h.b16 %v2324
    %v2388 = vunpack.c.l.b16 %v2325
    %v2389 = vunpack.c.h.b16 %v2325
    %v2390 = vunpack.c.l.b16 %v2326
    %v2391 = vunpack.c.h.b16 %v2326
    %v2392 = vunpack.c.l.b16 %v2327
    %v2393 = vunpack.c.h.b16 %v2327
    %v2394 = vunpack.c.l.b16 %v2328
    %v2395 = vunpack.c.h.b16 %v2328
    %v2396 = vunpack.c.l.b16 %v2329
    %v2397 = vunpack.c.h.b16 %v2329
    %v2398 = vunpack.c.l.b16 %v2330
    %v2399 = vunpack.c.h.b16 %v2330
    %v2400 = vunpack.c.l.b16 %v2331
    %v2401 = vunpack.c.h.b16 %v2331
    %v2402 = vunpack.c.l.b16 %v2332
    %v2403 = vunpack.c.h.b16 %v2332
    %v2404 = vunpack.c.l.b16 %v2333
    %v2405 = vunpack.c.h.b16 %v2333
    %v2406 = vunpack.c.l.b16 %v2334
    %v2407 = vunpack.c.h.b16 %v2334
    %v2408 = vunpack.c.l.b16 %v2335
    %v2409 = vunpack.c.h.b16 %v2335
    %v2410 = vpack.c.b16 %v2386, %v2382
    %v2411 = vpack.c.b16 %v2387, %v2383
    %v2412 = vpack.c.b16 %v2388, %v2384
    %v2413 = vpack.c.b16 %v2389, %v2385
    %v2414 = vpack.c.b16 %v2394, %v2390
    %v2415 = vpack.c.b16 %v2395, %v2391
    %v2416 = vpack.c.b16 %v2396, %v2392
    %v2417 = vpack.c.b16 %v2397, %v2393
    %v2418 = vpack.c.b16 %v2402, %v2398
    %v2419 = vpack.c.b16 %v2403, %v2399
    %v2420 = vpack.c.b16 %v2404, %v2400
    %v2421 = vpack.c.b16 %v2405, %v2401
    %v2422 = vpack.c.b16 %v2406, %v2406
    %v2423 = vpack.c.b16 %v2407, %v2407
    %v2424 = vpack.c.b16 %v2408, %v2408
    %v2425 = vpack.c.b16 %v2409, %v2409
    %2442 = vmatpush.bf16.msra.mxu0 %v2343
    %2443 = vmatpush.bf16.msra.mxu0 %v2342
    %2444 = vmatpush.bf16.msra.mxu0 %v2341
    %2445 = vmatpush.bf16.msra.mxu0 %v2340
    %2446 = vmatpush.bf16.msra.mxu0 %v2339
    %2447 = vmatpush.bf16.msra.mxu0 %v2338
    %2448 = vmatpush.bf16.msra.mxu0 %v2337
    %2449 = vmatpush.bf16.msra.mxu0 %v2336
    %2450 = vmatmul.bf16.gmra.mxu0 %v2410
    %v2451 = vpop.f32.mrf.mxu0
    %v2452 = vadd.f32 0.0, %v2451
    %v2453 = vpop.f32.mrf.mxu0
    %v2454 = vadd.f32 0.0, %v2453
    %2455 = vmatmul.bf16.gmra.mxu0 %v2414
    %v2456 = vpop.f32.mrf.mxu0
    %v2457 = vadd.f32 0.0, %v2456
    %v2458 = vpop.f32.mrf.mxu0
    %v2459 = vadd.f32 0.0, %v2458
    %2460 = vmatmul.bf16.gmra.mxu0 %v2418
    %v2461 = vpop.f32.mrf.mxu0
    %v2462 = vadd.f32 0.0, %v2461
    %v2463 = vpop.f32.mrf.mxu0
    %v2464 = vadd.f32 0.0, %v2463
    %2465 = vmatmul.bf16.gmra.mxu0 %v2422
    %v2466 = vpop.f32.mrf.mxu0
    %v2467 = vadd.f32 0.0, %v2466
    %v2468 = vpop.f32.mrf.mxu0
    %2469 = vdwg.mxu0
    %2470 = vmatpush.bf16.msra.mxu0 %v2351
    %2471 = vmatpush.bf16.msra.mxu0 %v2350
    %2472 = vmatpush.bf16.msra.mxu0 %v2349
    %2473 = vmatpush.bf16.msra.mxu0 %v2348
    %2474 = vmatpush.bf16.msra.mxu0 %v2347
    %2475 = vmatpush.bf16.msra.mxu0 %v2346
    %2476 = vmatpush.bf16.msra.mxu0 %v2345
    %2477 = vmatpush.bf16.msra.mxu0 %v2344
    %2478 = vmatmul.bf16.gmra.mxu0 %v2411
    %v2479 = vpop.f32.mrf.mxu0
    %v2480 = vadd.f32 %v2452, %v2479
    %v2481 = vpop.f32.mrf.mxu0
    %v2482 = vadd.f32 %v2454, %v2481
    %2483 = vmatmul.bf16.gmra.mxu0 %v2415
    %v2484 = vpop.f32.mrf.mxu0
    %v2485 = vadd.f32 %v2457, %v2484
    %v2486 = vpop.f32.mrf.mxu0
    %v2487 = vadd.f32 %v2459, %v2486
    %2488 = vmatmul.bf16.gmra.mxu0 %v2419
    %v2489 = vpop.f32.mrf.mxu0
    %v2490 = vadd.f32 %v2462, %v2489
    %v2491 = vpop.f32.mrf.mxu0
    %v2492 = vadd.f32 %v2464, %v2491
    %2493 = vmatmul.bf16.gmra.mxu0 %v2423
    %v2494 = vpop.f32.mrf.mxu0
    %v2495 = vadd.f32 %v2467, %v2494
    %v2496 = vpop.f32.mrf.mxu0
    %2497 = vdwg.mxu0
    %2498 = vmatpush.bf16.msra.mxu0 %v2359
    %2499 = vmatpush.bf16.msra.mxu0 %v2358
    %2500 = vmatpush.bf16.msra.mxu0 %v2357
    %2501 = vmatpush.bf16.msra.mxu0 %v2356
    %2502 = vmatpush.bf16.msra.mxu0 %v2355
    %2503 = vmatpush.bf16.msra.mxu0 %v2354
    %2504 = vmatpush.bf16.msra.mxu0 %v2353
    %2505 = vmatpush.bf16.msra.mxu0 %v2352
    %2506 = vmatmul.bf16.gmra.mxu0 %v2412
    %v2507 = vpop.f32.mrf.mxu0
    %v2508 = vadd.f32 %v2480, %v2507
    %v2509 = vpop.f32.mrf.mxu0
    %v2510 = vadd.f32 %v2482, %v2509
    %2511 = vmatmul.bf16.gmra.mxu0 %v2416
    %v2512 = vpop.f32.mrf.mxu0
    %v2513 = vadd.f32 %v2485, %v2512
    %v2514 = vpop.f32.mrf.mxu0
    %v2515 = vadd.f32 %v2487, %v2514
    %2516 = vmatmul.bf16.gmra.mxu0 %v2420
    %v2517 = vpop.f32.mrf.mxu0
    %v2518 = vadd.f32 %v2490, %v2517
    %v2519 = vpop.f32.mrf.mxu0
    %v2520 = vadd.f32 %v2492, %v2519
    %2521 = vmatmul.bf16.gmra.mxu0 %v2424
    %v2522 = vpop.f32.mrf.mxu0
    %v2523 = vadd.f32 %v2495, %v2522
    %v2524 = vpop.f32.mrf.mxu0
    %2525 = vdwg.mxu0
    %2526 = vmatpush.bf16.msra.mxu0 %v2367
    %2527 = vmatpush.bf16.msra.mxu0 %v2366
    %2528 = vmatpush.bf16.msra.mxu0 %v2365
    %2529 = vmatpush.bf16.msra.mxu0 %v2364
    %2530 = vmatpush.bf16.msra.mxu0 %v2363
    %2531 = vmatpush.bf16.msra.mxu0 %v2362
    %2532 = vmatpush.bf16.msra.mxu0 %v2361
    %2533 = vmatpush.bf16.msra.mxu0 %v2360
    %2534 = vmatmul.bf16.gmra.mxu0 %v2413
    %v2535 = vpop.f32.mrf.mxu0
    %v2536 = vadd.f32 %v2508, %v2535
    %v2537 = vpop.f32.mrf.mxu0
    %v2538 = vadd.f32 %v2510, %v2537
    %2539 = vmatmul.bf16.gmra.mxu0 %v2417
    %v2540 = vpop.f32.mrf.mxu0
    %v2541 = vadd.f32 %v2513, %v2540
    %v2542 = vpop.f32.mrf.mxu0
    %v2543 = vadd.f32 %v2515, %v2542
    %2544 = vmatmul.bf16.gmra.mxu0 %v2421
    %v2545 = vpop.f32.mrf.mxu0
    %v2546 = vadd.f32 %v2518, %v2545
    %v2547 = vpop.f32.mrf.mxu0
    %v2548 = vadd.f32 %v2520, %v2547
    %2549 = vmatmul.bf16.gmra.mxu0 %v2425
    %v2550 = vpop.f32.mrf.mxu0
    %v2551 = vadd.f32 %v2523, %v2550
    %v2552 = vpop.f32.mrf.mxu0
    %2553 = vdwg.mxu0
    %v2554 = vmax.f32 %v2536, 1e-06
    %v2555 = vmax.f32 %v2538, 1e-06
    %v2556 = vmax.f32 %v2541, 1e-06
    %v2557 = vmax.f32 %v2543, 1e-06
    %v2558 = vmax.f32 %v2546, 1e-06
    %v2559 = vmax.f32 %v2548, 1e-06
    %v2560 = vmax.f32 %v2551, 1e-06
    %v2561 = vlog2.pop %v2554
    %v2562 = vmul.f32 %v2561, 0.6931472
    %v2563 = vlog2.pop %v2555
    %v2564 = vmul.f32 %v2563, 0.6931472
    %v2565 = vlog2.pop %v2556
    %v2566 = vmul.f32 %v2565, 0.6931472
    %v2567 = vlog2.pop %v2557
    %v2568 = vmul.f32 %v2567, 0.6931472
    %v2569 = vlog2.pop %v2558
    %v2570 = vmul.f32 %v2569, 0.6931472
    %v2571 = vlog2.pop %v2559
    %v2572 = vmul.f32 %v2571, 0.6931472
    %v2573 = vlog2.pop %v2560
    %v2574 = vmul.f32 %v2573, 0.6931472
    %v2575 = vld [vmem:[%s3] sm:$0x3]
    %v2576 = vpack.c.bf16 %v2564, %v2562
    %v2577 = vpack.c.bf16 %v2568, %v2566
    %v2578 = vpack.c.bf16 %v2572, %v2570
    %v2579 = vpack.c.bf16 %v2574, %v2574
    %v2580 = vld [vmem:[%s4] sm:$0xf]
    %2582 = vset.pattern.permute.xlu0 0
    %2583 = vperm.xlu0 %2582, %v2580
    %v2584 = vpop.permute.xlu0 %2583
    %vm2586 = vcmask 457728
    %v2588 = vsel %vm2586, %v2575, 0
    %vm2590 = vcmask 1043456
    %v2592 = vsel %vm2590, %v2579, 0
    %2594 = vmatpush.bf16.msra.mxu0 0
    %2595 = vmatpush.bf16.msra.mxu0 0
    %2596 = vmatpush.bf16.msra.mxu0 0
    %2597 = vmatpush.bf16.msra.mxu0 0
    %2598 = vmatpush.bf16.msra.mxu0 %v2592
    %2599 = vmatpush.bf16.msra.mxu0 %v2578
    %2600 = vmatpush.bf16.msra.mxu0 %v2577
    %2601 = vmatpush.bf16.msra.mxu0 %v2576
    %2602 = vmatmul.bf16.gmra.mxu0 %v2588
    %v2603 = vpop.f32.mrf.mxu0
    %v2604 = vadd.f32 %v2584, %v2603
    %v2605 = vpop.f32.mrf.mxu0
    %2606 = vdwg.mxu0
    %v2607 = vsel %vm2590, %v2604, -inf
    %v2608 = vrot.slane %v2607, 4
    %v2609 = vmax.f32 %v2607, %v2608
    %v2610 = vrot.slane %v2609, 2
    %v2611 = vmax.f32 %v2609, %v2610
    %v2612 = vrot.slane %v2611, 1
    %v2613 = vmax.f32 %v2611, %v2612
    %v2614 = vsub.f32 %v2604, %v2613
    %v2615 = vmul.f32 %v2614, 1.442695
    %v2616 = vpow.pop %v2615
    %v2617 = vsel %vm2590, %v2616, 0.0
    %v2618 = vrot.slane %v2617, 4
    %v2619 = vadd.f32 %v2617, %v2618
    %v2620 = vrot.slane %v2619, 2
    %v2621 = vadd.f32 %v2619, %v2620
    %v2622 = vrot.slane %v2621, 1
    %v2623 = vadd.f32 %v2621, %v2622
    %v2624 = vlog2.pop %v2623
    %v2625 = vmul.f32 %v2624, 0.6931472
    %v2626 = vadd.f32 %v2625, %v2613
    %v2627 = vsub.f32 %v2604, %v2626
    %2628 = vst [vmem:[#allocation8] sm:$0xf] %v2627
    // Predicated region
    $region34: #{tpu_custom_call.1} parent=1 // pred_check
      _
    $region35: #{tpu_custom_call.1} parent=1 // pred_check_branch
      %2630 = sbr.rel (0) target = $region37
    $region36: #{tpu_custom_call.1} parent=1 // pred_region
      %2632 = vsyncadd [#allocation4], 0
      %s2634 = sshll.u32 [#allocation8], 4
      %s2635 = int_to_ptr.vmem [resolvable:$true] %s2634
      %s2636 = sshll.u32 %s5, 4
      %s2637 = int_to_ptr.hbm [resolvable:$true] %s2636
      %2639 = dma.vmem_to_hbm [thread:$0]  %s2635, 64, %s2637, [#allocation4]
    $region37: #{tpu_custom_call.1} parent=1 // pred_fallthru
      _
    // Predicated region
    $region38: #{tpu_custom_call.1} parent=1 // pred_check
      _
    $region39: #{tpu_custom_call.1} parent=1 // pred_check_branch
      %2641 = sbr.rel (0) target = $region41
    $region40: #{tpu_custom_call.1} parent=1 // pred_region
      %2643 = dma.done [#allocation4], 64
    $region41: #{tpu_custom_call.1} parent=1 // pred_fallthru
      _
    %2644 = vsyncpa [#allocation3], 1
    %2645 = vsyncpa [#allocation6], 1
    %2646 = vsyncpa [#allocation4], 1

// kernel: tpu_custom_call.1
$region0: #{tpu_custom_call.1}
  #allocation0 [shape = 'u32[]', space=smem, size = 0x4, offset = 0x4, fixed_abs, tag = 'smem constant byte address 0x4 - core index']
  #allocation1 [shape = 'u32[72,128]{1,0:T(1,128)}', space=vmem, size = 0x9000, scoped, tag = 'internal scratch']
  %s0 = inlined_call_operand.hbm [shape: bf16[640,128], index: 0, kind: input, shape index: {}]
  %s1 = inlined_call_operand.hbm [shape: bf16[512,640], index: 1, kind: input, shape index: {}]
  %s2 = inlined_call_operand.hbm [shape: bf16[56,512], index: 2, kind: input, shape index: {}]
  %s3 = inlined_call_operand.vmem [shape: bf16[4,56], index: 3, kind: input, shape index: {}]
  %s4 = inlined_call_operand.vmem [shape: f32[4,1], index: 4, kind: input, shape index: {}]
  %s5 = inlined_call_operand.hbm [shape: f32[4,128], index: 5, kind: output, shape index: {}]
  %s6 = sld [smem:[#allocation0]]
  $region42: #{tpu_custom_call.1} parent=0
    _
  %s8 = ssub.s32 1, %s6
  %s9 = scalar_select 0, %s8, %s6
  $region1: #{tpu_custom_call.1} parent=0
    #allocation2 [shape = 'u8[163840]{0}', space=vmem, size = 0x28000, scoped, tag = 'input window, operand 0, single buffered']
    #allocation3 [shape = 's32[1]{0}', space=sflag, size = 0x4, scoped, tag = 'scoped memory for tpu_custom_call.1']
    #allocation4 [shape = 's32[1]{0}', space=sflag, size = 0x4, scoped, tag = 'scoped memory for tpu_custom_call.1']
    #allocation5 [shape = 'u8[655360]{0}', space=vmem, size = 0xa0000, scoped, tag = 'input window, operand 1, single buffered']
    #allocation6 [shape = 's32[1]{0}', space=sflag, size = 0x4, scoped, tag = 'scoped memory for tpu_custom_call.1']
    #allocation7 [shape = 'u8[57344]{0}', space=vmem, size = 0xe000, scoped, tag = 'input window, operand 2, single buffered']
    #allocation8 [shape = 'u8[2048]{0}', space=vmem, size = 0x800, scoped, tag = 'output window, operand 0, single buffered']
    %10 = vsyncpa [#allocation3], 0
    %11 = vsyncpa [#allocation6], 0
    %12 = vsyncpa [#allocation4], 0
    // Predicated region
    $region2: #{tpu_custom_call.1} parent=1 // pred_check
      _
    $region3: #{tpu_custom_call.1} parent=1 // pred_check_branch
      %14 = sbr.rel (0) target = $region5
    $region4: #{tpu_custom_call.1} parent=1 // pred_region
      %16 = vsyncadd [#allocation3], 0
      %s17 = sshll.u32 %s0, 4
      %s18 = int_to_ptr.hbm [resolvable:$true] %s17
      %s19 = sshll.u32 [#allocation2], 4
      %s20 = int_to_ptr.vmem [resolvable:$true] %s19
      %25 = dma.hbm_to_vmem [thread:$0]  %s18, 5120, %s20, [#allocation3], 64, 64, 4
    $region5: #{tpu_custom_call.1} parent=1 // pred_fallthru
      _
    // Predicated region
    $region6: #{tpu_custom_call.1} parent=1 // pred_check
      _
    $region7: #{tpu_custom_call.1} parent=1 // pred_check_branch
      %27 = sbr.rel (0) target = $region9
    $region8: #{tpu_custom_call.1} parent=1 // pred_region
      %29 = vsyncadd [#allocation6], 0
      %s30 = sshll.u32 %s1, 4
      %s31 = int_to_ptr.hbm [resolvable:$true] %s30
      %s32 = sshll.u32 [#allocation5], 4
      %s33 = int_to_ptr.vmem [resolvable:$true] %s32
      %38 = dma.hbm_to_vmem [thread:$0]  %s31, 20480, %s33, [#allocation6], 320, 320, 20
    $region9: #{tpu_custom_call.1} parent=1 // pred_fallthru
      _
    // Predicated region
    $region10: #{tpu_custom_call.1} parent=1 // pred_check
      _
    $region11: #{tpu_custom_call.1} parent=1 // pred_check_branch
      %40 = sbr.rel (0) target = $region13
    $region12: #{tpu_custom_call.1} parent=1 // pred_region
      %42 = vsyncadd [#allocation6], 0
      %s43 = sshll.u32 %s2, 4
      %s44 = int_to_ptr.hbm [resolvable:$true] %s43
      %s45 = sshll.u32 [#allocation7], 4
      %s46 = int_to_ptr.vmem [resolvable:$true] %s45
      %51 = dma.hbm_to_vmem [thread:$0]  %s44, 1792, %s46, [#allocation6], 256, 256, 16
    $region13: #{tpu_custom_call.1} parent=1 // pred_fallthru
      _
    // Predicated region
    $region14: #{tpu_custom_call.1} parent=1 // pred_check
      _
    $region15: #{tpu_custom_call.1} parent=1 // pred_check_branch
      %53 = sbr.rel (0) target = $region17
    $region16: #{tpu_custom_call.1} parent=1 // pred_region
      _
    $region17: #{tpu_custom_call.1} parent=1 // pred_fallthru
      _
    // Predicated region
    $region18: #{tpu_custom_call.1} parent=1 // pred_check
      _
    $region19: #{tpu_custom_call.1} parent=1 // pred_check_branch
      %55 = sbr.rel (0) target = $region21
    $region20: #{tpu_custom_call.1} parent=1 // pred_region
      _
    $region21: #{tpu_custom_call.1} parent=1 // pred_fallthru
      _
    // Predicated region
    $region22: #{tpu_custom_call.1} parent=1 // pred_check
      _
    $region23: #{tpu_custom_call.1} parent=1 // pred_check_branch
      %57 = sbr.rel (0) target = $region25
    $region24: #{tpu_custom_call.1} parent=1 // pred_region
      %59 = dma.done [#allocation3], 5120
    $region25: #{tpu_custom_call.1} parent=1 // pred_fallthru
      _
    // Predicated region
    $region26: #{tpu_custom_call.1} parent=1 // pred_check
      _
    $region27: #{tpu_custom_call.1} parent=1 // pred_check_branch
      %61 = sbr.rel (0) target = $region29
    $region28: #{tpu_custom_call.1} parent=1 // pred_region
      %63 = dma.done [#allocation6], 20480
    $region29: #{tpu_custom_call.1} parent=1 // pred_fallthru
      _
    // Predicated region
    $region30: #{tpu_custom_call.1} parent=1 // pred_check
      _
    $region31: #{tpu_custom_call.1} parent=1 // pred_check_branch
      %65 = sbr.rel (0) target = $region33
    $region32: #{tpu_custom_call.1} parent=1 // pred_region
      %67 = dma.done [#allocation6], 1792
    $region33: #{tpu_custom_call.1} parent=1 // pred_fallthru
      _
    %v69 = vld [vmem:[#allocation5] sm:$0xff]
    %v70 = vld [vmem:[#allocation5 + $0x8] sm:$0xff]
    %v71 = vld [vmem:[#allocation5 + $0x10] sm:$0xf]
    %v72 = vld [vmem:[#allocation5 + $0x14] sm:$0xff]
    %v73 = vld [vmem:[#allocation5 + $0x1c] sm:$0xff]
    %v74 = vld [vmem:[#allocation5 + $0x24] sm:$0xf]
    %v75 = vld [vmem:[#allocation5 + $0x28] sm:$0xff]
    %v76 = vld [vmem:[#allocation5 + $0x30] sm:$0xff]
    %v77 = vld [vmem:[#allocation5 + $0x38] sm:$0xf]
    %v78 = vld [vmem:[#allocation5 + $0x3c] sm:$0xff]
    %v79 = vld [vmem:[#allocation5 + $0x44] sm:$0xff]
    %v80 = vld [vmem:[#allocation5 + $0x4c] sm:$0xf]
    %v81 = vld [vmem:[#allocation5 + $0x50] sm:$0xff]
    %v82 = vld [vmem:[#allocation5 + $0x58] sm:$0xff]
    %v83 = vld [vmem:[#allocation5 + $0x60] sm:$0xf]
    %v84 = vld [vmem:[#allocation5 + $0x64] sm:$0xff]
    %v85 = vld [vmem:[#allocation5 + $0x6c] sm:$0xff]
    %v86 = vld [vmem:[#allocation5 + $0x74] sm:$0xf]
    %v87 = vld [vmem:[#allocation5 + $0x78] sm:$0xff]
    %v88 = vld [vmem:[#allocation5 + $0x80] sm:$0xff]
    %v89 = vld [vmem:[#allocation5 + $0x88] sm:$0xf]
    %v90 = vld [vmem:[#allocation5 + $0x8c] sm:$0xff]
    %v91 = vld [vmem:[#allocation5 + $0x94] sm:$0xff]
    %v92 = vld [vmem:[#allocation5 + $0x9c] sm:$0xf]
    %v93 = vld [vmem:[#allocation5 + $0xa0] sm:$0xff]
    %v94 = vld [vmem:[#allocation5 + $0xa8] sm:$0xff]
    %v95 = vld [vmem:[#allocation5 + $0xb0] sm:$0xf]
    %v96 = vld [vmem:[#allocation5 + $0xb4] sm:$0xff]
    %v97 = vld [vmem:[#allocation5 + $0xbc] sm:$0xff]
    %v98 = vld [vmem:[#allocation5 + $0xc4] sm:$0xf]
    %v99 = vld [vmem:[#allocation5 + $0xc8] sm:$0xff]
    %v100 = vld [vmem:[#allocation5 + $0xd0] sm:$0xff]
    %v101 = vld [vmem:[#allocation5 + $0xd8] sm:$0xf]
    %v102 = vld [vmem:[#allocation5 + $0xdc] sm:$0xff]
    %v103 = vld [vmem:[#allocation5 + $0xe4] sm:$0xff]
    %v104 = vld [vmem:[#allocation5 + $0xec] sm:$0xf]
    %v105 = vld [vmem:[#allocation5 + $0xf0] sm:$0xff]
    %v106 = vld [vmem:[#allocation5 + $0xf8] sm:$0xff]
    %v107 = vld [vmem:[#allocation5 + $0x100] sm:$0xf]
    %v108 = vld [vmem:[#allocation5 + $0x104] sm:$0xff]
    %v109 = vld [vmem:[#allocation5 + $0x10c] sm:$0xff]
    %v110 = vld [vmem:[#allocation5 + $0x114] sm:$0xf]
    %v111 = vld [vmem:[#allocation5 + $0x118] sm:$0xff]
    %v112 = vld [vmem:[#allocation5 + $0x120] sm:$0xff]
    %v113 = vld [vmem:[#allocation5 + $0x128] sm:$0xf]
    %v114 = vld [vmem:[#allocation5 + $0x12c] sm:$0xff]
    %v115 = vld [vmem:[#allocation5 + $0x134] sm:$0xff]
    %v116 = vld [vmem:[#allocation5 + $0x13c] sm:$0xf]
    %v117 = vld [vmem:[#allocation5 + $0x140] sm:$0xff]
    %v118 = vld [vmem:[#allocation5 + $0x148] sm:$0xff]
    %v119 = vld [vmem:[#allocation5 + $0x150] sm:$0xf]
    %v120 = vld [vmem:[#allocation5 + $0x154] sm:$0xff]
    %v121 = vld [vmem:[#allocation5 + $0x15c] sm:$0xff]
    %v122 = vld [vmem:[#allocation5 + $0x164] sm:$0xf]
    %v123 = vld [vmem:[#allocation5 + $0x168] sm:$0xff]
    %v124 = vld [vmem:[#allocation5 + $0x170] sm:$0xff]
    %v125 = vld [vmem:[#allocation5 + $0x178] sm:$0xf]
    %v126 = vld [vmem:[#allocation5 + $0x17c] sm:$0xff]
    %v127 = vld [vmem:[#allocation5 + $0x184] sm:$0xff]
    %v128 = vld [vmem:[#allocation5 + $0x18c] sm:$0xf]
    %v129 = vld [vmem:[#allocation5 + $0x190] sm:$0xff]
    %v130 = vld [vmem:[#allocation5 + $0x198] sm:$0xff]
    %v131 = vld [vmem:[#allocation5 + $0x1a0] sm:$0xf]
    %v132 = vld [vmem:[#allocation5 + $0x1a4] sm:$0xff]
    %v133 = vld [vmem:[#allocation5 + $0x1ac] sm:$0xff]
    %v134 = vld [vmem:[#allocation5 + $0x1b4] sm:$0xf]
    %v135 = vld [vmem:[#allocation5 + $0x1b8] sm:$0xff]
    %v136 = vld [vmem:[#allocation5 + $0x1c0] sm:$0xff]
    %v137 = vld [vmem:[#allocation5 + $0x1c8] sm:$0xf]
    %v138 = vld [vmem:[#allocation5 + $0x1cc] sm:$0xff]
    %v139 = vld [vmem:[#allocation5 + $0x1d4] sm:$0xff]
    %v140 = vld [vmem:[#allocation5 + $0x1dc] sm:$0xf]
    %v141 = vld [vmem:[#allocation5 + $0x1e0] sm:$0xff]
    %v142 = vld [vmem:[#allocation5 + $0x1e8] sm:$0xff]
    %v143 = vld [vmem:[#allocation5 + $0x1f0] sm:$0xf]
    %v144 = vld [vmem:[#allocation5 + $0x1f4] sm:$0xff]
    %v145 = vld [vmem:[#allocation5 + $0x1fc] sm:$0xff]
    %v146 = vld [vmem:[#allocation5 + $0x204] sm:$0xf]
    %v147 = vld [vmem:[#allocation5 + $0x208] sm:$0xff]
    %v148 = vld [vmem:[#allocation5 + $0x210] sm:$0xff]
    %v149 = vld [vmem:[#allocation5 + $0x218] sm:$0xf]
    %v150 = vld [vmem:[#allocation5 + $0x21c] sm:$0xff]
    %v151 = vld [vmem:[#allocation5 + $0x224] sm:$0xff]
    %v152 = vld [vmem:[#allocation5 + $0x22c] sm:$0xf]
    %v153 = vld [vmem:[#allocation5 + $0x230] sm:$0xff]
    %v154 = vld [vmem:[#allocation5 + $0x238] sm:$0xff]
    %v155 = vld [vmem:[#allocation5 + $0x240] sm:$0xf]
    %v156 = vld [vmem:[#allocation5 + $0x244] sm:$0xff]
    %v157 = vld [vmem:[#allocation5 + $0x24c] sm:$0xff]
    %v158 = vld [vmem:[#allocation5 + $0x254] sm:$0xf]
    %v159 = vld [vmem:[#allocation5 + $0x258] sm:$0xff]
    %v160 = vld [vmem:[#allocation5 + $0x260] sm:$0xff]
    %v161 = vld [vmem:[#allocation5 + $0x268] sm:$0xf]
    %v162 = vld [vmem:[#allocation5 + $0x26c] sm:$0xff]
    %v163 = vld [vmem:[#allocation5 + $0x274] sm:$0xff]
    %v164 = vld [vmem:[#allocation5 + $0x27c] sm:$0xf]
    %v165 = vld [vmem:[#allocation5 + $0x280] sm:$0xff]
    %v166 = vld [vmem:[#allocation5 + $0x288] sm:$0xff]
    %v167 = vld [vmem:[#allocation5 + $0x290] sm:$0xf]
    %v168 = vld [vmem:[#allocation5 + $0x294] sm:$0xff]
    %v169 = vld [vmem:[#allocation5 + $0x29c] sm:$0xff]
    %v170 = vld [vmem:[#allocation5 + $0x2a4] sm:$0xf]
    %v171 = vld [vmem:[#allocation5 + $0x2a8] sm:$0xff]
    %v172 = vld [vmem:[#allocation5 + $0x2b0] sm:$0xff]
    %v173 = vld [vmem:[#allocation5 + $0x2b8] sm:$0xf]
    %v174 = vld [vmem:[#allocation5 + $0x2bc] sm:$0xff]
    %v175 = vld [vmem:[#allocation5 + $0x2c4] sm:$0xff]
    %v176 = vld [vmem:[#allocation5 + $0x2cc] sm:$0xf]
    %v177 = vld [vmem:[#allocation5 + $0x2d0] sm:$0xff]
    %v178 = vld [vmem:[#allocation5 + $0x2d8] sm:$0xff]
    %v179 = vld [vmem:[#allocation5 + $0x2e0] sm:$0xf]
    %v180 = vld [vmem:[#allocation5 + $0x2e4] sm:$0xff]
    %v181 = vld [vmem:[#allocation5 + $0x2ec] sm:$0xff]
    %v182 = vld [vmem:[#allocation5 + $0x2f4] sm:$0xf]
    %v183 = vld [vmem:[#allocation5 + $0x2f8] sm:$0xff]
    %v184 = vld [vmem:[#allocation5 + $0x300] sm:$0xff]
    %v185 = vld [vmem:[#allocation5 + $0x308] sm:$0xf]
    %v186 = vld [vmem:[#allocation5 + $0x30c] sm:$0xff]
    %v187 = vld [vmem:[#allocation5 + $0x314] sm:$0xff]
    %v188 = vld [vmem:[#allocation5 + $0x31c] sm:$0xf]
    %v189 = vld [vmem:[#allocation5 + $0x320] sm:$0xff]
    %v190 = vld [vmem:[#allocation5 + $0x328] sm:$0xff]
    %v191 = vld [vmem:[#allocation5 + $0x330] sm:$0xf]
    %v192 = vld [vmem:[#allocation5 + $0x334] sm:$0xff]
    %v193 = vld [vmem:[#allocation5 + $0x33c] sm:$0xff]
    %v194 = vld [vmem:[#allocation5 + $0x344] sm:$0xf]
    %v195 = vld [vmem:[#allocation5 + $0x348] sm:$0xff]
    %v196 = vld [vmem:[#allocation5 + $0x350] sm:$0xff]
    %v197 = vld [vmem:[#allocation5 + $0x358] sm:$0xf]
    %v198 = vld [vmem:[#allocation5 + $0x35c] sm:$0xff]
    %v199 = vld [vmem:[#allocation5 + $0x364] sm:$0xff]
    %v200 = vld [vmem:[#allocation5 + $0x36c] sm:$0xf]
    %v201 = vld [vmem:[#allocation5 + $0x370] sm:$0xff]
    %v202 = vld [vmem:[#allocation5 + $0x378] sm:$0xff]
    %v203 = vld [vmem:[#allocation5 + $0x380] sm:$0xf]
    %v204 = vld [vmem:[#allocation5 + $0x384] sm:$0xff]
    %v205 = vld [vmem:[#allocation5 + $0x38c] sm:$0xff]
    %v206 = vld [vmem:[#allocation5 + $0x394] sm:$0xf]
    %v207 = vld [vmem:[#allocation5 + $0x398] sm:$0xff]
    %v208 = vld [vmem:[#allocation5 + $0x3a0] sm:$0xff]
    %v209 = vld [vmem:[#allocation5 + $0x3a8] sm:$0xf]
    %v210 = vld [vmem:[#allocation5 + $0x3ac] sm:$0xff]
    %v211 = vld [vmem:[#allocation5 + $0x3b4] sm:$0xff]
    %v212 = vld [vmem:[#allocation5 + $0x3bc] sm:$0xf]
    %v213 = vld [vmem:[#allocation5 + $0x3c0] sm:$0xff]
    %v214 = vld [vmem:[#allocation5 + $0x3c8] sm:$0xff]
    %v215 = vld [vmem:[#allocation5 + $0x3d0] sm:$0xf]
    %v216 = vld [vmem:[#allocation5 + $0x3d4] sm:$0xff]
    %v217 = vld [vmem:[#allocation5 + $0x3dc] sm:$0xff]
    %v218 = vld [vmem:[#allocation5 + $0x3e4] sm:$0xf]
    %v219 = vld [vmem:[#allocation5 + $0x3e8] sm:$0xff]
    %v220 = vld [vmem:[#allocation5 + $0x3f0] sm:$0xff]
    %v221 = vld [vmem:[#allocation5 + $0x3f8] sm:$0xf]
    %v222 = vld [vmem:[#allocation5 + $0x3fc] sm:$0xff]
    %v223 = vld [vmem:[#allocation5 + $0x404] sm:$0xff]
    %v224 = vld [vmem:[#allocation5 + $0x40c] sm:$0xf]
    %v225 = vld [vmem:[#allocation5 + $0x410] sm:$0xff]
    %v226 = vld [vmem:[#allocation5 + $0x418] sm:$0xff]
    %v227 = vld [vmem:[#allocation5 + $0x420] sm:$0xf]
    %v228 = vld [vmem:[#allocation5 + $0x424] sm:$0xff]
    %v229 = vld [vmem:[#allocation5 + $0x42c] sm:$0xff]
    %v230 = vld [vmem:[#allocation5 + $0x434] sm:$0xf]
    %v231 = vld [vmem:[#allocation5 + $0x438] sm:$0xff]
    %v232 = vld [vmem:[#allocation5 + $0x440] sm:$0xff]
    %v233 = vld [vmem:[#allocation5 + $0x448] sm:$0xf]
    %v234 = vld [vmem:[#allocation5 + $0x44c] sm:$0xff]
    %v235 = vld [vmem:[#allocation5 + $0x454] sm:$0xff]
    %v236 = vld [vmem:[#allocation5 + $0x45c] sm:$0xf]
    %v237 = vld [vmem:[#allocation5 + $0x460] sm:$0xff]
    %v238 = vld [vmem:[#allocation5 + $0x468] sm:$0xff]
    %v239 = vld [vmem:[#allocation5 + $0x470] sm:$0xf]
    %v240 = vld [vmem:[#allocation5 + $0x474] sm:$0xff]
    %v241 = vld [vmem:[#allocation5 + $0x47c] sm:$0xff]
    %v242 = vld [vmem:[#allocation5 + $0x484] sm:$0xf]
    %v243 = vld [vmem:[#allocation5 + $0x488] sm:$0xff]
    %v244 = vld [vmem:[#allocation5 + $0x490] sm:$0xff]
    %v245 = vld [vmem:[#allocation5 + $0x498] sm:$0xf]
    %v246 = vld [vmem:[#allocation5 + $0x49c] sm:$0xff]
    %v247 = vld [vmem:[#allocation5 + $0x4a4] sm:$0xff]
    %v248 = vld [vmem:[#allocation5 + $0x4ac] sm:$0xf]
    %v249 = vld [vmem:[#allocation5 + $0x4b0] sm:$0xff]
    %v250 = vld [vmem:[#allocation5 + $0x4b8] sm:$0xff]
    %v251 = vld [vmem:[#allocation5 + $0x4c0] sm:$0xf]
    %v252 = vld [vmem:[#allocation5 + $0x4c4] sm:$0xff]
    %v253 = vld [vmem:[#allocation5 + $0x4cc] sm:$0xff]
    %v254 = vld [vmem:[#allocation5 + $0x4d4] sm:$0xf]
    %v255 = vld [vmem:[#allocation5 + $0x4d8] sm:$0xff]
    %v256 = vld [vmem:[#allocation5 + $0x4e0] sm:$0xff]
    %v257 = vld [vmem:[#allocation5 + $0x4e8] sm:$0xf]
    %v258 = vld [vmem:[#allocation5 + $0x4ec] sm:$0xff]
    %v259 = vld [vmem:[#allocation5 + $0x4f4] sm:$0xff]
    %v260 = vld [vmem:[#allocation5 + $0x4fc] sm:$0xf]
    %v261 = vld [vmem:[#allocation2] sm:$0xf]
    %v262 = vld [vmem:[#allocation2 + $0x4] sm:$0xf]
    %v263 = vld [vmem:[#allocation2 + $0x8] sm:$0xf]
    %v264 = vld [vmem:[#allocation2 + $0xc] sm:$0xf]
    %v265 = vld [vmem:[#allocation2 + $0x10] sm:$0xf]
    %v266 = vld [vmem:[#allocation2 + $0x14] sm:$0xf]
    %v267 = vld [vmem:[#allocation2 + $0x18] sm:$0xf]
    %v268 = vld [vmem:[#allocation2 + $0x1c] sm:$0xf]
    %v269 = vld [vmem:[#allocation2 + $0x20] sm:$0xf]
    %v270 = vld [vmem:[#allocation2 + $0x24] sm:$0xf]
    %v271 = vld [vmem:[#allocation2 + $0x28] sm:$0xf]
    %v272 = vld [vmem:[#allocation2 + $0x2c] sm:$0xf]
    %v273 = vld [vmem:[#allocation2 + $0x30] sm:$0xf]
    %v274 = vld [vmem:[#allocation2 + $0x34] sm:$0xf]
    %v275 = vld [vmem:[#allocation2 + $0x38] sm:$0xf]
    %v276 = vld [vmem:[#allocation2 + $0x3c] sm:$0xf]
    %v277 = vld [vmem:[#allocation2 + $0x40] sm:$0xf]
    %v278 = vld [vmem:[#allocation2 + $0x44] sm:$0xf]
    %v279 = vld [vmem:[#allocation2 + $0x48] sm:$0xf]
    %v280 = vld [vmem:[#allocation2 + $0x4c] sm:$0xf]
    %v281 = vld [vmem:[#allocation2 + $0x50] sm:$0xf]
    %v282 = vld [vmem:[#allocation2 + $0x54] sm:$0xf]
    %v283 = vld [vmem:[#allocation2 + $0x58] sm:$0xf]
    %v284 = vld [vmem:[#allocation2 + $0x5c] sm:$0xf]
    %v285 = vld [vmem:[#allocation2 + $0x60] sm:$0xf]
    %v286 = vld [vmem:[#allocation2 + $0x64] sm:$0xf]
    %v287 = vld [vmem:[#allocation2 + $0x68] sm:$0xf]
    %v288 = vld [vmem:[#allocation2 + $0x6c] sm:$0xf]
    %v289 = vld [vmem:[#allocation2 + $0x70] sm:$0xf]
    %v290 = vld [vmem:[#allocation2 + $0x74] sm:$0xf]
    %v291 = vld [vmem:[#allocation2 + $0x78] sm:$0xf]
    %v292 = vld [vmem:[#allocation2 + $0x7c] sm:$0xf]
    %v293 = vld [vmem:[#allocation2 + $0x80] sm:$0xf]
    %v294 = vld [vmem:[#allocation2 + $0x84] sm:$0xf]
    %v295 = vld [vmem:[#allocation2 + $0x88] sm:$0xf]
    %v296 = vld [vmem:[#allocation2 + $0x8c] sm:$0xf]
    %v297 = vld [vmem:[#allocation2 + $0x90] sm:$0xf]
    %v298 = vld [vmem:[#allocation2 + $0x94] sm:$0xf]
    %v299 = vld [vmem:[#allocation2 + $0x98] sm:$0xf]
    %v300 = vld [vmem:[#allocation2 + $0x9c] sm:$0xf]
    %v301 = vld [vmem:[#allocation2 + $0xa0] sm:$0xf]
    %v302 = vld [vmem:[#allocation2 + $0xa4] sm:$0xf]
    %v303 = vld [vmem:[#allocation2 + $0xa8] sm:$0xf]
    %v304 = vld [vmem:[#allocation2 + $0xac] sm:$0xf]
    %v305 = vld [vmem:[#allocation2 + $0xb0] sm:$0xf]
    %v306 = vld [vmem:[#allocation2 + $0xb4] sm:$0xf]
    %v307 = vld [vmem:[#allocation2 + $0xb8] sm:$0xf]
    %v308 = vld [vmem:[#allocation2 + $0xbc] sm:$0xf]
    %v309 = vld [vmem:[#allocation2 + $0xc0] sm:$0xf]
    %v310 = vld [vmem:[#allocation2 + $0xc4] sm:$0xf]
    %v311 = vld [vmem:[#allocation2 + $0xc8] sm:$0xf]
    %v312 = vld [vmem:[#allocation2 + $0xcc] sm:$0xf]
    %v313 = vld [vmem:[#allocation2 + $0xd0] sm:$0xf]
    %v314 = vld [vmem:[#allocation2 + $0xd4] sm:$0xf]
    %v315 = vld [vmem:[#allocation2 + $0xd8] sm:$0xf]
    %v316 = vld [vmem:[#allocation2 + $0xdc] sm:$0xf]
    %v317 = vld [vmem:[#allocation2 + $0xe0] sm:$0xf]
    %v318 = vld [vmem:[#allocation2 + $0xe4] sm:$0xf]
    %v319 = vld [vmem:[#allocation2 + $0xe8] sm:$0xf]
    %v320 = vld [vmem:[#allocation2 + $0xec] sm:$0xf]
    %v321 = vld [vmem:[#allocation2 + $0xf0] sm:$0xf]
    %v322 = vld [vmem:[#allocation2 + $0xf4] sm:$0xf]
    %v323 = vld [vmem:[#allocation2 + $0xf8] sm:$0xf]
    %v324 = vld [vmem:[#allocation2 + $0xfc] sm:$0xf]
    %v325 = vld [vmem:[#allocation2 + $0x100] sm:$0xf]
    %v326 = vld [vmem:[#allocation2 + $0x104] sm:$0xf]
    %v327 = vld [vmem:[#allocation2 + $0x108] sm:$0xf]
    %v328 = vld [vmem:[#allocation2 + $0x10c] sm:$0xf]
    %v329 = vld [vmem:[#allocation2 + $0x110] sm:$0xf]
    %v330 = vld [vmem:[#allocation2 + $0x114] sm:$0xf]
    %v331 = vld [vmem:[#allocation2 + $0x118] sm:$0xf]
    %v332 = vld [vmem:[#allocation2 + $0x11c] sm:$0xf]
    %v333 = vld [vmem:[#allocation2 + $0x120] sm:$0xf]
    %v334 = vld [vmem:[#allocation2 + $0x124] sm:$0xf]
    %v335 = vld [vmem:[#allocation2 + $0x128] sm:$0xf]
    %v336 = vld [vmem:[#allocation2 + $0x12c] sm:$0xf]
    %v337 = vld [vmem:[#allocation2 + $0x130] sm:$0xf]
    %v338 = vld [vmem:[#allocation2 + $0x134] sm:$0xf]
    %v339 = vld [vmem:[#allocation2 + $0x138] sm:$0xf]
    %v340 = vld [vmem:[#allocation2 + $0x13c] sm:$0xf]
    %v533 = vunpack.c.l.b16 %v69
    %v534 = vunpack.c.h.b16 %v69
    %v535 = vunpack.c.l.b16 %v70
    %v536 = vunpack.c.h.b16 %v70
    %v537 = vunpack.c.l.b16 %v71
    %v538 = vunpack.c.l.b16 %v72
    %v539 = vunpack.c.h.b16 %v72
    %v540 = vunpack.c.l.b16 %v73
    %v541 = vunpack.c.h.b16 %v73
    %v542 = vunpack.c.l.b16 %v74
    %v543 = vunpack.c.l.b16 %v75
    %v544 = vunpack.c.h.b16 %v75
    %v545 = vunpack.c.l.b16 %v76
    %v546 = vunpack.c.h.b16 %v76
    %v547 = vunpack.c.l.b16 %v77
    %v548 = vunpack.c.l.b16 %v78
    %v549 = vunpack.c.h.b16 %v78
    %v550 = vunpack.c.l.b16 %v79
    %v551 = vunpack.c.h.b16 %v79
    %v552 = vunpack.c.l.b16 %v80
    %v553 = vunpack.c.l.b16 %v81
    %v554 = vunpack.c.h.b16 %v81
    %v555 = vunpack.c.l.b16 %v82
    %v556 = vunpack.c.h.b16 %v82
    %v557 = vunpack.c.l.b16 %v83
    %v558 = vunpack.c.l.b16 %v84
    %v559 = vunpack.c.h.b16 %v84
    %v560 = vunpack.c.l.b16 %v85
    %v561 = vunpack.c.h.b16 %v85
    %v562 = vunpack.c.l.b16 %v86
    %v563 = vunpack.c.l.b16 %v87
    %v564 = vunpack.c.h.b16 %v87
    %v565 = vunpack.c.l.b16 %v88
    %v566 = vunpack.c.h.b16 %v88
    %v567 = vunpack.c.l.b16 %v89
    %v568 = vunpack.c.l.b16 %v90
    %v569 = vunpack.c.h.b16 %v90
    %v570 = vunpack.c.l.b16 %v91
    %v571 = vunpack.c.h.b16 %v91
    %v572 = vunpack.c.l.b16 %v92
    %v573 = vunpack.c.l.b16 %v93
    %v574 = vunpack.c.h.b16 %v93
    %v575 = vunpack.c.l.b16 %v94
    %v576 = vunpack.c.h.b16 %v94
    %v577 = vunpack.c.l.b16 %v95
    %v578 = vunpack.c.l.b16 %v96
    %v579 = vunpack.c.h.b16 %v96
    %v580 = vunpack.c.l.b16 %v97
    %v581 = vunpack.c.h.b16 %v97
    %v582 = vunpack.c.l.b16 %v98
    %v583 = vunpack.c.l.b16 %v99
    %v584 = vunpack.c.h.b16 %v99
    %v585 = vunpack.c.l.b16 %v100
    %v586 = vunpack.c.h.b16 %v100
    %v587 = vunpack.c.l.b16 %v101
    %v588 = vunpack.c.l.b16 %v102
    %v589 = vunpack.c.h.b16 %v102
    %v590 = vunpack.c.l.b16 %v103
    %v591 = vunpack.c.h.b16 %v103
    %v592 = vunpack.c.l.b16 %v104
    %v593 = vunpack.c.l.b16 %v105
    %v594 = vunpack.c.h.b16 %v105
    %v595 = vunpack.c.l.b16 %v106
    %v596 = vunpack.c.h.b16 %v106
    %v597 = vunpack.c.l.b16 %v107
    %v598 = vunpack.c.l.b16 %v108
    %v599 = vunpack.c.h.b16 %v108
    %v600 = vunpack.c.l.b16 %v109
    %v601 = vunpack.c.h.b16 %v109
    %v602 = vunpack.c.l.b16 %v110
    %v603 = vunpack.c.l.b16 %v111
    %v604 = vunpack.c.h.b16 %v111
    %v605 = vunpack.c.l.b16 %v112
    %v606 = vunpack.c.h.b16 %v112
    %v607 = vunpack.c.l.b16 %v113
    %v608 = vunpack.c.l.b16 %v114
    %v609 = vunpack.c.h.b16 %v114
    %v610 = vunpack.c.l.b16 %v115
    %v611 = vunpack.c.h.b16 %v115
    %v612 = vunpack.c.l.b16 %v116
    %v613 = vunpack.c.l.b16 %v117
    %v614 = vunpack.c.h.b16 %v117
    %v615 = vunpack.c.l.b16 %v118
    %v616 = vunpack.c.h.b16 %v118
    %v617 = vunpack.c.l.b16 %v119
    %v618 = vunpack.c.l.b16 %v120
    %v619 = vunpack.c.h.b16 %v120
    %v620 = vunpack.c.l.b16 %v121
    %v621 = vunpack.c.h.b16 %v121
    %v622 = vunpack.c.l.b16 %v122
    %v623 = vunpack.c.l.b16 %v123
    %v624 = vunpack.c.h.b16 %v123
    %v625 = vunpack.c.l.b16 %v124
    %v626 = vunpack.c.h.b16 %v124
    %v627 = vunpack.c.l.b16 %v125
    %v628 = vunpack.c.l.b16 %v126
    %v629 = vunpack.c.h.b16 %v126
    %v630 = vunpack.c.l.b16 %v127
    %v631 = vunpack.c.h.b16 %v127
    %v632 = vunpack.c.l.b16 %v128
    %v633 = vunpack.c.l.b16 %v129
    %v634 = vunpack.c.h.b16 %v129
    %v635 = vunpack.c.l.b16 %v130
    %v636 = vunpack.c.h.b16 %v130
    %v637 = vunpack.c.l.b16 %v131
    %v638 = vunpack.c.l.b16 %v132
    %v639 = vunpack.c.h.b16 %v132
    %v640 = vunpack.c.l.b16 %v133
    %v641 = vunpack.c.h.b16 %v133
    %v642 = vunpack.c.l.b16 %v134
    %v643 = vunpack.c.l.b16 %v135
    %v644 = vunpack.c.h.b16 %v135
    %v645 = vunpack.c.l.b16 %v136
    %v646 = vunpack.c.h.b16 %v136
    %v647 = vunpack.c.l.b16 %v137
    %v648 = vunpack.c.l.b16 %v138
    %v649 = vunpack.c.h.b16 %v138
    %v650 = vunpack.c.l.b16 %v139
    %v651 = vunpack.c.h.b16 %v139
    %v652 = vunpack.c.l.b16 %v140
    %v653 = vunpack.c.l.b16 %v141
    %v654 = vunpack.c.h.b16 %v141
    %v655 = vunpack.c.l.b16 %v142
    %v656 = vunpack.c.h.b16 %v142
    %v657 = vunpack.c.l.b16 %v143
    %v658 = vunpack.c.l.b16 %v144
    %v659 = vunpack.c.h.b16 %v144
    %v660 = vunpack.c.l.b16 %v145
    %v661 = vunpack.c.h.b16 %v145
    %v662 = vunpack.c.l.b16 %v146
    %v663 = vunpack.c.l.b16 %v147
    %v664 = vunpack.c.h.b16 %v147
    %v665 = vunpack.c.l.b16 %v148
    %v666 = vunpack.c.h.b16 %v148
    %v667 = vunpack.c.l.b16 %v149
    %v668 = vunpack.c.l.b16 %v150
    %v669 = vunpack.c.h.b16 %v150
    %v670 = vunpack.c.l.b16 %v151
    %v671 = vunpack.c.h.b16 %v151
    %v672 = vunpack.c.l.b16 %v152
    %v673 = vunpack.c.l.b16 %v153
    %v674 = vunpack.c.h.b16 %v153
    %v675 = vunpack.c.l.b16 %v154
    %v676 = vunpack.c.h.b16 %v154
    %v677 = vunpack.c.l.b16 %v155
    %v678 = vunpack.c.l.b16 %v156
    %v679 = vunpack.c.h.b16 %v156
    %v680 = vunpack.c.l.b16 %v157
    %v681 = vunpack.c.h.b16 %v157
    %v682 = vunpack.c.l.b16 %v158
    %v683 = vunpack.c.l.b16 %v159
    %v684 = vunpack.c.h.b16 %v159
    %v685 = vunpack.c.l.b16 %v160
    %v686 = vunpack.c.h.b16 %v160
    %v687 = vunpack.c.l.b16 %v161
    %v688 = vunpack.c.l.b16 %v162
    %v689 = vunpack.c.h.b16 %v162
    %v690 = vunpack.c.l.b16 %v163
    %v691 = vunpack.c.h.b16 %v163
    %v692 = vunpack.c.l.b16 %v164
    %v693 = vunpack.c.l.b16 %v165
    %v694 = vunpack.c.h.b16 %v165
    %v695 = vunpack.c.l.b16 %v166
    %v696 = vunpack.c.h.b16 %v166
    %v697 = vunpack.c.l.b16 %v167
    %v698 = vunpack.c.l.b16 %v168
    %v699 = vunpack.c.h.b16 %v168
    %v700 = vunpack.c.l.b16 %v169
    %v701 = vunpack.c.h.b16 %v169
    %v702 = vunpack.c.l.b16 %v170
    %v703 = vunpack.c.l.b16 %v171
    %v704 = vunpack.c.h.b16 %v171
    %v705 = vunpack.c.l.b16 %v172
    %v706 = vunpack.c.h.b16 %v172
    %v707 = vunpack.c.l.b16 %v173
    %v708 = vunpack.c.l.b16 %v174
    %v709 = vunpack.c.h.b16 %v174
    %v710 = vunpack.c.l.b16 %v175
    %v711 = vunpack.c.h.b16 %v175
    %v712 = vunpack.c.l.b16 %v176
    %v713 = vunpack.c.l.b16 %v177
    %v714 = vunpack.c.h.b16 %v177
    %v715 = vunpack.c.l.b16 %v178
    %v716 = vunpack.c.h.b16 %v178
    %v717 = vunpack.c.l.b16 %v179
    %v718 = vunpack.c.l.b16 %v180
    %v719 = vunpack.c.h.b16 %v180
    %v720 = vunpack.c.l.b16 %v181
    %v721 = vunpack.c.h.b16 %v181
    %v722 = vunpack.c.l.b16 %v182
    %v723 = vunpack.c.l.b16 %v183
    %v724 = vunpack.c.h.b16 %v183
    %v725 = vunpack.c.l.b16 %v184
    %v726 = vunpack.c.h.b16 %v184
    %v727 = vunpack.c.l.b16 %v185
    %v728 = vunpack.c.l.b16 %v186
    %v729 = vunpack.c.h.b16 %v186
    %v730 = vunpack.c.l.b16 %v187
    %v731 = vunpack.c.h.b16 %v187
    %v732 = vunpack.c.l.b16 %v188
    %v733 = vunpack.c.l.b16 %v189
    %v734 = vunpack.c.h.b16 %v189
    %v735 = vunpack.c.l.b16 %v190
    %v736 = vunpack.c.h.b16 %v190
    %v737 = vunpack.c.l.b16 %v191
    %v738 = vunpack.c.l.b16 %v192
    %v739 = vunpack.c.h.b16 %v192
    %v740 = vunpack.c.l.b16 %v193
    %v741 = vunpack.c.h.b16 %v193
    %v742 = vunpack.c.l.b16 %v194
    %v743 = vunpack.c.l.b16 %v195
    %v744 = vunpack.c.h.b16 %v195
    %v745 = vunpack.c.l.b16 %v196
    %v746 = vunpack.c.h.b16 %v196
    %v747 = vunpack.c.l.b16 %v197
    %v748 = vunpack.c.l.b16 %v198
    %v749 = vunpack.c.h.b16 %v198
    %v750 = vunpack.c.l.b16 %v199
    %v751 = vunpack.c.h.b16 %v199
    %v752 = vunpack.c.l.b16 %v200
    %v753 = vunpack.c.l.b16 %v201
    %v754 = vunpack.c.h.b16 %v201
    %v755 = vunpack.c.l.b16 %v202
    %v756 = vunpack.c.h.b16 %v202
    %v757 = vunpack.c.l.b16 %v203
    %v758 = vunpack.c.l.b16 %v204
    %v759 = vunpack.c.h.b16 %v204
    %v760 = vunpack.c.l.b16 %v205
    %v761 = vunpack.c.h.b16 %v205
    %v762 = vunpack.c.l.b16 %v206
    %v763 = vunpack.c.l.b16 %v207
    %v764 = vunpack.c.h.b16 %v207
    %v765 = vunpack.c.l.b16 %v208
    %v766 = vunpack.c.h.b16 %v208
    %v767 = vunpack.c.l.b16 %v209
    %v768 = vunpack.c.l.b16 %v210
    %v769 = vunpack.c.h.b16 %v210
    %v770 = vunpack.c.l.b16 %v211
    %v771 = vunpack.c.h.b16 %v211
    %v772 = vunpack.c.l.b16 %v212
    %v773 = vunpack.c.l.b16 %v213
    %v774 = vunpack.c.h.b16 %v213
    %v775 = vunpack.c.l.b16 %v214
    %v776 = vunpack.c.h.b16 %v214
    %v777 = vunpack.c.l.b16 %v215
    %v778 = vunpack.c.l.b16 %v216
    %v779 = vunpack.c.h.b16 %v216
    %v780 = vunpack.c.l.b16 %v217
    %v781 = vunpack.c.h.b16 %v217
    %v782 = vunpack.c.l.b16 %v218
    %v783 = vunpack.c.l.b16 %v219
    %v784 = vunpack.c.h.b16 %v219
    %v785 = vunpack.c.l.b16 %v220
    %v786 = vunpack.c.h.b16 %v220
    %v787 = vunpack.c.l.b16 %v221
    %v788 = vunpack.c.l.b16 %v222
    %v789 = vunpack.c.h.b16 %v222
    %v790 = vunpack.c.l.b16 %v223
    %v791 = vunpack.c.h.b16 %v223
    %v792 = vunpack.c.l.b16 %v224
    %v793 = vunpack.c.l.b16 %v225
    %v794 = vunpack.c.h.b16 %v225
    %v795 = vunpack.c.l.b16 %v226
    %v796 = vunpack.c.h.b16 %v226
    %v797 = vunpack.c.l.b16 %v227
    %v798 = vunpack.c.l.b16 %v228
    %v799 = vunpack.c.h.b16 %v228
    %v800 = vunpack.c.l.b16 %v229
    %v801 = vunpack.c.h.b16 %v229
    %v802 = vunpack.c.l.b16 %v230
    %v803 = vunpack.c.l.b16 %v231
    %v804 = vunpack.c.h.b16 %v231
    %v805 = vunpack.c.l.b16 %v232
    %v806 = vunpack.c.h.b16 %v232
    %v807 = vunpack.c.l.b16 %v233
    %v808 = vunpack.c.l.b16 %v234
    %v809 = vunpack.c.h.b16 %v234
    %v810 = vunpack.c.l.b16 %v235
    %v811 = vunpack.c.h.b16 %v235
    %v812 = vunpack.c.l.b16 %v236
    %v813 = vunpack.c.l.b16 %v237
    %v814 = vunpack.c.h.b16 %v237
    %v815 = vunpack.c.l.b16 %v238
    %v816 = vunpack.c.h.b16 %v238
    %v817 = vunpack.c.l.b16 %v239
    %v818 = vunpack.c.l.b16 %v240
    %v819 = vunpack.c.h.b16 %v240
    %v820 = vunpack.c.l.b16 %v241
    %v821 = vunpack.c.h.b16 %v241
    %v822 = vunpack.c.l.b16 %v242
    %v823 = vunpack.c.l.b16 %v243
    %v824 = vunpack.c.h.b16 %v243
    %v825 = vunpack.c.l.b16 %v244
    %v826 = vunpack.c.h.b16 %v244
    %v827 = vunpack.c.l.b16 %v245
    %v828 = vunpack.c.l.b16 %v246
    %v829 = vunpack.c.h.b16 %v246
    %v830 = vunpack.c.l.b16 %v247
    %v831 = vunpack.c.h.b16 %v247
    %v832 = vunpack.c.l.b16 %v248
    %v833 = vunpack.c.l.b16 %v249
    %v834 = vunpack.c.h.b16 %v249
    %v835 = vunpack.c.l.b16 %v250
    %v836 = vunpack.c.h.b16 %v250
    %v837 = vunpack.c.l.b16 %v251
    %v838 = vunpack.c.l.b16 %v252
    %v839 = vunpack.c.h.b16 %v252
    %v840 = vunpack.c.l.b16 %v253
    %v841 = vunpack.c.h.b16 %v253
    %v842 = vunpack.c.l.b16 %v254
    %v843 = vunpack.c.l.b16 %v255
    %v844 = vunpack.c.h.b16 %v255
    %v845 = vunpack.c.l.b16 %v256
    %v846 = vunpack.c.h.b16 %v256
    %v847 = vunpack.c.l.b16 %v257
    %v848 = vunpack.c.l.b16 %v258
    %v849 = vunpack.c.h.b16 %v258
    %v850 = vunpack.c.l.b16 %v259
    %v851 = vunpack.c.h.b16 %v259
    %v852 = vunpack.c.l.b16 %v260
    %v853 = vpack.c.b16 %v538, %v533
    %v854 = vpack.c.b16 %v539, %v534
    %v855 = vpack.c.b16 %v540, %v535
    %v856 = vpack.c.b16 %v541, %v536
    %v857 = vpack.c.b16 %v542, %v537
    %v858 = vpack.c.b16 %v548, %v543
    %v859 = vpack.c.b16 %v549, %v544
    %v860 = vpack.c.b16 %v550, %v545
    %v861 = vpack.c.b16 %v551, %v546
    %v862 = vpack.c.b16 %v552, %v547
    %v863 = vpack.c.b16 %v558, %v553
    %v864 = vpack.c.b16 %v559, %v554
    %v865 = vpack.c.b16 %v560, %v555
    %v866 = vpack.c.b16 %v561, %v556
    %v867 = vpack.c.b16 %v562, %v557
    %v868 = vpack.c.b16 %v568, %v563
    %v869 = vpack.c.b16 %v569, %v564
    %v870 = vpack.c.b16 %v570, %v565
    %v871 = vpack.c.b16 %v571, %v566
    %v872 = vpack.c.b16 %v572, %v567
    %v873 = vpack.c.b16 %v578, %v573
    %v874 = vpack.c.b16 %v579, %v574
    %v875 = vpack.c.b16 %v580, %v575
    %v876 = vpack.c.b16 %v581, %v576
    %v877 = vpack.c.b16 %v582, %v577
    %v878 = vpack.c.b16 %v588, %v583
    %v879 = vpack.c.b16 %v589, %v584
    %v880 = vpack.c.b16 %v590, %v585
    %v881 = vpack.c.b16 %v591, %v586
    %v882 = vpack.c.b16 %v592, %v587
    %v883 = vpack.c.b16 %v598, %v593
    %v884 = vpack.c.b16 %v599, %v594
    %v885 = vpack.c.b16 %v600, %v595
    %v886 = vpack.c.b16 %v601, %v596
    %v887 = vpack.c.b16 %v602, %v597
    %v888 = vpack.c.b16 %v608, %v603
    %v889 = vpack.c.b16 %v609, %v604
    %v890 = vpack.c.b16 %v610, %v605
    %v891 = vpack.c.b16 %v611, %v606
    %v892 = vpack.c.b16 %v612, %v607
    %v893 = vpack.c.b16 %v618, %v613
    %v894 = vpack.c.b16 %v619, %v614
    %v895 = vpack.c.b16 %v620, %v615
    %v896 = vpack.c.b16 %v621, %v616
    %v897 = vpack.c.b16 %v622, %v617
    %v898 = vpack.c.b16 %v628, %v623
    %v899 = vpack.c.b16 %v629, %v624
    %v900 = vpack.c.b16 %v630, %v625
    %v901 = vpack.c.b16 %v631, %v626
    %v902 = vpack.c.b16 %v632, %v627
    %v903 = vpack.c.b16 %v638, %v633
    %v904 = vpack.c.b16 %v639, %v634
    %v905 = vpack.c.b16 %v640, %v635
    %v906 = vpack.c.b16 %v641, %v636
    %v907 = vpack.c.b16 %v642, %v637
    %v908 = vpack.c.b16 %v648, %v643
    %v909 = vpack.c.b16 %v649, %v644
    %v910 = vpack.c.b16 %v650, %v645
    %v911 = vpack.c.b16 %v651, %v646
    %v912 = vpack.c.b16 %v652, %v647
    %v913 = vpack.c.b16 %v658, %v653
    %v914 = vpack.c.b16 %v659, %v654
    %v915 = vpack.c.b16 %v660, %v655
    %v916 = vpack.c.b16 %v661, %v656
    %v917 = vpack.c.b16 %v662, %v657
    %v918 = vpack.c.b16 %v668, %v663
    %v919 = vpack.c.b16 %v669, %v664
    %v920 = vpack.c.b16 %v670, %v665
    %v921 = vpack.c.b16 %v671, %v666
    %v922 = vpack.c.b16 %v672, %v667
    %v923 = vpack.c.b16 %v678, %v673
    %v924 = vpack.c.b16 %v679, %v674
    %v925 = vpack.c.b16 %v680, %v675
    %v926 = vpack.c.b16 %v681, %v676
    %v927 = vpack.c.b16 %v682, %v677
    %v928 = vpack.c.b16 %v688, %v683
    %v929 = vpack.c.b16 %v689, %v684
    %v930 = vpack.c.b16 %v690, %v685
    %v931 = vpack.c.b16 %v691, %v686
    %v932 = vpack.c.b16 %v692, %v687
    %v933 = vpack.c.b16 %v698, %v693
    %v934 = vpack.c.b16 %v699, %v694
    %v935 = vpack.c.b16 %v700, %v695
    %v936 = vpack.c.b16 %v701, %v696
    %v937 = vpack.c.b16 %v702, %v697
    %v938 = vpack.c.b16 %v708, %v703
    %v939 = vpack.c.b16 %v709, %v704
    %v940 = vpack.c.b16 %v710, %v705
    %v941 = vpack.c.b16 %v711, %v706
    %v942 = vpack.c.b16 %v712, %v707
    %v943 = vpack.c.b16 %v718, %v713
    %v944 = vpack.c.b16 %v719, %v714
    %v945 = vpack.c.b16 %v720, %v715
    %v946 = vpack.c.b16 %v721, %v716
    %v947 = vpack.c.b16 %v722, %v717
    %v948 = vpack.c.b16 %v728, %v723
    %v949 = vpack.c.b16 %v729, %v724
    %v950 = vpack.c.b16 %v730, %v725
    %v951 = vpack.c.b16 %v731, %v726
    %v952 = vpack.c.b16 %v732, %v727
    %v953 = vpack.c.b16 %v738, %v733
    %v954 = vpack.c.b16 %v739, %v734
    %v955 = vpack.c.b16 %v740, %v735
    %v956 = vpack.c.b16 %v741, %v736
    %v957 = vpack.c.b16 %v742, %v737
    %v958 = vpack.c.b16 %v748, %v743
    %v959 = vpack.c.b16 %v749, %v744
    %v960 = vpack.c.b16 %v750, %v745
    %v961 = vpack.c.b16 %v751, %v746
    %v962 = vpack.c.b16 %v752, %v747
    %v963 = vpack.c.b16 %v758, %v753
    %v964 = vpack.c.b16 %v759, %v754
    %v965 = vpack.c.b16 %v760, %v755
    %v966 = vpack.c.b16 %v761, %v756
    %v967 = vpack.c.b16 %v762, %v757
    %v968 = vpack.c.b16 %v768, %v763
    %v969 = vpack.c.b16 %v769, %v764
    %v970 = vpack.c.b16 %v770, %v765
    %v971 = vpack.c.b16 %v771, %v766
    %v972 = vpack.c.b16 %v772, %v767
    %v973 = vpack.c.b16 %v778, %v773
    %v974 = vpack.c.b16 %v779, %v774
    %v975 = vpack.c.b16 %v780, %v775
    %v976 = vpack.c.b16 %v781, %v776
    %v977 = vpack.c.b16 %v782, %v777
    %v978 = vpack.c.b16 %v788, %v783
    %v979 = vpack.c.b16 %v789, %v784
    %v980 = vpack.c.b16 %v790, %v785
    %v981 = vpack.c.b16 %v791, %v786
    %v982 = vpack.c.b16 %v792, %v787
    %v983 = vpack.c.b16 %v798, %v793
    %v984 = vpack.c.b16 %v799, %v794
    %v985 = vpack.c.b16 %v800, %v795
    %v986 = vpack.c.b16 %v801, %v796
    %v987 = vpack.c.b16 %v802, %v797
    %v988 = vpack.c.b16 %v808, %v803
    %v989 = vpack.c.b16 %v809, %v804
    %v990 = vpack.c.b16 %v810, %v805
    %v991 = vpack.c.b16 %v811, %v806
    %v992 = vpack.c.b16 %v812, %v807
    %v993 = vpack.c.b16 %v818, %v813
    %v994 = vpack.c.b16 %v819, %v814
    %v995 = vpack.c.b16 %v820, %v815
    %v996 = vpack.c.b16 %v821, %v816
    %v997 = vpack.c.b16 %v822, %v817
    %v998 = vpack.c.b16 %v828, %v823
    %v999 = vpack.c.b16 %v829, %v824
    %v1000 = vpack.c.b16 %v830, %v825
    %v1001 = vpack.c.b16 %v831, %v826
    %v1002 = vpack.c.b16 %v832, %v827
    %v1003 = vpack.c.b16 %v838, %v833
    %v1004 = vpack.c.b16 %v839, %v834
    %v1005 = vpack.c.b16 %v840, %v835
    %v1006 = vpack.c.b16 %v841, %v836
    %v1007 = vpack.c.b16 %v842, %v837
    %v1008 = vpack.c.b16 %v848, %v843
    %v1009 = vpack.c.b16 %v849, %v844
    %v1010 = vpack.c.b16 %v850, %v845
    %v1011 = vpack.c.b16 %v851, %v846
    %v1012 = vpack.c.b16 %v852, %v847
    %v1253 = vunpack.c.l.b16 %v261
    %v1254 = vunpack.c.l.b16 %v262
    %v1255 = vunpack.c.l.b16 %v263
    %v1256 = vunpack.c.l.b16 %v264
    %v1257 = vunpack.c.l.b16 %v265
    %v1258 = vunpack.c.l.b16 %v266
    %v1259 = vunpack.c.l.b16 %v267
    %v1260 = vunpack.c.l.b16 %v268
    %v1261 = vunpack.c.l.b16 %v269
    %v1262 = vunpack.c.l.b16 %v270
    %v1263 = vunpack.c.l.b16 %v271
    %v1264 = vunpack.c.l.b16 %v272
    %v1265 = vunpack.c.l.b16 %v273
    %v1266 = vunpack.c.l.b16 %v274
    %v1267 = vunpack.c.l.b16 %v275
    %v1268 = vunpack.c.l.b16 %v276
    %v1269 = vunpack.c.l.b16 %v277
    %v1270 = vunpack.c.l.b16 %v278
    %v1271 = vunpack.c.l.b16 %v279
    %v1272 = vunpack.c.l.b16 %v280
    %v1273 = vunpack.c.l.b16 %v281
    %v1274 = vunpack.c.l.b16 %v282
    %v1275 = vunpack.c.l.b16 %v283
    %v1276 = vunpack.c.l.b16 %v284
    %v1277 = vunpack.c.l.b16 %v285
    %v1278 = vunpack.c.l.b16 %v286
    %v1279 = vunpack.c.l.b16 %v287
    %v1280 = vunpack.c.l.b16 %v288
    %v1281 = vunpack.c.l.b16 %v289
    %v1282 = vunpack.c.l.b16 %v290
    %v1283 = vunpack.c.l.b16 %v291
    %v1284 = vunpack.c.l.b16 %v292
    %v1285 = vunpack.c.l.b16 %v293
    %v1286 = vunpack.c.l.b16 %v294
    %v1287 = vunpack.c.l.b16 %v295
    %v1288 = vunpack.c.l.b16 %v296
    %v1289 = vunpack.c.l.b16 %v297
    %v1290 = vunpack.c.l.b16 %v298
    %v1291 = vunpack.c.l.b16 %v299
    %v1292 = vunpack.c.l.b16 %v300
    %v1293 = vunpack.c.l.b16 %v301
    %v1294 = vunpack.c.l.b16 %v302
    %v1295 = vunpack.c.l.b16 %v303
    %v1296 = vunpack.c.l.b16 %v304
    %v1297 = vunpack.c.l.b16 %v305
    %v1298 = vunpack.c.l.b16 %v306
    %v1299 = vunpack.c.l.b16 %v307
    %v1300 = vunpack.c.l.b16 %v308
    %v1301 = vunpack.c.l.b16 %v309
    %v1302 = vunpack.c.l.b16 %v310
    %v1303 = vunpack.c.l.b16 %v311
    %v1304 = vunpack.c.l.b16 %v312
    %v1305 = vunpack.c.l.b16 %v313
    %v1306 = vunpack.c.l.b16 %v314
    %v1307 = vunpack.c.l.b16 %v315
    %v1308 = vunpack.c.l.b16 %v316
    %v1309 = vunpack.c.l.b16 %v317
    %v1310 = vunpack.c.l.b16 %v318
    %v1311 = vunpack.c.l.b16 %v319
    %v1312 = vunpack.c.l.b16 %v320
    %v1313 = vunpack.c.l.b16 %v321
    %v1314 = vunpack.c.l.b16 %v322
    %v1315 = vunpack.c.l.b16 %v323
    %v1316 = vunpack.c.l.b16 %v324
    %v1317 = vunpack.c.l.b16 %v325
    %v1318 = vunpack.c.l.b16 %v326
    %v1319 = vunpack.c.l.b16 %v327
    %v1320 = vunpack.c.l.b16 %v328
    %v1321 = vunpack.c.l.b16 %v329
    %v1322 = vunpack.c.l.b16 %v330
    %v1323 = vunpack.c.l.b16 %v331
    %v1324 = vunpack.c.l.b16 %v332
    %v1325 = vunpack.c.l.b16 %v333
    %v1326 = vunpack.c.l.b16 %v334
    %v1327 = vunpack.c.l.b16 %v335
    %v1328 = vunpack.c.l.b16 %v336
    %v1329 = vunpack.c.l.b16 %v337
    %v1330 = vunpack.c.l.b16 %v338
    %v1331 = vunpack.c.l.b16 %v339
    %v1332 = vunpack.c.l.b16 %v340
    %v1333 = vpack.c.b16 %v1254, %v1253
    %v1334 = vpack.c.b16 %v1256, %v1255
    %v1335 = vpack.c.b16 %v1258, %v1257
    %v1336 = vpack.c.b16 %v1260, %v1259
    %v1337 = vpack.c.b16 %v1262, %v1261
    %v1338 = vpack.c.b16 %v1264, %v1263
    %v1339 = vpack.c.b16 %v1266, %v1265
    %v1340 = vpack.c.b16 %v1268, %v1267
    %v1341 = vpack.c.b16 %v1270, %v1269
    %v1342 = vpack.c.b16 %v1272, %v1271
    %v1343 = vpack.c.b16 %v1274, %v1273
    %v1344 = vpack.c.b16 %v1276, %v1275
    %v1345 = vpack.c.b16 %v1278, %v1277
    %v1346 = vpack.c.b16 %v1280, %v1279
    %v1347 = vpack.c.b16 %v1282, %v1281
    %v1348 = vpack.c.b16 %v1284, %v1283
    %v1349 = vpack.c.b16 %v1286, %v1285
    %v1350 = vpack.c.b16 %v1288, %v1287
    %v1351 = vpack.c.b16 %v1290, %v1289
    %v1352 = vpack.c.b16 %v1292, %v1291
    %v1353 = vpack.c.b16 %v1294, %v1293
    %v1354 = vpack.c.b16 %v1296, %v1295
    %v1355 = vpack.c.b16 %v1298, %v1297
    %v1356 = vpack.c.b16 %v1300, %v1299
    %v1357 = vpack.c.b16 %v1302, %v1301
    %v1358 = vpack.c.b16 %v1304, %v1303
    %v1359 = vpack.c.b16 %v1306, %v1305
    %v1360 = vpack.c.b16 %v1308, %v1307
    %v1361 = vpack.c.b16 %v1310, %v1309
    %v1362 = vpack.c.b16 %v1312, %v1311
    %v1363 = vpack.c.b16 %v1314, %v1313
    %v1364 = vpack.c.b16 %v1316, %v1315
    %v1365 = vpack.c.b16 %v1318, %v1317
    %v1366 = vpack.c.b16 %v1320, %v1319
    %v1367 = vpack.c.b16 %v1322, %v1321
    %v1368 = vpack.c.b16 %v1324, %v1323
    %v1369 = vpack.c.b16 %v1326, %v1325
    %v1370 = vpack.c.b16 %v1328, %v1327
    %v1371 = vpack.c.b16 %v1330, %v1329
    %v1372 = vpack.c.b16 %v1332, %v1331
    %1413 = vmatpush.bf16.msra.mxu0 %v1340
    %1414 = vmatpush.bf16.msra.mxu0 %v1339
    %1415 = vmatpush.bf16.msra.mxu0 %v1338
    %1416 = vmatpush.bf16.msra.mxu0 %v1337
    %1417 = vmatpush.bf16.msra.mxu0 %v1336
    %1418 = vmatpush.bf16.msra.mxu0 %v1335
    %1419 = vmatpush.bf16.msra.mxu0 %v1334
    %1420 = vmatpush.bf16.msra.mxu0 %v1333
    %1421 = vmatmul.bf16.gmra.mxu0 %v853
    %v1422 = vpop.f32.mrf.mxu0
    %v1423 = vadd.f32 0.0, %v1422
    %v1424 = vpop.f32.mrf.mxu0
    %v1425 = vadd.f32 0.0, %v1424
    %1426 = vmatmul.bf16.gmra.mxu0 %v858
    %v1427 = vpop.f32.mrf.mxu0
    %v1428 = vadd.f32 0.0, %v1427
    %v1429 = vpop.f32.mrf.mxu0
    %v1430 = vadd.f32 0.0, %v1429
    %1431 = vmatmul.bf16.gmra.mxu0 %v863
    %v1432 = vpop.f32.mrf.mxu0
    %v1433 = vadd.f32 0.0, %v1432
    %v1434 = vpop.f32.mrf.mxu0
    %v1435 = vadd.f32 0.0, %v1434
    %1436 = vmatmul.bf16.gmra.mxu0 %v868
    %v1437 = vpop.f32.mrf.mxu0
    %v1438 = vadd.f32 0.0, %v1437
    %v1439 = vpop.f32.mrf.mxu0
    %v1440 = vadd.f32 0.0, %v1439
    %1441 = vmatmul.bf16.gmra.mxu0 %v873
    %v1442 = vpop.f32.mrf.mxu0
    %v1443 = vadd.f32 0.0, %v1442
    %v1444 = vpop.f32.mrf.mxu0
    %v1445 = vadd.f32 0.0, %v1444
    %1446 = vmatmul.bf16.gmra.mxu0 %v878
    %v1447 = vpop.f32.mrf.mxu0
    %v1448 = vadd.f32 0.0, %v1447
    %v1449 = vpop.f32.mrf.mxu0
    %v1450 = vadd.f32 0.0, %v1449
    %1451 = vmatmul.bf16.gmra.mxu0 %v883
    %v1452 = vpop.f32.mrf.mxu0
    %v1453 = vadd.f32 0.0, %v1452
    %v1454 = vpop.f32.mrf.mxu0
    %v1455 = vadd.f32 0.0, %v1454
    %1456 = vmatmul.bf16.gmra.mxu0 %v888
    %v1457 = vpop.f32.mrf.mxu0
    %v1458 = vadd.f32 0.0, %v1457
    %v1459 = vpop.f32.mrf.mxu0
    %v1460 = vadd.f32 0.0, %v1459
    %1461 = vmatmul.bf16.gmra.mxu0 %v893
    %v1462 = vpop.f32.mrf.mxu0
    %v1463 = vadd.f32 0.0, %v1462
    %v1464 = vpop.f32.mrf.mxu0
    %v1465 = vadd.f32 0.0, %v1464
    %1466 = vmatmul.bf16.gmra.mxu0 %v898
    %v1467 = vpop.f32.mrf.mxu0
    %v1468 = vadd.f32 0.0, %v1467
    %v1469 = vpop.f32.mrf.mxu0
    %v1470 = vadd.f32 0.0, %v1469
    %1471 = vmatmul.bf16.gmra.mxu0 %v903
    %v1472 = vpop.f32.mrf.mxu0
    %v1473 = vadd.f32 0.0, %v1472
    %v1474 = vpop.f32.mrf.mxu0
    %v1475 = vadd.f32 0.0, %v1474
    %1476 = vmatmul.bf16.gmra.mxu0 %v908
    %v1477 = vpop.f32.mrf.mxu0
    %v1478 = vadd.f32 0.0, %v1477
    %v1479 = vpop.f32.mrf.mxu0
    %v1480 = vadd.f32 0.0, %v1479
    %1481 = vmatmul.bf16.gmra.mxu0 %v913
    %v1482 = vpop.f32.mrf.mxu0
    %v1483 = vadd.f32 0.0, %v1482
    %v1484 = vpop.f32.mrf.mxu0
    %v1485 = vadd.f32 0.0, %v1484
    %1486 = vmatmul.bf16.gmra.mxu0 %v918
    %v1487 = vpop.f32.mrf.mxu0
    %v1488 = vadd.f32 0.0, %v1487
    %v1489 = vpop.f32.mrf.mxu0
    %v1490 = vadd.f32 0.0, %v1489
    %1491 = vmatmul.bf16.gmra.mxu0 %v923
    %v1492 = vpop.f32.mrf.mxu0
    %v1493 = vadd.f32 0.0, %v1492
    %v1494 = vpop.f32.mrf.mxu0
    %v1495 = vadd.f32 0.0, %v1494
    %1496 = vmatmul.bf16.gmra.mxu0 %v928
    %v1497 = vpop.f32.mrf.mxu0
    %v1498 = vadd.f32 0.0, %v1497
    %v1499 = vpop.f32.mrf.mxu0
    %v1500 = vadd.f32 0.0, %v1499
    %1501 = vmatmul.bf16.gmra.mxu0 %v933
    %v1502 = vpop.f32.mrf.mxu0
    %v1503 = vadd.f32 0.0, %v1502
    %v1504 = vpop.f32.mrf.mxu0
    %v1505 = vadd.f32 0.0, %v1504
    %1506 = vmatmul.bf16.gmra.mxu0 %v938
    %v1507 = vpop.f32.mrf.mxu0
    %v1508 = vadd.f32 0.0, %v1507
    %v1509 = vpop.f32.mrf.mxu0
    %v1510 = vadd.f32 0.0, %v1509
    %1511 = vmatmul.bf16.gmra.mxu0 %v943
    %v1512 = vpop.f32.mrf.mxu0
    %v1513 = vadd.f32 0.0, %v1512
    %v1514 = vpop.f32.mrf.mxu0
    %v1515 = vadd.f32 0.0, %v1514
    %1516 = vmatmul.bf16.gmra.mxu0 %v948
    %v1517 = vpop.f32.mrf.mxu0
    %v1518 = vadd.f32 0.0, %v1517
    %v1519 = vpop.f32.mrf.mxu0
    %v1520 = vadd.f32 0.0, %v1519
    %1521 = vmatmul.bf16.gmra.mxu0 %v953
    %v1522 = vpop.f32.mrf.mxu0
    %v1523 = vadd.f32 0.0, %v1522
    %v1524 = vpop.f32.mrf.mxu0
    %v1525 = vadd.f32 0.0, %v1524
    %1526 = vmatmul.bf16.gmra.mxu0 %v958
    %v1527 = vpop.f32.mrf.mxu0
    %v1528 = vadd.f32 0.0, %v1527
    %v1529 = vpop.f32.mrf.mxu0
    %v1530 = vadd.f32 0.0, %v1529
    %1531 = vmatmul.bf16.gmra.mxu0 %v963
    %v1532 = vpop.f32.mrf.mxu0
    %v1533 = vadd.f32 0.0, %v1532
    %v1534 = vpop.f32.mrf.mxu0
    %v1535 = vadd.f32 0.0, %v1534
    %1536 = vmatmul.bf16.gmra.mxu0 %v968
    %v1537 = vpop.f32.mrf.mxu0
    %v1538 = vadd.f32 0.0, %v1537
    %v1539 = vpop.f32.mrf.mxu0
    %v1540 = vadd.f32 0.0, %v1539
    %1541 = vmatmul.bf16.gmra.mxu0 %v973
    %v1542 = vpop.f32.mrf.mxu0
    %v1543 = vadd.f32 0.0, %v1542
    %v1544 = vpop.f32.mrf.mxu0
    %v1545 = vadd.f32 0.0, %v1544
    %1546 = vmatmul.bf16.gmra.mxu0 %v978
    %v1547 = vpop.f32.mrf.mxu0
    %v1548 = vadd.f32 0.0, %v1547
    %v1549 = vpop.f32.mrf.mxu0
    %v1550 = vadd.f32 0.0, %v1549
    %1551 = vmatmul.bf16.gmra.mxu0 %v983
    %v1552 = vpop.f32.mrf.mxu0
    %v1553 = vadd.f32 0.0, %v1552
    %v1554 = vpop.f32.mrf.mxu0
    %v1555 = vadd.f32 0.0, %v1554
    %1556 = vmatmul.bf16.gmra.mxu0 %v988
    %v1557 = vpop.f32.mrf.mxu0
    %v1558 = vadd.f32 0.0, %v1557
    %v1559 = vpop.f32.mrf.mxu0
    %v1560 = vadd.f32 0.0, %v1559
    %1561 = vmatmul.bf16.gmra.mxu0 %v993
    %v1562 = vpop.f32.mrf.mxu0
    %v1563 = vadd.f32 0.0, %v1562
    %v1564 = vpop.f32.mrf.mxu0
    %v1565 = vadd.f32 0.0, %v1564
    %1566 = vmatmul.bf16.gmra.mxu0 %v998
    %v1567 = vpop.f32.mrf.mxu0
    %v1568 = vadd.f32 0.0, %v1567
    %v1569 = vpop.f32.mrf.mxu0
    %v1570 = vadd.f32 0.0, %v1569
    %1571 = vmatmul.bf16.gmra.mxu0 %v1003
    %v1572 = vpop.f32.mrf.mxu0
    %v1573 = vadd.f32 0.0, %v1572
    %v1574 = vpop.f32.mrf.mxu0
    %v1575 = vadd.f32 0.0, %v1574
    %1576 = vmatmul.bf16.gmra.mxu0 %v1008
    %v1577 = vpop.f32.mrf.mxu0
    %v1578 = vadd.f32 0.0, %v1577
    %v1579 = vpop.f32.mrf.mxu0
    %v1580 = vadd.f32 0.0, %v1579
    %1581 = vdwg.mxu0
    %1582 = vmatpush.bf16.msra.mxu0 %v1348
    %1583 = vmatpush.bf16.msra.mxu0 %v1347
    %1584 = vmatpush.bf16.msra.mxu0 %v1346
    %1585 = vmatpush.bf16.msra.mxu0 %v1345
    %1586 = vmatpush.bf16.msra.mxu0 %v1344
    %1587 = vmatpush.bf16.msra.mxu0 %v1343
    %1588 = vmatpush.bf16.msra.mxu0 %v1342
    %1589 = vmatpush.bf16.msra.mxu0 %v1341
    %1590 = vmatmul.bf16.gmra.mxu0 %v854
    %v1591 = vpop.f32.mrf.mxu0
    %v1592 = vadd.f32 %v1423, %v1591
    %v1593 = vpop.f32.mrf.mxu0
    %v1594 = vadd.f32 %v1425, %v1593
    %1595 = vmatmul.bf16.gmra.mxu0 %v859
    %v1596 = vpop.f32.mrf.mxu0
    %v1597 = vadd.f32 %v1428, %v1596
    %v1598 = vpop.f32.mrf.mxu0
    %v1599 = vadd.f32 %v1430, %v1598
    %1600 = vmatmul.bf16.gmra.mxu0 %v864
    %v1601 = vpop.f32.mrf.mxu0
    %v1602 = vadd.f32 %v1433, %v1601
    %v1603 = vpop.f32.mrf.mxu0
    %v1604 = vadd.f32 %v1435, %v1603
    %1605 = vmatmul.bf16.gmra.mxu0 %v869
    %v1606 = vpop.f32.mrf.mxu0
    %v1607 = vadd.f32 %v1438, %v1606
    %v1608 = vpop.f32.mrf.mxu0
    %v1609 = vadd.f32 %v1440, %v1608
    %1610 = vmatmul.bf16.gmra.mxu0 %v874
    %v1611 = vpop.f32.mrf.mxu0
    %v1612 = vadd.f32 %v1443, %v1611
    %v1613 = vpop.f32.mrf.mxu0
    %v1614 = vadd.f32 %v1445, %v1613
    %1615 = vmatmul.bf16.gmra.mxu0 %v879
    %v1616 = vpop.f32.mrf.mxu0
    %v1617 = vadd.f32 %v1448, %v1616
    %v1618 = vpop.f32.mrf.mxu0
    %v1619 = vadd.f32 %v1450, %v1618
    %1620 = vmatmul.bf16.gmra.mxu0 %v884
    %v1621 = vpop.f32.mrf.mxu0
    %v1622 = vadd.f32 %v1453, %v1621
    %v1623 = vpop.f32.mrf.mxu0
    %v1624 = vadd.f32 %v1455, %v1623
    %1625 = vmatmul.bf16.gmra.mxu0 %v889
    %v1626 = vpop.f32.mrf.mxu0
    %v1627 = vadd.f32 %v1458, %v1626
    %v1628 = vpop.f32.mrf.mxu0
    %v1629 = vadd.f32 %v1460, %v1628
    %1630 = vmatmul.bf16.gmra.mxu0 %v894
    %v1631 = vpop.f32.mrf.mxu0
    %v1632 = vadd.f32 %v1463, %v1631
    %v1633 = vpop.f32.mrf.mxu0
    %v1634 = vadd.f32 %v1465, %v1633
    %1635 = vmatmul.bf16.gmra.mxu0 %v899
    %v1636 = vpop.f32.mrf.mxu0
    %v1637 = vadd.f32 %v1468, %v1636
    %v1638 = vpop.f32.mrf.mxu0
    %v1639 = vadd.f32 %v1470, %v1638
    %1640 = vmatmul.bf16.gmra.mxu0 %v904
    %v1641 = vpop.f32.mrf.mxu0
    %v1642 = vadd.f32 %v1473, %v1641
    %v1643 = vpop.f32.mrf.mxu0
    %v1644 = vadd.f32 %v1475, %v1643
    %1645 = vmatmul.bf16.gmra.mxu0 %v909
    %v1646 = vpop.f32.mrf.mxu0
    %v1647 = vadd.f32 %v1478, %v1646
    %v1648 = vpop.f32.mrf.mxu0
    %v1649 = vadd.f32 %v1480, %v1648
    %1650 = vmatmul.bf16.gmra.mxu0 %v914
    %v1651 = vpop.f32.mrf.mxu0
    %v1652 = vadd.f32 %v1483, %v1651
    %v1653 = vpop.f32.mrf.mxu0
    %v1654 = vadd.f32 %v1485, %v1653
    %1655 = vmatmul.bf16.gmra.mxu0 %v919
    %v1656 = vpop.f32.mrf.mxu0
    %v1657 = vadd.f32 %v1488, %v1656
    %v1658 = vpop.f32.mrf.mxu0
    %v1659 = vadd.f32 %v1490, %v1658
    %1660 = vmatmul.bf16.gmra.mxu0 %v924
    %v1661 = vpop.f32.mrf.mxu0
    %v1662 = vadd.f32 %v1493, %v1661
    %v1663 = vpop.f32.mrf.mxu0
    %v1664 = vadd.f32 %v1495, %v1663
    %1665 = vmatmul.bf16.gmra.mxu0 %v929
    %v1666 = vpop.f32.mrf.mxu0
    %v1667 = vadd.f32 %v1498, %v1666
    %v1668 = vpop.f32.mrf.mxu0
    %v1669 = vadd.f32 %v1500, %v1668
    %1670 = vmatmul.bf16.gmra.mxu0 %v934
    %v1671 = vpop.f32.mrf.mxu0
    %v1672 = vadd.f32 %v1503, %v1671
    %v1673 = vpop.f32.mrf.mxu0
    %v1674 = vadd.f32 %v1505, %v1673
    %1675 = vmatmul.bf16.gmra.mxu0 %v939
    %v1676 = vpop.f32.mrf.mxu0
    %v1677 = vadd.f32 %v1508, %v1676
    %v1678 = vpop.f32.mrf.mxu0
    %v1679 = vadd.f32 %v1510, %v1678
    %1680 = vmatmul.bf16.gmra.mxu0 %v944
    %v1681 = vpop.f32.mrf.mxu0
    %v1682 = vadd.f32 %v1513, %v1681
    %v1683 = vpop.f32.mrf.mxu0
    %v1684 = vadd.f32 %v1515, %v1683
    %1685 = vmatmul.bf16.gmra.mxu0 %v949
    %v1686 = vpop.f32.mrf.mxu0
    %v1687 = vadd.f32 %v1518, %v1686
    %v1688 = vpop.f32.mrf.mxu0
    %v1689 = vadd.f32 %v1520, %v1688
    %1690 = vmatmul.bf16.gmra.mxu0 %v954
    %v1691 = vpop.f32.mrf.mxu0
    %v1692 = vadd.f32 %v1523, %v1691
    %v1693 = vpop.f32.mrf.mxu0
    %v1694 = vadd.f32 %v1525, %v1693
    %1695 = vmatmul.bf16.gmra.mxu0 %v959
    %v1696 = vpop.f32.mrf.mxu0
    %v1697 = vadd.f32 %v1528, %v1696
    %v1698 = vpop.f32.mrf.mxu0
    %v1699 = vadd.f32 %v1530, %v1698
    %1700 = vmatmul.bf16.gmra.mxu0 %v964
    %v1701 = vpop.f32.mrf.mxu0
    %v1702 = vadd.f32 %v1533, %v1701
    %v1703 = vpop.f32.mrf.mxu0
    %v1704 = vadd.f32 %v1535, %v1703
    %1705 = vmatmul.bf16.gmra.mxu0 %v969
    %v1706 = vpop.f32.mrf.mxu0
    %v1707 = vadd.f32 %v1538, %v1706
    %v1708 = vpop.f32.mrf.mxu0
    %v1709 = vadd.f32 %v1540, %v1708
    %1710 = vmatmul.bf16.gmra.mxu0 %v974
    %v1711 = vpop.f32.mrf.mxu0
    %v1712 = vadd.f32 %v1543, %v1711
    %v1713 = vpop.f32.mrf.mxu0
    %v1714 = vadd.f32 %v1545, %v1713
    %1715 = vmatmul.bf16.gmra.mxu0 %v979
    %v1716 = vpop.f32.mrf.mxu0
    %v1717 = vadd.f32 %v1548, %v1716
    %v1718 = vpop.f32.mrf.mxu0
    %v1719 = vadd.f32 %v1550, %v1718
    %1720 = vmatmul.bf16.gmra.mxu0 %v984
    %v1721 = vpop.f32.mrf.mxu0
    %v1722 = vadd.f32 %v1553, %v1721
    %v1723 = vpop.f32.mrf.mxu0
    %v1724 = vadd.f32 %v1555, %v1723
    %1725 = vmatmul.bf16.gmra.mxu0 %v989
    %v1726 = vpop.f32.mrf.mxu0
    %v1727 = vadd.f32 %v1558, %v1726
    %v1728 = vpop.f32.mrf.mxu0
    %v1729 = vadd.f32 %v1560, %v1728
    %1730 = vmatmul.bf16.gmra.mxu0 %v994
    %v1731 = vpop.f32.mrf.mxu0
    %v1732 = vadd.f32 %v1563, %v1731
    %v1733 = vpop.f32.mrf.mxu0
    %v1734 = vadd.f32 %v1565, %v1733
    %1735 = vmatmul.bf16.gmra.mxu0 %v999
    %v1736 = vpop.f32.mrf.mxu0
    %v1737 = vadd.f32 %v1568, %v1736
    %v1738 = vpop.f32.mrf.mxu0
    %v1739 = vadd.f32 %v1570, %v1738
    %1740 = vmatmul.bf16.gmra.mxu0 %v1004
    %v1741 = vpop.f32.mrf.mxu0
    %v1742 = vadd.f32 %v1573, %v1741
    %v1743 = vpop.f32.mrf.mxu0
    %v1744 = vadd.f32 %v1575, %v1743
    %1745 = vmatmul.bf16.gmra.mxu0 %v1009
    %v1746 = vpop.f32.mrf.mxu0
    %v1747 = vadd.f32 %v1578, %v1746
    %v1748 = vpop.f32.mrf.mxu0
    %v1749 = vadd.f32 %v1580, %v1748
    %1750 = vdwg.mxu0
    %1751 = vmatpush.bf16.msra.mxu0 %v1356
    %1752 = vmatpush.bf16.msra.mxu0 %v1355
    %1753 = vmatpush.bf16.msra.mxu0 %v1354
    %1754 = vmatpush.bf16.msra.mxu0 %v1353
    %1755 = vmatpush.bf16.msra.mxu0 %v1352
    %1756 = vmatpush.bf16.msra.mxu0 %v1351
    %1757 = vmatpush.bf16.msra.mxu0 %v1350
    %1758 = vmatpush.bf16.msra.mxu0 %v1349
    %1759 = vmatmul.bf16.gmra.mxu0 %v855
    %v1760 = vpop.f32.mrf.mxu0
    %v1761 = vadd.f32 %v1592, %v1760
    %v1762 = vpop.f32.mrf.mxu0
    %v1763 = vadd.f32 %v1594, %v1762
    %1764 = vmatmul.bf16.gmra.mxu0 %v860
    %v1765 = vpop.f32.mrf.mxu0
    %v1766 = vadd.f32 %v1597, %v1765
    %v1767 = vpop.f32.mrf.mxu0
    %v1768 = vadd.f32 %v1599, %v1767
    %1769 = vmatmul.bf16.gmra.mxu0 %v865
    %v1770 = vpop.f32.mrf.mxu0
    %v1771 = vadd.f32 %v1602, %v1770
    %v1772 = vpop.f32.mrf.mxu0
    %v1773 = vadd.f32 %v1604, %v1772
    %1774 = vmatmul.bf16.gmra.mxu0 %v870
    %v1775 = vpop.f32.mrf.mxu0
    %v1776 = vadd.f32 %v1607, %v1775
    %v1777 = vpop.f32.mrf.mxu0
    %v1778 = vadd.f32 %v1609, %v1777
    %1779 = vmatmul.bf16.gmra.mxu0 %v875
    %v1780 = vpop.f32.mrf.mxu0
    %v1781 = vadd.f32 %v1612, %v1780
    %v1782 = vpop.f32.mrf.mxu0
    %v1783 = vadd.f32 %v1614, %v1782
    %1784 = vmatmul.bf16.gmra.mxu0 %v880
    %v1785 = vpop.f32.mrf.mxu0
    %v1786 = vadd.f32 %v1617, %v1785
    %v1787 = vpop.f32.mrf.mxu0
    %v1788 = vadd.f32 %v1619, %v1787
    %1789 = vmatmul.bf16.gmra.mxu0 %v885
    %v1790 = vpop.f32.mrf.mxu0
    %v1791 = vadd.f32 %v1622, %v1790
    %v1792 = vpop.f32.mrf.mxu0
    %v1793 = vadd.f32 %v1624, %v1792
    %1794 = vmatmul.bf16.gmra.mxu0 %v890
    %v1795 = vpop.f32.mrf.mxu0
    %v1796 = vadd.f32 %v1627, %v1795
    %v1797 = vpop.f32.mrf.mxu0
    %v1798 = vadd.f32 %v1629, %v1797
    %1799 = vmatmul.bf16.gmra.mxu0 %v895
    %v1800 = vpop.f32.mrf.mxu0
    %v1801 = vadd.f32 %v1632, %v1800
    %v1802 = vpop.f32.mrf.mxu0
    %v1803 = vadd.f32 %v1634, %v1802
    %1804 = vmatmul.bf16.gmra.mxu0 %v900
    %v1805 = vpop.f32.mrf.mxu0
    %v1806 = vadd.f32 %v1637, %v1805
    %v1807 = vpop.f32.mrf.mxu0
    %v1808 = vadd.f32 %v1639, %v1807
    %1809 = vmatmul.bf16.gmra.mxu0 %v905
    %v1810 = vpop.f32.mrf.mxu0
    %v1811 = vadd.f32 %v1642, %v1810
    %v1812 = vpop.f32.mrf.mxu0
    %v1813 = vadd.f32 %v1644, %v1812
    %1814 = vmatmul.bf16.gmra.mxu0 %v910
    %v1815 = vpop.f32.mrf.mxu0
    %v1816 = vadd.f32 %v1647, %v1815
    %v1817 = vpop.f32.mrf.mxu0
    %v1818 = vadd.f32 %v1649, %v1817
    %1819 = vmatmul.bf16.gmra.mxu0 %v915
    %v1820 = vpop.f32.mrf.mxu0
    %v1821 = vadd.f32 %v1652, %v1820
    %v1822 = vpop.f32.mrf.mxu0
    %v1823 = vadd.f32 %v1654, %v1822
    %1824 = vmatmul.bf16.gmra.mxu0 %v920
    %v1825 = vpop.f32.mrf.mxu0
    %v1826 = vadd.f32 %v1657, %v1825
    %v1827 = vpop.f32.mrf.mxu0
    %v1828 = vadd.f32 %v1659, %v1827
    %1829 = vmatmul.bf16.gmra.mxu0 %v925
    %v1830 = vpop.f32.mrf.mxu0
    %v1831 = vadd.f32 %v1662, %v1830
    %v1832 = vpop.f32.mrf.mxu0
    %v1833 = vadd.f32 %v1664, %v1832
    %1834 = vmatmul.bf16.gmra.mxu0 %v930
    %v1835 = vpop.f32.mrf.mxu0
    %v1836 = vadd.f32 %v1667, %v1835
    %v1837 = vpop.f32.mrf.mxu0
    %v1838 = vadd.f32 %v1669, %v1837
    %1839 = vmatmul.bf16.gmra.mxu0 %v935
    %v1840 = vpop.f32.mrf.mxu0
    %v1841 = vadd.f32 %v1672, %v1840
    %v1842 = vpop.f32.mrf.mxu0
    %v1843 = vadd.f32 %v1674, %v1842
    %1844 = vmatmul.bf16.gmra.mxu0 %v940
    %v1845 = vpop.f32.mrf.mxu0
    %v1846 = vadd.f32 %v1677, %v1845
    %v1847 = vpop.f32.mrf.mxu0
    %v1848 = vadd.f32 %v1679, %v1847
    %1849 = vmatmul.bf16.gmra.mxu0 %v945
    %v1850 = vpop.f32.mrf.mxu0
    %v1851 = vadd.f32 %v1682, %v1850
    %v1852 = vpop.f32.mrf.mxu0
    %v1853 = vadd.f32 %v1684, %v1852
    %1854 = vmatmul.bf16.gmra.mxu0 %v950
    %v1855 = vpop.f32.mrf.mxu0
    %v1856 = vadd.f32 %v1687, %v1855
    %v1857 = vpop.f32.mrf.mxu0
    %v1858 = vadd.f32 %v1689, %v1857
    %1859 = vmatmul.bf16.gmra.mxu0 %v955
    %v1860 = vpop.f32.mrf.mxu0
    %v1861 = vadd.f32 %v1692, %v1860
    %v1862 = vpop.f32.mrf.mxu0
    %v1863 = vadd.f32 %v1694, %v1862
    %1864 = vmatmul.bf16.gmra.mxu0 %v960
    %v1865 = vpop.f32.mrf.mxu0
    %v1866 = vadd.f32 %v1697, %v1865
    %v1867 = vpop.f32.mrf.mxu0
    %v1868 = vadd.f32 %v1699, %v1867
    %1869 = vmatmul.bf16.gmra.mxu0 %v965
    %v1870 = vpop.f32.mrf.mxu0
    %v1871 = vadd.f32 %v1702, %v1870
    %v1872 = vpop.f32.mrf.mxu0
    %v1873 = vadd.f32 %v1704, %v1872
    %1874 = vmatmul.bf16.gmra.mxu0 %v970
    %v1875 = vpop.f32.mrf.mxu0
    %v1876 = vadd.f32 %v1707, %v1875
    %v1877 = vpop.f32.mrf.mxu0
    %v1878 = vadd.f32 %v1709, %v1877
    %1879 = vmatmul.bf16.gmra.mxu0 %v975
    %v1880 = vpop.f32.mrf.mxu0
    %v1881 = vadd.f32 %v1712, %v1880
    %v1882 = vpop.f32.mrf.mxu0
    %v1883 = vadd.f32 %v1714, %v1882
    %1884 = vmatmul.bf16.gmra.mxu0 %v980
    %v1885 = vpop.f32.mrf.mxu0
    %v1886 = vadd.f32 %v1717, %v1885
    %v1887 = vpop.f32.mrf.mxu0
    %v1888 = vadd.f32 %v1719, %v1887
    %1889 = vmatmul.bf16.gmra.mxu0 %v985
    %v1890 = vpop.f32.mrf.mxu0
    %v1891 = vadd.f32 %v1722, %v1890
    %v1892 = vpop.f32.mrf.mxu0
    %v1893 = vadd.f32 %v1724, %v1892
    %1894 = vmatmul.bf16.gmra.mxu0 %v990
    %v1895 = vpop.f32.mrf.mxu0
    %v1896 = vadd.f32 %v1727, %v1895
    %v1897 = vpop.f32.mrf.mxu0
    %v1898 = vadd.f32 %v1729, %v1897
    %1899 = vmatmul.bf16.gmra.mxu0 %v995
    %v1900 = vpop.f32.mrf.mxu0
    %v1901 = vadd.f32 %v1732, %v1900
    %v1902 = vpop.f32.mrf.mxu0
    %v1903 = vadd.f32 %v1734, %v1902
    %1904 = vmatmul.bf16.gmra.mxu0 %v1000
    %v1905 = vpop.f32.mrf.mxu0
    %v1906 = vadd.f32 %v1737, %v1905
    %v1907 = vpop.f32.mrf.mxu0
    %v1908 = vadd.f32 %v1739, %v1907
    %1909 = vmatmul.bf16.gmra.mxu0 %v1005
    %v1910 = vpop.f32.mrf.mxu0
    %v1911 = vadd.f32 %v1742, %v1910
    %v1912 = vpop.f32.mrf.mxu0
    %v1913 = vadd.f32 %v1744, %v1912
    %1914 = vmatmul.bf16.gmra.mxu0 %v1010
    %v1915 = vpop.f32.mrf.mxu0
    %v1916 = vadd.f32 %v1747, %v1915
    %v1917 = vpop.f32.mrf.mxu0
    %v1918 = vadd.f32 %v1749, %v1917
    %1919 = vdwg.mxu0
    %1920 = vmatpush.bf16.msra.mxu0 %v1364
    %1921 = vmatpush.bf16.msra.mxu0 %v1363
    %1922 = vmatpush.bf16.msra.mxu0 %v1362
    %1923 = vmatpush.bf16.msra.mxu0 %v1361
    %1924 = vmatpush.bf16.msra.mxu0 %v1360
    %1925 = vmatpush.bf16.msra.mxu0 %v1359
    %1926 = vmatpush.bf16.msra.mxu0 %v1358
    %1927 = vmatpush.bf16.msra.mxu0 %v1357
    %1928 = vmatmul.bf16.gmra.mxu0 %v856
    %v1929 = vpop.f32.mrf.mxu0
    %v1930 = vadd.f32 %v1761, %v1929
    %v1931 = vpop.f32.mrf.mxu0
    %v1932 = vadd.f32 %v1763, %v1931
    %1933 = vmatmul.bf16.gmra.mxu0 %v861
    %v1934 = vpop.f32.mrf.mxu0
    %v1935 = vadd.f32 %v1766, %v1934
    %v1936 = vpop.f32.mrf.mxu0
    %v1937 = vadd.f32 %v1768, %v1936
    %1938 = vmatmul.bf16.gmra.mxu0 %v866
    %v1939 = vpop.f32.mrf.mxu0
    %v1940 = vadd.f32 %v1771, %v1939
    %v1941 = vpop.f32.mrf.mxu0
    %v1942 = vadd.f32 %v1773, %v1941
    %1943 = vmatmul.bf16.gmra.mxu0 %v871
    %v1944 = vpop.f32.mrf.mxu0
    %v1945 = vadd.f32 %v1776, %v1944
    %v1946 = vpop.f32.mrf.mxu0
    %v1947 = vadd.f32 %v1778, %v1946
    %1948 = vmatmul.bf16.gmra.mxu0 %v876
    %v1949 = vpop.f32.mrf.mxu0
    %v1950 = vadd.f32 %v1781, %v1949
    %v1951 = vpop.f32.mrf.mxu0
    %v1952 = vadd.f32 %v1783, %v1951
    %1953 = vmatmul.bf16.gmra.mxu0 %v881
    %v1954 = vpop.f32.mrf.mxu0
    %v1955 = vadd.f32 %v1786, %v1954
    %v1956 = vpop.f32.mrf.mxu0
    %v1957 = vadd.f32 %v1788, %v1956
    %1958 = vmatmul.bf16.gmra.mxu0 %v886
    %v1959 = vpop.f32.mrf.mxu0
    %v1960 = vadd.f32 %v1791, %v1959
    %v1961 = vpop.f32.mrf.mxu0
    %v1962 = vadd.f32 %v1793, %v1961
    %1963 = vmatmul.bf16.gmra.mxu0 %v891
    %v1964 = vpop.f32.mrf.mxu0
    %v1965 = vadd.f32 %v1796, %v1964
    %v1966 = vpop.f32.mrf.mxu0
    %v1967 = vadd.f32 %v1798, %v1966
    %1968 = vmatmul.bf16.gmra.mxu0 %v896
    %v1969 = vpop.f32.mrf.mxu0
    %v1970 = vadd.f32 %v1801, %v1969
    %v1971 = vpop.f32.mrf.mxu0
    %v1972 = vadd.f32 %v1803, %v1971
    %1973 = vmatmul.bf16.gmra.mxu0 %v901
    %v1974 = vpop.f32.mrf.mxu0
    %v1975 = vadd.f32 %v1806, %v1974
    %v1976 = vpop.f32.mrf.mxu0
    %v1977 = vadd.f32 %v1808, %v1976
    %1978 = vmatmul.bf16.gmra.mxu0 %v906
    %v1979 = vpop.f32.mrf.mxu0
    %v1980 = vadd.f32 %v1811, %v1979
    %v1981 = vpop.f32.mrf.mxu0
    %v1982 = vadd.f32 %v1813, %v1981
    %1983 = vmatmul.bf16.gmra.mxu0 %v911
    %v1984 = vpop.f32.mrf.mxu0
    %v1985 = vadd.f32 %v1816, %v1984
    %v1986 = vpop.f32.mrf.mxu0
    %v1987 = vadd.f32 %v1818, %v1986
    %1988 = vmatmul.bf16.gmra.mxu0 %v916
    %v1989 = vpop.f32.mrf.mxu0
    %v1990 = vadd.f32 %v1821, %v1989
    %v1991 = vpop.f32.mrf.mxu0
    %v1992 = vadd.f32 %v1823, %v1991
    %1993 = vmatmul.bf16.gmra.mxu0 %v921
    %v1994 = vpop.f32.mrf.mxu0
    %v1995 = vadd.f32 %v1826, %v1994
    %v1996 = vpop.f32.mrf.mxu0
    %v1997 = vadd.f32 %v1828, %v1996
    %1998 = vmatmul.bf16.gmra.mxu0 %v926
    %v1999 = vpop.f32.mrf.mxu0
    %v2000 = vadd.f32 %v1831, %v1999
    %v2001 = vpop.f32.mrf.mxu0
    %v2002 = vadd.f32 %v1833, %v2001
    %2003 = vmatmul.bf16.gmra.mxu0 %v931
    %v2004 = vpop.f32.mrf.mxu0
    %v2005 = vadd.f32 %v1836, %v2004
    %v2006 = vpop.f32.mrf.mxu0
    %v2007 = vadd.f32 %v1838, %v2006
    %2008 = vmatmul.bf16.gmra.mxu0 %v936
    %v2009 = vpop.f32.mrf.mxu0
    %v2010 = vadd.f32 %v1841, %v2009
    %v2011 = vpop.f32.mrf.mxu0
    %v2012 = vadd.f32 %v1843, %v2011
    %2013 = vmatmul.bf16.gmra.mxu0 %v941
    %v2014 = vpop.f32.mrf.mxu0
    %v2015 = vadd.f32 %v1846, %v2014
    %v2016 = vpop.f32.mrf.mxu0
    %v2017 = vadd.f32 %v1848, %v2016
    %2018 = vmatmul.bf16.gmra.mxu0 %v946
    %v2019 = vpop.f32.mrf.mxu0
    %v2020 = vadd.f32 %v1851, %v2019
    %v2021 = vpop.f32.mrf.mxu0
    %v2022 = vadd.f32 %v1853, %v2021
    %2023 = vmatmul.bf16.gmra.mxu0 %v951
    %v2024 = vpop.f32.mrf.mxu0
    %v2025 = vadd.f32 %v1856, %v2024
    %v2026 = vpop.f32.mrf.mxu0
    %v2027 = vadd.f32 %v1858, %v2026
    %2028 = vmatmul.bf16.gmra.mxu0 %v956
    %v2029 = vpop.f32.mrf.mxu0
    %v2030 = vadd.f32 %v1861, %v2029
    %v2031 = vpop.f32.mrf.mxu0
    %v2032 = vadd.f32 %v1863, %v2031
    %2033 = vmatmul.bf16.gmra.mxu0 %v961
    %v2034 = vpop.f32.mrf.mxu0
    %v2035 = vadd.f32 %v1866, %v2034
    %v2036 = vpop.f32.mrf.mxu0
    %v2037 = vadd.f32 %v1868, %v2036
    %2038 = vmatmul.bf16.gmra.mxu0 %v966
    %v2039 = vpop.f32.mrf.mxu0
    %v2040 = vadd.f32 %v1871, %v2039
    %v2041 = vpop.f32.mrf.mxu0
    %v2042 = vadd.f32 %v1873, %v2041
    %2043 = vmatmul.bf16.gmra.mxu0 %v971
    %v2044 = vpop.f32.mrf.mxu0
    %v2045 = vadd.f32 %v1876, %v2044
    %v2046 = vpop.f32.mrf.mxu0
    %v2047 = vadd.f32 %v1878, %v2046
    %2048 = vmatmul.bf16.gmra.mxu0 %v976
    %v2049 = vpop.f32.mrf.mxu0
    %v2050 = vadd.f32 %v1881, %v2049
    %v2051 = vpop.f32.mrf.mxu0
    %v2052 = vadd.f32 %v1883, %v2051
    %2053 = vmatmul.bf16.gmra.mxu0 %v981
    %v2054 = vpop.f32.mrf.mxu0
    %v2055 = vadd.f32 %v1886, %v2054
    %v2056 = vpop.f32.mrf.mxu0
    %v2057 = vadd.f32 %v1888, %v2056
    %2058 = vmatmul.bf16.gmra.mxu0 %v986
    %v2059 = vpop.f32.mrf.mxu0
    %v2060 = vadd.f32 %v1891, %v2059
    %v2061 = vpop.f32.mrf.mxu0
    %v2062 = vadd.f32 %v1893, %v2061
    %2063 = vmatmul.bf16.gmra.mxu0 %v991
    %v2064 = vpop.f32.mrf.mxu0
    %v2065 = vadd.f32 %v1896, %v2064
    %v2066 = vpop.f32.mrf.mxu0
    %v2067 = vadd.f32 %v1898, %v2066
    %2068 = vmatmul.bf16.gmra.mxu0 %v996
    %v2069 = vpop.f32.mrf.mxu0
    %v2070 = vadd.f32 %v1901, %v2069
    %v2071 = vpop.f32.mrf.mxu0
    %v2072 = vadd.f32 %v1903, %v2071
    %2073 = vmatmul.bf16.gmra.mxu0 %v1001
    %v2074 = vpop.f32.mrf.mxu0
    %v2075 = vadd.f32 %v1906, %v2074
    %v2076 = vpop.f32.mrf.mxu0
    %v2077 = vadd.f32 %v1908, %v2076
    %2078 = vmatmul.bf16.gmra.mxu0 %v1006
    %v2079 = vpop.f32.mrf.mxu0
    %v2080 = vadd.f32 %v1911, %v2079
    %v2081 = vpop.f32.mrf.mxu0
    %v2082 = vadd.f32 %v1913, %v2081
    %2083 = vmatmul.bf16.gmra.mxu0 %v1011
    %v2084 = vpop.f32.mrf.mxu0
    %v2085 = vadd.f32 %v1916, %v2084
    %v2086 = vpop.f32.mrf.mxu0
    %v2087 = vadd.f32 %v1918, %v2086
    %2088 = vdwg.mxu0
    %2089 = vmatpush.bf16.msra.mxu0 %v1372
    %2090 = vmatpush.bf16.msra.mxu0 %v1371
    %2091 = vmatpush.bf16.msra.mxu0 %v1370
    %2092 = vmatpush.bf16.msra.mxu0 %v1369
    %2093 = vmatpush.bf16.msra.mxu0 %v1368
    %2094 = vmatpush.bf16.msra.mxu0 %v1367
    %2095 = vmatpush.bf16.msra.mxu0 %v1366
    %2096 = vmatpush.bf16.msra.mxu0 %v1365
    %2097 = vmatmul.bf16.gmra.mxu0 %v857
    %v2098 = vpop.f32.mrf.mxu0
    %v2099 = vadd.f32 %v1930, %v2098
    %v2100 = vpop.f32.mrf.mxu0
    %v2101 = vadd.f32 %v1932, %v2100
    %2102 = vmatmul.bf16.gmra.mxu0 %v862
    %v2103 = vpop.f32.mrf.mxu0
    %v2104 = vadd.f32 %v1935, %v2103
    %v2105 = vpop.f32.mrf.mxu0
    %v2106 = vadd.f32 %v1937, %v2105
    %2107 = vmatmul.bf16.gmra.mxu0 %v867
    %v2108 = vpop.f32.mrf.mxu0
    %v2109 = vadd.f32 %v1940, %v2108
    %v2110 = vpop.f32.mrf.mxu0
    %v2111 = vadd.f32 %v1942, %v2110
    %2112 = vmatmul.bf16.gmra.mxu0 %v872
    %v2113 = vpop.f32.mrf.mxu0
    %v2114 = vadd.f32 %v1945, %v2113
    %v2115 = vpop.f32.mrf.mxu0
    %v2116 = vadd.f32 %v1947, %v2115
    %2117 = vmatmul.bf16.gmra.mxu0 %v877
    %v2118 = vpop.f32.mrf.mxu0
    %v2119 = vadd.f32 %v1950, %v2118
    %v2120 = vpop.f32.mrf.mxu0
    %v2121 = vadd.f32 %v1952, %v2120
    %2122 = vmatmul.bf16.gmra.mxu0 %v882
    %v2123 = vpop.f32.mrf.mxu0
    %v2124 = vadd.f32 %v1955, %v2123
    %v2125 = vpop.f32.mrf.mxu0
    %v2126 = vadd.f32 %v1957, %v2125
    %2127 = vmatmul.bf16.gmra.mxu0 %v887
    %v2128 = vpop.f32.mrf.mxu0
    %v2129 = vadd.f32 %v1960, %v2128
    %v2130 = vpop.f32.mrf.mxu0
    %v2131 = vadd.f32 %v1962, %v2130
    %2132 = vmatmul.bf16.gmra.mxu0 %v892
    %v2133 = vpop.f32.mrf.mxu0
    %v2134 = vadd.f32 %v1965, %v2133
    %v2135 = vpop.f32.mrf.mxu0
    %v2136 = vadd.f32 %v1967, %v2135
    %2137 = vmatmul.bf16.gmra.mxu0 %v897
    %v2138 = vpop.f32.mrf.mxu0
    %v2139 = vadd.f32 %v1970, %v2138
    %v2140 = vpop.f32.mrf.mxu0
    %v2141 = vadd.f32 %v1972, %v2140
    %2142 = vmatmul.bf16.gmra.mxu0 %v902
    %v2143 = vpop.f32.mrf.mxu0
    %v2144 = vadd.f32 %v1975, %v2143
    %v2145 = vpop.f32.mrf.mxu0
    %v2146 = vadd.f32 %v1977, %v2145
    %2147 = vmatmul.bf16.gmra.mxu0 %v907
    %v2148 = vpop.f32.mrf.mxu0
    %v2149 = vadd.f32 %v1980, %v2148
    %v2150 = vpop.f32.mrf.mxu0
    %v2151 = vadd.f32 %v1982, %v2150
    %2152 = vmatmul.bf16.gmra.mxu0 %v912
    %v2153 = vpop.f32.mrf.mxu0
    %v2154 = vadd.f32 %v1985, %v2153
    %v2155 = vpop.f32.mrf.mxu0
    %v2156 = vadd.f32 %v1987, %v2155
    %2157 = vmatmul.bf16.gmra.mxu0 %v917
    %v2158 = vpop.f32.mrf.mxu0
    %v2159 = vadd.f32 %v1990, %v2158
    %v2160 = vpop.f32.mrf.mxu0
    %v2161 = vadd.f32 %v1992, %v2160
    %2162 = vmatmul.bf16.gmra.mxu0 %v922
    %v2163 = vpop.f32.mrf.mxu0
    %v2164 = vadd.f32 %v1995, %v2163
    %v2165 = vpop.f32.mrf.mxu0
    %v2166 = vadd.f32 %v1997, %v2165
    %2167 = vmatmul.bf16.gmra.mxu0 %v927
    %v2168 = vpop.f32.mrf.mxu0
    %v2169 = vadd.f32 %v2000, %v2168
    %v2170 = vpop.f32.mrf.mxu0
    %v2171 = vadd.f32 %v2002, %v2170
    %2172 = vmatmul.bf16.gmra.mxu0 %v932
    %v2173 = vpop.f32.mrf.mxu0
    %v2174 = vadd.f32 %v2005, %v2173
    %v2175 = vpop.f32.mrf.mxu0
    %v2176 = vadd.f32 %v2007, %v2175
    %2177 = vmatmul.bf16.gmra.mxu0 %v937
    %v2178 = vpop.f32.mrf.mxu0
    %v2179 = vadd.f32 %v2010, %v2178
    %v2180 = vpop.f32.mrf.mxu0
    %v2181 = vadd.f32 %v2012, %v2180
    %2182 = vmatmul.bf16.gmra.mxu0 %v942
    %v2183 = vpop.f32.mrf.mxu0
    %v2184 = vadd.f32 %v2015, %v2183
    %v2185 = vpop.f32.mrf.mxu0
    %v2186 = vadd.f32 %v2017, %v2185
    %2187 = vmatmul.bf16.gmra.mxu0 %v947
    %v2188 = vpop.f32.mrf.mxu0
    %v2189 = vadd.f32 %v2020, %v2188
    %v2190 = vpop.f32.mrf.mxu0
    %v2191 = vadd.f32 %v2022, %v2190
    %2192 = vmatmul.bf16.gmra.mxu0 %v952
    %v2193 = vpop.f32.mrf.mxu0
    %v2194 = vadd.f32 %v2025, %v2193
    %v2195 = vpop.f32.mrf.mxu0
    %v2196 = vadd.f32 %v2027, %v2195
    %2197 = vmatmul.bf16.gmra.mxu0 %v957
    %v2198 = vpop.f32.mrf.mxu0
    %v2199 = vadd.f32 %v2030, %v2198
    %v2200 = vpop.f32.mrf.mxu0
    %v2201 = vadd.f32 %v2032, %v2200
    %2202 = vmatmul.bf16.gmra.mxu0 %v962
    %v2203 = vpop.f32.mrf.mxu0
    %v2204 = vadd.f32 %v2035, %v2203
    %v2205 = vpop.f32.mrf.mxu0
    %v2206 = vadd.f32 %v2037, %v2205
    %2207 = vmatmul.bf16.gmra.mxu0 %v967
    %v2208 = vpop.f32.mrf.mxu0
    %v2209 = vadd.f32 %v2040, %v2208
    %v2210 = vpop.f32.mrf.mxu0
    %v2211 = vadd.f32 %v2042, %v2210
    %2212 = vmatmul.bf16.gmra.mxu0 %v972
    %v2213 = vpop.f32.mrf.mxu0
    %v2214 = vadd.f32 %v2045, %v2213
    %v2215 = vpop.f32.mrf.mxu0
    %v2216 = vadd.f32 %v2047, %v2215
    %2217 = vmatmul.bf16.gmra.mxu0 %v977
    %v2218 = vpop.f32.mrf.mxu0
    %v2219 = vadd.f32 %v2050, %v2218
    %v2220 = vpop.f32.mrf.mxu0
    %v2221 = vadd.f32 %v2052, %v2220
    %2222 = vmatmul.bf16.gmra.mxu0 %v982
    %v2223 = vpop.f32.mrf.mxu0
    %v2224 = vadd.f32 %v2055, %v2223
    %v2225 = vpop.f32.mrf.mxu0
    %v2226 = vadd.f32 %v2057, %v2225
    %2227 = vmatmul.bf16.gmra.mxu0 %v987
    %v2228 = vpop.f32.mrf.mxu0
    %v2229 = vadd.f32 %v2060, %v2228
    %v2230 = vpop.f32.mrf.mxu0
    %v2231 = vadd.f32 %v2062, %v2230
    %2232 = vmatmul.bf16.gmra.mxu0 %v992
    %v2233 = vpop.f32.mrf.mxu0
    %v2234 = vadd.f32 %v2065, %v2233
    %v2235 = vpop.f32.mrf.mxu0
    %v2236 = vadd.f32 %v2067, %v2235
    %2237 = vmatmul.bf16.gmra.mxu0 %v997
    %v2238 = vpop.f32.mrf.mxu0
    %v2239 = vadd.f32 %v2070, %v2238
    %v2240 = vpop.f32.mrf.mxu0
    %v2241 = vadd.f32 %v2072, %v2240
    %2242 = vmatmul.bf16.gmra.mxu0 %v1002
    %v2243 = vpop.f32.mrf.mxu0
    %v2244 = vadd.f32 %v2075, %v2243
    %v2245 = vpop.f32.mrf.mxu0
    %v2246 = vadd.f32 %v2077, %v2245
    %2247 = vmatmul.bf16.gmra.mxu0 %v1007
    %v2248 = vpop.f32.mrf.mxu0
    %v2249 = vadd.f32 %v2080, %v2248
    %v2250 = vpop.f32.mrf.mxu0
    %v2251 = vadd.f32 %v2082, %v2250
    %2252 = vmatmul.bf16.gmra.mxu0 %v1012
    %v2253 = vpop.f32.mrf.mxu0
    %v2254 = vadd.f32 %v2085, %v2253
    %v2255 = vpop.f32.mrf.mxu0
    %v2256 = vadd.f32 %v2087, %v2255
    %2257 = vdwg.mxu0
    %v2258 = vmul.f32 %v2099, %v2099
    %v2259 = vmul.f32 %v2101, %v2101
    %v2260 = vmul.f32 %v2104, %v2104
    %v2261 = vmul.f32 %v2106, %v2106
    %v2262 = vmul.f32 %v2109, %v2109
    %v2263 = vmul.f32 %v2111, %v2111
    %v2264 = vmul.f32 %v2114, %v2114
    %v2265 = vmul.f32 %v2116, %v2116
    %v2266 = vmul.f32 %v2119, %v2119
    %v2267 = vmul.f32 %v2121, %v2121
    %v2268 = vmul.f32 %v2124, %v2124
    %v2269 = vmul.f32 %v2126, %v2126
    %v2270 = vmul.f32 %v2129, %v2129
    %v2271 = vmul.f32 %v2131, %v2131
    %v2272 = vmul.f32 %v2134, %v2134
    %v2273 = vmul.f32 %v2136, %v2136
    %v2274 = vmul.f32 %v2139, %v2139
    %v2275 = vmul.f32 %v2141, %v2141
    %v2276 = vmul.f32 %v2144, %v2144
    %v2277 = vmul.f32 %v2146, %v2146
    %v2278 = vmul.f32 %v2149, %v2149
    %v2279 = vmul.f32 %v2151, %v2151
    %v2280 = vmul.f32 %v2154, %v2154
    %v2281 = vmul.f32 %v2156, %v2156
    %v2282 = vmul.f32 %v2159, %v2159
    %v2283 = vmul.f32 %v2161, %v2161
    %v2284 = vmul.f32 %v2164, %v2164
    %v2285 = vmul.f32 %v2166, %v2166
    %v2286 = vmul.f32 %v2169, %v2169
    %v2287 = vmul.f32 %v2171, %v2171
    %v2288 = vmul.f32 %v2174, %v2174
    %v2289 = vmul.f32 %v2176, %v2176
    %v2290 = vmul.f32 %v2179, %v2179
    %v2291 = vmul.f32 %v2181, %v2181
    %v2292 = vmul.f32 %v2184, %v2184
    %v2293 = vmul.f32 %v2186, %v2186
    %v2294 = vmul.f32 %v2189, %v2189
    %v2295 = vmul.f32 %v2191, %v2191
    %v2296 = vmul.f32 %v2194, %v2194
    %v2297 = vmul.f32 %v2196, %v2196
    %v2298 = vmul.f32 %v2199, %v2199
    %v2299 = vmul.f32 %v2201, %v2201
    %v2300 = vmul.f32 %v2204, %v2204
    %v2301 = vmul.f32 %v2206, %v2206
    %v2302 = vmul.f32 %v2209, %v2209
    %v2303 = vmul.f32 %v2211, %v2211
    %v2304 = vmul.f32 %v2214, %v2214
    %v2305 = vmul.f32 %v2216, %v2216
    %v2306 = vmul.f32 %v2219, %v2219
    %v2307 = vmul.f32 %v2221, %v2221
    %v2308 = vmul.f32 %v2224, %v2224
    %v2309 = vmul.f32 %v2226, %v2226
    %v2310 = vmul.f32 %v2229, %v2229
    %v2311 = vmul.f32 %v2231, %v2231
    %v2312 = vmul.f32 %v2234, %v2234
    %v2313 = vmul.f32 %v2236, %v2236
    %v2314 = vmul.f32 %v2239, %v2239
    %v2315 = vmul.f32 %v2241, %v2241
    %v2316 = vmul.f32 %v2244, %v2244
    %v2317 = vmul.f32 %v2246, %v2246
    %v2318 = vmul.f32 %v2249, %v2249
    %v2319 = vmul.f32 %v2251, %v2251
    %v2320 = vmul.f32 %v2254, %v2254
    %v2321 = vmul.f32 %v2256, %v2256
    %v2322 = vld [vmem:[#allocation7] sm:$0xff]
    %v2323 = vld [vmem:[#allocation7 + $0x8] sm:$0xff]
    %v2324 = vld [vmem:[#allocation7 + $0x10] sm:$0xff]
    %v2325 = vld [vmem:[#allocation7 + $0x18] sm:$0xff]
    %v2326 = vld [vmem:[#allocation7 + $0x20] sm:$0xff]
    %v2327 = vld [vmem:[#allocation7 + $0x28] sm:$0xff]
    %v2328 = vld [vmem:[#allocation7 + $0x30] sm:$0xff]
    %v2329 = vld [vmem:[#allocation7 + $0x38] sm:$0xff]
    %v2330 = vld [vmem:[#allocation7 + $0x40] sm:$0xff]
    %v2331 = vld [vmem:[#allocation7 + $0x48] sm:$0xff]
    %v2332 = vld [vmem:[#allocation7 + $0x50] sm:$0xff]
    %v2333 = vld [vmem:[#allocation7 + $0x58] sm:$0xff]
    %v2334 = vld [vmem:[#allocation7 + $0x60] sm:$0xff]
    %v2335 = vld [vmem:[#allocation7 + $0x68] sm:$0xff]
    %v2336 = vpack.c.bf16 %v2259, %v2258
    %v2337 = vpack.c.bf16 %v2261, %v2260
    %v2338 = vpack.c.bf16 %v2263, %v2262
    %v2339 = vpack.c.bf16 %v2265, %v2264
    %v2340 = vpack.c.bf16 %v2267, %v2266
    %v2341 = vpack.c.bf16 %v2269, %v2268
    %v2342 = vpack.c.bf16 %v2271, %v2270
    %v2343 = vpack.c.bf16 %v2273, %v2272
    %v2344 = vpack.c.bf16 %v2275, %v2274
    %v2345 = vpack.c.bf16 %v2277, %v2276
    %v2346 = vpack.c.bf16 %v2279, %v2278
    %v2347 = vpack.c.bf16 %v2281, %v2280
    %v2348 = vpack.c.bf16 %v2283, %v2282
    %v2349 = vpack.c.bf16 %v2285, %v2284
    %v2350 = vpack.c.bf16 %v2287, %v2286
    %v2351 = vpack.c.bf16 %v2289, %v2288
    %v2352 = vpack.c.bf16 %v2291, %v2290
    %v2353 = vpack.c.bf16 %v2293, %v2292
    %v2354 = vpack.c.bf16 %v2295, %v2294
    %v2355 = vpack.c.bf16 %v2297, %v2296
    %v2356 = vpack.c.bf16 %v2299, %v2298
    %v2357 = vpack.c.bf16 %v2301, %v2300
    %v2358 = vpack.c.bf16 %v2303, %v2302
    %v2359 = vpack.c.bf16 %v2305, %v2304
    %v2360 = vpack.c.bf16 %v2307, %v2306
    %v2361 = vpack.c.bf16 %v2309, %v2308
    %v2362 = vpack.c.bf16 %v2311, %v2310
    %v2363 = vpack.c.bf16 %v2313, %v2312
    %v2364 = vpack.c.bf16 %v2315, %v2314
    %v2365 = vpack.c.bf16 %v2317, %v2316
    %v2366 = vpack.c.bf16 %v2319, %v2318
    %v2367 = vpack.c.bf16 %v2321, %v2320
    %v2382 = vunpack.c.l.b16 %v2322
    %v2383 = vunpack.c.h.b16 %v2322
    %v2384 = vunpack.c.l.b16 %v2323
    %v2385 = vunpack.c.h.b16 %v2323
    %v2386 = vunpack.c.l.b16 %v2324
    %v2387 = vunpack.c.h.b16 %v2324
    %v2388 = vunpack.c.l.b16 %v2325
    %v2389 = vunpack.c.h.b16 %v2325
    %v2390 = vunpack.c.l.b16 %v2326
    %v2391 = vunpack.c.h.b16 %v2326
    %v2392 = vunpack.c.l.b16 %v2327
    %v2393 = vunpack.c.h.b16 %v2327
    %v2394 = vunpack.c.l.b16 %v2328
    %v2395 = vunpack.c.h.b16 %v2328
    %v2396 = vunpack.c.l.b16 %v2329
    %v2397 = vunpack.c.h.b16 %v2329
    %v2398 = vunpack.c.l.b16 %v2330
    %v2399 = vunpack.c.h.b16 %v2330
    %v2400 = vunpack.c.l.b16 %v2331
    %v2401 = vunpack.c.h.b16 %v2331
    %v2402 = vunpack.c.l.b16 %v2332
    %v2403 = vunpack.c.h.b16 %v2332
    %v2404 = vunpack.c.l.b16 %v2333
    %v2405 = vunpack.c.h.b16 %v2333
    %v2406 = vunpack.c.l.b16 %v2334
    %v2407 = vunpack.c.h.b16 %v2334
    %v2408 = vunpack.c.l.b16 %v2335
    %v2409 = vunpack.c.h.b16 %v2335
    %v2410 = vpack.c.b16 %v2386, %v2382
    %v2411 = vpack.c.b16 %v2387, %v2383
    %v2412 = vpack.c.b16 %v2388, %v2384
    %v2413 = vpack.c.b16 %v2389, %v2385
    %v2414 = vpack.c.b16 %v2394, %v2390
    %v2415 = vpack.c.b16 %v2395, %v2391
    %v2416 = vpack.c.b16 %v2396, %v2392
    %v2417 = vpack.c.b16 %v2397, %v2393
    %v2418 = vpack.c.b16 %v2402, %v2398
    %v2419 = vpack.c.b16 %v2403, %v2399
    %v2420 = vpack.c.b16 %v2404, %v2400
    %v2421 = vpack.c.b16 %v2405, %v2401
    %v2422 = vpack.c.b16 %v2406, %v2406
    %v2423 = vpack.c.b16 %v2407, %v2407
    %v2424 = vpack.c.b16 %v2408, %v2408
    %v2425 = vpack.c.b16 %v2409, %v2409
    %2442 = vmatpush.bf16.msra.mxu0 %v2343
    %2443 = vmatpush.bf16.msra.mxu0 %v2342
    %2444 = vmatpush.bf16.msra.mxu0 %v2341
    %2445 = vmatpush.bf16.msra.mxu0 %v2340
    %2446 = vmatpush.bf16.msra.mxu0 %v2339
    %2447 = vmatpush.bf16.msra.mxu0 %v2338
    %2448 = vmatpush.bf16.msra.mxu0 %v2337
    %2449 = vmatpush.bf16.msra.mxu0 %v2336
    %2450 = vmatmul.bf16.gmra.mxu0 %v2410
    %v2451 = vpop.f32.mrf.mxu0
    %v2452 = vadd.f32 0.0, %v2451
    %v2453 = vpop.f32.mrf.mxu0
    %v2454 = vadd.f32 0.0, %v2453
    %2455 = vmatmul.bf16.gmra.mxu0 %v2414
    %v2456 = vpop.f32.mrf.mxu0
    %v2457 = vadd.f32 0.0, %v2456
    %v2458 = vpop.f32.mrf.mxu0
    %v2459 = vadd.f32 0.0, %v2458
    %2460 = vmatmul.bf16.gmra.mxu0 %v2418
    %v2461 = vpop.f32.mrf.mxu0
    %v2462 = vadd.f32 0.0, %v2461
    %v2463 = vpop.f32.mrf.mxu0
    %v2464 = vadd.f32 0.0, %v2463
    %2465 = vmatmul.bf16.gmra.mxu0 %v2422
    %v2466 = vpop.f32.mrf.mxu0
    %v2467 = vadd.f32 0.0, %v2466
    %v2468 = vpop.f32.mrf.mxu0
    %2469 = vdwg.mxu0
    %2470 = vmatpush.bf16.msra.mxu0 %v2351
    %2471 = vmatpush.bf16.msra.mxu0 %v2350
    %2472 = vmatpush.bf16.msra.mxu0 %v2349
    %2473 = vmatpush.bf16.msra.mxu0 %v2348
    %2474 = vmatpush.bf16.msra.mxu0 %v2347
    %2475 = vmatpush.bf16.msra.mxu0 %v2346
    %2476 = vmatpush.bf16.msra.mxu0 %v2345
    %2477 = vmatpush.bf16.msra.mxu0 %v2344
    %2478 = vmatmul.bf16.gmra.mxu0 %v2411
    %v2479 = vpop.f32.mrf.mxu0
    %v2480 = vadd.f32 %v2452, %v2479
    %v2481 = vpop.f32.mrf.mxu0
    %v2482 = vadd.f32 %v2454, %v2481
    %2483 = vmatmul.bf16.gmra.mxu0 %v2415
    %v2484 = vpop.f32.mrf.mxu0
    %v2485 = vadd.f32 %v2457, %v2484
    %v2486 = vpop.f32.mrf.mxu0
    %v2487 = vadd.f32 %v2459, %v2486
    %2488 = vmatmul.bf16.gmra.mxu0 %v2419
    %v2489 = vpop.f32.mrf.mxu0
    %v2490 = vadd.f32 %v2462, %v2489
    %v2491 = vpop.f32.mrf.mxu0
    %v2492 = vadd.f32 %v2464, %v2491
    %2493 = vmatmul.bf16.gmra.mxu0 %v2423
    %v2494 = vpop.f32.mrf.mxu0
    %v2495 = vadd.f32 %v2467, %v2494
    %v2496 = vpop.f32.mrf.mxu0
    %2497 = vdwg.mxu0
    %2498 = vmatpush.bf16.msra.mxu0 %v2359
    %2499 = vmatpush.bf16.msra.mxu0 %v2358
    %2500 = vmatpush.bf16.msra.mxu0 %v2357
    %2501 = vmatpush.bf16.msra.mxu0 %v2356
    %2502 = vmatpush.bf16.msra.mxu0 %v2355
    %2503 = vmatpush.bf16.msra.mxu0 %v2354
    %2504 = vmatpush.bf16.msra.mxu0 %v2353
    %2505 = vmatpush.bf16.msra.mxu0 %v2352
    %2506 = vmatmul.bf16.gmra.mxu0 %v2412
    %v2507 = vpop.f32.mrf.mxu0
    %v2508 = vadd.f32 %v2480, %v2507
    %v2509 = vpop.f32.mrf.mxu0
    %v2510 = vadd.f32 %v2482, %v2509
    %2511 = vmatmul.bf16.gmra.mxu0 %v2416
    %v2512 = vpop.f32.mrf.mxu0
    %v2513 = vadd.f32 %v2485, %v2512
    %v2514 = vpop.f32.mrf.mxu0
    %v2515 = vadd.f32 %v2487, %v2514
    %2516 = vmatmul.bf16.gmra.mxu0 %v2420
    %v2517 = vpop.f32.mrf.mxu0
    %v2518 = vadd.f32 %v2490, %v2517
    %v2519 = vpop.f32.mrf.mxu0
    %v2520 = vadd.f32 %v2492, %v2519
    %2521 = vmatmul.bf16.gmra.mxu0 %v2424
    %v2522 = vpop.f32.mrf.mxu0
    %v2523 = vadd.f32 %v2495, %v2522
    %v2524 = vpop.f32.mrf.mxu0
    %2525 = vdwg.mxu0
    %2526 = vmatpush.bf16.msra.mxu0 %v2367
    %2527 = vmatpush.bf16.msra.mxu0 %v2366
    %2528 = vmatpush.bf16.msra.mxu0 %v2365
    %2529 = vmatpush.bf16.msra.mxu0 %v2364
    %2530 = vmatpush.bf16.msra.mxu0 %v2363
    %2531 = vmatpush.bf16.msra.mxu0 %v2362
    %2532 = vmatpush.bf16.msra.mxu0 %v2361
    %2533 = vmatpush.bf16.msra.mxu0 %v2360
    %2534 = vmatmul.bf16.gmra.mxu0 %v2413
    %v2535 = vpop.f32.mrf.mxu0
    %v2536 = vadd.f32 %v2508, %v2535
    %v2537 = vpop.f32.mrf.mxu0
    %v2538 = vadd.f32 %v2510, %v2537
    %2539 = vmatmul.bf16.gmra.mxu0 %v2417
    %v2540 = vpop.f32.mrf.mxu0
    %v2541 = vadd.f32 %v2513, %v2540
    %v2542 = vpop.f32.mrf.mxu0
    %v2543 = vadd.f32 %v2515, %v2542
    %2544 = vmatmul.bf16.gmra.mxu0 %v2421
    %v2545 = vpop.f32.mrf.mxu0
    %v2546 = vadd.f32 %v2518, %v2545
    %v2547 = vpop.f32.mrf.mxu0
    %v2548 = vadd.f32 %v2520, %v2547
    %2549 = vmatmul.bf16.gmra.mxu0 %v2425
    %v2550 = vpop.f32.mrf.mxu0
    %v2551 = vadd.f32 %v2523, %v2550
    %v2552 = vpop.f32.mrf.mxu0
    %2553 = vdwg.mxu0
    %v2554 = vmax.f32 %v2536, 1e-06
    %v2555 = vmax.f32 %v2538, 1e-06
    %v2556 = vmax.f32 %v2541, 1e-06
    %v2557 = vmax.f32 %v2543, 1e-06
    %v2558 = vmax.f32 %v2546, 1e-06
    %v2559 = vmax.f32 %v2548, 1e-06
    %v2560 = vmax.f32 %v2551, 1e-06
    %v2561 = vlog2.pop %v2554
    %v2562 = vmul.f32 %v2561, 0.6931472
    %v2563 = vlog2.pop %v2555
    %v2564 = vmul.f32 %v2563, 0.6931472
    %v2565 = vlog2.pop %v2556
    %v2566 = vmul.f32 %v2565, 0.6931472
    %v2567 = vlog2.pop %v2557
    %v2568 = vmul.f32 %v2567, 0.6931472
    %v2569 = vlog2.pop %v2558
    %v2570 = vmul.f32 %v2569, 0.6931472
    %v2571 = vlog2.pop %v2559
    %v2572 = vmul.f32 %v2571, 0.6931472
    %v2573 = vlog2.pop %v2560
    %v2574 = vmul.f32 %v2573, 0.6931472
    %v2575 = vld [vmem:[%s3] sm:$0x3]
    %v2576 = vpack.c.bf16 %v2564, %v2562
    %v2577 = vpack.c.bf16 %v2568, %v2566
    %v2578 = vpack.c.bf16 %v2572, %v2570
    %v2579 = vpack.c.bf16 %v2574, %v2574
    %v2580 = vld [vmem:[%s4] sm:$0xf]
    %2582 = vset.pattern.permute.xlu0 0
    %2583 = vperm.xlu0 %2582, %v2580
    %v2584 = vpop.permute.xlu0 %2583
    %vm2586 = vcmask 457728
    %v2588 = vsel %vm2586, %v2575, 0
    %vm2590 = vcmask 1043456
    %v2592 = vsel %vm2590, %v2579, 0
    %2594 = vmatpush.bf16.msra.mxu0 0
    %2595 = vmatpush.bf16.msra.mxu0 0
    %2596 = vmatpush.bf16.msra.mxu0 0
    %2597 = vmatpush.bf16.msra.mxu0 0
    %2598 = vmatpush.bf16.msra.mxu0 %v2592
    %2599 = vmatpush.bf16.msra.mxu0 %v2578
    %2600 = vmatpush.bf16.msra.mxu0 %v2577
    %2601 = vmatpush.bf16.msra.mxu0 %v2576
    %2602 = vmatmul.bf16.gmra.mxu0 %v2588
    %v2603 = vpop.f32.mrf.mxu0
    %v2604 = vadd.f32 %v2584, %v2603
    %v2605 = vpop.f32.mrf.mxu0
    %2606 = vdwg.mxu0
    %v2607 = vsel %vm2590, %v2604, -inf
    %v2608 = vrot.slane %v2607, 4
    %v2609 = vmax.f32 %v2607, %v2608
    %v2610 = vrot.slane %v2609, 2
    %v2611 = vmax.f32 %v2609, %v2610
    %v2612 = vrot.slane %v2611, 1
    %v2613 = vmax.f32 %v2611, %v2612
    %v2614 = vsub.f32 %v2604, %v2613
    %v2615 = vmul.f32 %v2614, 1.442695
    %v2616 = vpow.pop %v2615
    %v2617 = vsel %vm2590, %v2616, 0.0
    %v2618 = vrot.slane %v2617, 4
    %v2619 = vadd.f32 %v2617, %v2618
    %v2620 = vrot.slane %v2619, 2
    %v2621 = vadd.f32 %v2619, %v2620
    %v2622 = vrot.slane %v2621, 1
    %v2623 = vadd.f32 %v2621, %v2622
    %v2624 = vlog2.pop %v2623
    %v2625 = vmul.f32 %v2624, 0.6931472
    %v2626 = vadd.f32 %v2625, %v2613
    %v2627 = vsub.f32 %v2604, %v2626
    %2628 = vst [vmem:[#allocation8] sm:$0xf] %v2627
    // Predicated region
    $region34: #{tpu_custom_call.1} parent=1 // pred_check
      _
    $region35: #{tpu_custom_call.1} parent=1 // pred_check_branch
      %2630 = sbr.rel (0) target = $region37
    $region36: #{tpu_custom_call.1} parent=1 // pred_region
      %2632 = vsyncadd [#allocation4], 0
      %s2634 = sshll.u32 [#allocation8], 4
      %s2635 = int_to_ptr.vmem [resolvable:$true] %s2634
      %s2636 = sshll.u32 %s5, 4
      %s2637 = int_to_ptr.hbm [resolvable:$true] %s2636
      %2639 = dma.vmem_to_hbm [thread:$0]  %s2635, 64, %s2637, [#allocation4]
    $region37: #{tpu_custom_call.1} parent=1 // pred_fallthru
      _
    // Predicated region
    $region38: #{tpu_custom_call.1} parent=1 // pred_check
      _
    $region39: #{tpu_custom_call.1} parent=1 // pred_check_branch
      %2641 = sbr.rel (0) target = $region41
    $region40: #{tpu_custom_call.1} parent=1 // pred_region
      %2643 = dma.done [#allocation4], 64
    $region41: #{tpu_custom_call.1} parent=1 // pred_fallthru
      _
    %2644 = vsyncpa [#allocation3], 1
    %2645 = vsyncpa [#allocation6], 1
    %2646 = vsyncpa [#allocation4], 1

</llo_original>
